<compile_context>
chip_gen: v7x
topology: tpu7x:2x2x1
jax: 0.10.0
libtpu: 0.0.40
codegen_flags: <defaults>
</compile_context>

<pallas_src>
import functools

import numpy as np
import jax
import jax.numpy as jnp
from jax.experimental import pallas as pl
from jax.experimental.pallas import tpu as pltpu


_BN_EPS = 1e-5
_LANES = 128


def _round_up(x, m):
    return (x + m - 1) // m * m


# ----------------------------------------------------------------------------
# Pallas kernel: fused 3x3 conv + folded BN scale/shift + ReLU
# ----------------------------------------------------------------------------

def _conv3x3_kernel(x_ref, w_ref, scale_ref, shift_ref, o_ref, acc_ref, *, th, relu):
    """One (Cout-tile, batch, row-tile) grid step.

    x_ref:     (1, H+2, W+2, Cp)  zero-padded bf16 NHWC input (resident across row tiles)
    w_ref:     (9, Cp, 128)       bf16 weight tile for this Cout block (tap-major)
    scale_ref: (1, 128)           folded BN scale (f32)
    shift_ref: (1, 128)           folded BN shift + conv bias (f32)
    o_ref:     (1, th, W, 128)    bf16 output row tile
    acc_ref:   (th*W, 128) f32    VMEM accumulator scratch
    """
    r = pl.program_id(2)
    wout = o_ref.shape[2]
    cp = x_ref.shape[3]
    tc = o_ref.shape[3]
    row0 = r * th                       # first output row of this tile

    acc_ref[...] = jnp.zeros_like(acc_ref)
    for kh in range(3):                 # static 3x3 tap loop -> 9 MXU matmuls (K = Cp)
        for kw in range(3):
            tap = x_ref[0, pl.ds(row0 + kh, th), pl.ds(kw, wout), :]   # (th, W, Cp)
            acc_ref[...] += jnp.dot(tap.reshape(th * wout, cp),
                                    w_ref[3 * kh + kw],
                                    preferred_element_type=jnp.float32)

    y = acc_ref[...] * scale_ref[...] + shift_ref[...]
    if relu:
        y = jnp.maximum(y, 0.0)
    o_ref[0] = y.reshape(th, wout, tc).astype(o_ref.dtype)


def _pick_row_tile(h, w, target_rows=256):
    """Largest divisor t of h with t*w <= ~256 flattened matmul rows."""
    best = 1
    for t in range(1, h + 1):
        if h % t == 0 and t * w <= max(target_rows, w):
            best = t
    return best


def conv3x3_bn_act(x, w, scale, shift, *, relu=True):
    """Fused Conv2d(3x3, padding=1) + BN(eval) + ReLU.

    x:     (N, H, W, Cp)  bf16 NHWC, channels zero-padded to a multiple of 128
    w:     (9, Cp, Coutp) bf16 (tap t = 3*kh + kw)
    scale: (Coutp,) f32, shift: (Coutp,) f32
    returns (N, H, W, Coutp) bf16
    """
    n, h, wd, cp = x.shape
    coutp = w.shape[2]
    assert cp % _LANES == 0 and coutp % _LANES == 0

    xp = jnp.pad(x, ((0, 0), (1, 1), (1, 1), (0, 0)))   # zero pad == Conv2d padding=1
    th = _pick_row_tile(h, wd)
    n_r = h // th
    n_co = coutp // _LANES
    scale2 = scale.reshape(1, coutp).astype(jnp.float32)
    shift2 = shift.reshape(1, coutp).astype(jnp.float32)

    kernel = functools.partial(_conv3x3_kernel, th=th, relu=relu)
    # VMEM budget (bf16, double-buffered): 2*x_block + 2*w_block + 2*out_block
    # + f32 acc scratch ~ low single-digit MiB at these shapes, well under the
    # 16/32 MiB scoped-VMEM defaults on v5e/v6e/v7x.
    return pl.pallas_call(
        kernel,
        out_shape=jax.ShapeDtypeStruct((n, h, wd, coutp), jnp.bfloat16),
        grid_spec=pltpu.PrefetchScalarGridSpec(
            num_scalar_prefetch=0,
            # Cout tiles outermost, row tiles innermost: weight tile DMA'd once
            # per Cout tile; padded input block resident across row tiles.
            grid=(n_co, n, n_r),
            in_specs=[
                pl.BlockSpec((1, h + 2, wd + 2, cp), lambda co, b, r: (b, 0, 0, 0)),
                pl.BlockSpec((9, cp, _LANES), lambda co, b, r: (0, 0, co)),
                pl.BlockSpec((1, _LANES), lambda co, b, r: (0, co)),
                pl.BlockSpec((1, _LANES), lambda co, b, r: (0, co)),
            ],
            out_specs=pl.BlockSpec((1, th, wd, _LANES), lambda co, b, r: (b, r, 0, co)),
            scratch_shapes=[pltpu.VMEM((th * wd, _LANES), jnp.float32)],
        ),
        compiler_params=pltpu.CompilerParams(
            dimension_semantics=("parallel", "parallel", "parallel")),
    )(xp, w, scale2, shift2)


# ----------------------------------------------------------------------------
# Bilinear x2 upsample (align_corners=True) — cheap data movement, kept in XLA
# ----------------------------------------------------------------------------

def _interp_idx(n_in, n_out):
    if n_in == 1:
        z = jnp.zeros((n_out,), jnp.int32)
        return z, z, jnp.zeros((n_out,), jnp.float32)
    src = jnp.arange(n_out, dtype=jnp.float32) * (n_in - 1) / (n_out - 1)
    lo = jnp.clip(jnp.floor(src).astype(jnp.int32), 0, n_in - 2)
    return lo, lo + 1, src - lo.astype(jnp.float32)


def bilinear_upsample_x2(x):
    """nn.Upsample(scale_factor=2, mode='bilinear', align_corners=True), NHWC f32."""
    n, h, w, c = x.shape
    lo_h, hi_h, fh = _interp_idx(h, 2 * h)
    lo_w, hi_w, fw = _interp_idx(w, 2 * w)
    xh = (x[:, lo_h] * (1.0 - fh)[None, :, None, None]
          + x[:, hi_h] * fh[None, :, None, None])
    y = (xh[:, :, lo_w] * (1.0 - fw)[None, None, :, None]
         + xh[:, :, hi_w] * fw[None, None, :, None])
    return y


# ----------------------------------------------------------------------------
# up_no_skip forward (matches the PyTorch module)
# ----------------------------------------------------------------------------

def up_no_skip_forward(x_nchw, params, *, out_ch):
    x = jnp.transpose(x_nchw, (0, 2, 3, 1)).astype(jnp.float32)   # NCHW -> NHWC
    x = bilinear_upsample_x2(x)
    cinp = params["w1"].shape[1]
    x = jnp.pad(x, ((0, 0), (0, 0), (0, 0), (0, cinp - x.shape[-1])))
    x = x.astype(jnp.bfloat16)
    x = conv3x3_bn_act(x, params["w1"], params["s1"], params["t1"], relu=True)
    x = conv3x3_bn_act(x, params["w2"], params["s2"], params["t2"], relu=True)
    y = x[..., :out_ch].astype(jnp.float32)
    return jnp.transpose(y, (0, 3, 1, 2))                          # NHWC -> NCHW


# ----------------------------------------------------------------------------
# Deterministic parameter initialization (conv + eval-mode BN fold)
# ----------------------------------------------------------------------------

def _init_conv_bn(key, cin, cout):
    cinp, coutp = _round_up(cin, _LANES), _round_up(cout, _LANES)
    kw_, kb, kg, kbe = jax.random.split(key, 4)
    w = jax.random.normal(kw_, (9, cin, cout), jnp.float32) / np.sqrt(9.0 * cin)
    b = 0.01 * jax.random.normal(kb, (cout,), jnp.float32)
    gamma = 1.0 + 0.02 * jax.random.normal(kg, (cout,), jnp.float32)
    beta = 0.02 * jax.random.normal(kbe, (cout,), jnp.float32)
    # eval-mode BN fold: running_mean=0, running_var=1 (nn.BatchNorm2d at init)
    s = gamma / jnp.sqrt(1.0 + _BN_EPS)
    t = s * b + beta
    wp = jnp.zeros((9, cinp, coutp), jnp.bfloat16)
    wp = wp.at[:, :cin, :cout].set(w.astype(jnp.bfloat16))
    sp = jnp.zeros((coutp,), jnp.float32).at[:cout].set(s)
    tp = jnp.zeros((coutp,), jnp.float32).at[:cout].set(t)
    return wp, sp, tp


def init_up_no_skip_params(key, in_ch, out_ch):
    k1, k2 = jax.random.split(key)
    w1, s1, t1 = _init_conv_bn(k1, in_ch, out_ch)
    w2, s2, t2 = _init_conv_bn(k2, out_ch, out_ch)
    return dict(w1=w1, s1=s1, t1=t1, w2=w2, s2=s2, t2=t2)


# ----------------------------------------------------------------------------
# Pure-JAX reference (same bf16 cast points) for a correctness check
# ----------------------------------------------------------------------------

def _conv_ref(x_bf16, w, scale, shift):
    xf = x_bf16.astype(jnp.float32)
    wf = w.astype(jnp.float32).reshape(3, 3, w.shape[1], w.shape[2])
    y = jax.lax.conv_general_dilated(
        xf, wf, window_strides=(1, 1), padding=((1, 1), (1, 1)),
        dimension_numbers=("NHWC", "HWIO", "NHWC"))
    y = y * scale.reshape(1, 1, 1, -1) + shift.reshape(1, 1, 1, -1)
    return jnp.maximum(y, 0.0)


def up_no_skip_reference(x_nchw, params, *, out_ch):
    x = jnp.transpose(x_nchw, (0, 2, 3, 1)).astype(jnp.float32)
    x = bilinear_upsample_x2(x)
    cinp = params["w1"].shape[1]
    x = jnp.pad(x, ((0, 0), (0, 0), (0, 0), (0, cinp - x.shape[-1])))
    x = x.astype(jnp.bfloat16)
    x = _conv_ref(x, params["w1"], params["s1"], params["t1"]).astype(jnp.bfloat16)
    x = _conv_ref(x, params["w2"], params["s2"], params["t2"])
    y = x[..., :out_ch].astype(jnp.float32)
    return jnp.transpose(y, (0, 3, 1, 2))


# ----------------------------------------------------------------------------

if __name__ == "__main__":
    key = jax.random.PRNGKey(0)
    kx, kp = jax.random.split(key)

    N, in_ch, out_ch, H, W = 2, 4, 8, 16, 16
    x = jax.random.normal(kx, (N, in_ch, H, W), jnp.float32)
    params = init_up_no_skip_params(kp, in_ch, out_ch)

    fwd = jax.jit(functools.partial(up_no_skip_forward, out_ch=out_ch))
    y = jax.block_until_ready(fwd(x, params))

    assert y.shape == (N, out_ch, 2 * H, 2 * W), y.shape
    assert bool(jnp.all(jnp.isfinite(y))), "non-finite output"

    y_ref = jax.block_until_ready(up_no_skip_reference(x, params, out_ch=out_ch))
    np.testing.assert_allclose(np.asarray(y), np.asarray(y_ref), rtol=5e-2, atol=5e-2)

    print("KERNEL_OK")
</pallas_src>

<mosaic_0001>
module attributes {stable_mosaic.version = 11 : i64} {
  func.func @_conv3x3_kernel(%arg0: i32, %arg1: i32, %arg2: i32, %arg3: memref<1x34x34x128xbf16, #tpu.memory_space<vmem>>, %arg4: memref<9x128x128xbf16, #tpu.memory_space<vmem>>, %arg5: memref<1x128xf32, #tpu.memory_space<vmem>>, %arg6: memref<1x128xf32, #tpu.memory_space<vmem>>, %arg7: memref<1x8x32x128xbf16, #tpu.memory_space<vmem>>, %arg8: memref<256x128xf32, #tpu.memory_space<vmem>>) attributes {dimension_semantics = [#tpu.dimension_semantics<parallel>, #tpu.dimension_semantics<parallel>, #tpu.dimension_semantics<parallel>], iteration_bounds = array<i64: 1, 2, 4>, scalar_prefetch = 0 : i64, scratch_operands = 1 : i64, tpu.core_type = #tpu.core_type<tc>, window_params = [{transform_indices = @transform_0, window_bounds = array<i64: 1, 34, 34, 128>}, {transform_indices = @transform_1, window_bounds = array<i64: 9, 128, 128>}, {transform_indices = @transform_2, window_bounds = array<i64: 1, 128>}, {transform_indices = @transform_3, window_bounds = array<i64: 1, 128>}, {transform_indices = @transform_4, window_bounds = array<i64: 1, 8, 32, 128>}]} {
    %c8_i32 = arith.constant 8 : i32
    %0 = arith.muli %arg2, %c8_i32 : i32
    %cst = arith.constant 0.000000e+00 : f32
    %1 = vector.broadcast %cst : f32 to vector<256x128xf32>
    %c0 = arith.constant 0 : index
    %c0_0 = arith.constant 0 : index
    %2 = vector.load %arg8[%c0, %c0_0] : memref<256x128xf32, #tpu.memory_space<vmem>>, vector<256x128xf32>
    tpu.vector_store %arg8[%c0, %c0_0], %1 {strides = array<i32>} : memref<256x128xf32, #tpu.memory_space<vmem>>, vector<256x128xf32>,
    %c0_i32 = arith.constant 0 : i32
    %3 = arith.addi %0, %c0_i32 : i32
    %c0_1 = arith.constant 0 : index
    %4 = arith.index_cast %3 : i32 to index
    %c0_2 = arith.constant 0 : index
    %c0_3 = arith.constant 0 : index
    %5 = vector.load %arg3[%c0_1, %4, %c0_2, %c0_3] : memref<1x34x34x128xbf16, #tpu.memory_space<vmem>>, vector<1x8x32x128xbf16>
    %6 = vector.shape_cast %5 : vector<1x8x32x128xbf16> to vector<8x32x128xbf16>
    %c0_4 = arith.constant 0 : index
    %c0_5 = arith.constant 0 : index
    %7 = vector.load %arg8[%c0_4, %c0_5] : memref<256x128xf32, #tpu.memory_space<vmem>>, vector<256x128xf32>
    %8 = vector.shape_cast %6 : vector<8x32x128xbf16> to vector<256x128xbf16>
    %c0_6 = arith.constant 0 : index
    %c0_7 = arith.constant 0 : index
    %c0_8 = arith.constant 0 : index
    %9 = vector.load %arg4[%c0_6, %c0_7, %c0_8] : memref<9x128x128xbf16, #tpu.memory_space<vmem>>, vector<1x128x128xbf16>
    %10 = vector.shape_cast %9 : vector<1x128x128xbf16> to vector<128x128xbf16>
    %cst_9 = arith.constant dense<0.000000e+00> : vector<256x128xf32>
    %11 = tpu.matmul %8, %10, %cst_9 {dimension_numbers = #tpu.dot_dimension_numbers<[1], [0], [0], [1], [0, 0, 1, 1], [], []>} : vector<256x128xbf16>, vector<128x128xbf16>, vector<256x128xf32> -> vector<256x128xf32>
    %12 = arith.addf %7, %11 : vector<256x128xf32>
    %c0_10 = arith.constant 0 : index
    %c0_11 = arith.constant 0 : index
    %13 = vector.load %arg8[%c0_10, %c0_11] : memref<256x128xf32, #tpu.memory_space<vmem>>, vector<256x128xf32>
    tpu.vector_store %arg8[%c0_10, %c0_11], %12 {strides = array<i32>} : memref<256x128xf32, #tpu.memory_space<vmem>>, vector<256x128xf32>,
    %c0_i32_12 = arith.constant 0 : i32
    %14 = arith.addi %0, %c0_i32_12 : i32
    %c0_13 = arith.constant 0 : index
    %15 = arith.index_cast %14 : i32 to index
    %c1 = arith.constant 1 : index
    %c0_14 = arith.constant 0 : index
    %16 = vector.load %arg3[%c0_13, %15, %c1, %c0_14] : memref<1x34x34x128xbf16, #tpu.memory_space<vmem>>, vector<1x8x32x128xbf16>
    %17 = vector.shape_cast %16 : vector<1x8x32x128xbf16> to vector<8x32x128xbf16>
    %c0_15 = arith.constant 0 : index
    %c0_16 = arith.constant 0 : index
    %18 = vector.load %arg8[%c0_15, %c0_16] : memref<256x128xf32, #tpu.memory_space<vmem>>, vector<256x128xf32>
    %19 = vector.shape_cast %17 : vector<8x32x128xbf16> to vector<256x128xbf16>
    %c1_17 = arith.constant 1 : index
    %c0_18 = arith.constant 0 : index
    %c0_19 = arith.constant 0 : index
    %20 = vector.load %arg4[%c1_17, %c0_18, %c0_19] : memref<9x128x128xbf16, #tpu.memory_space<vmem>>, vector<1x128x128xbf16>
    %21 = vector.shape_cast %20 : vector<1x128x128xbf16> to vector<128x128xbf16>
    %cst_20 = arith.constant dense<0.000000e+00> : vector<256x128xf32>
    %22 = tpu.matmul %19, %21, %cst_20 {dimension_numbers = #tpu.dot_dimension_numbers<[1], [0], [0], [1], [0, 0, 1, 1], [], []>} : vector<256x128xbf16>, vector<128x128xbf16>, vector<256x128xf32> -> vector<256x128xf32>
    %23 = arith.addf %18, %22 : vector<256x128xf32>
    %c0_21 = arith.constant 0 : index
    %c0_22 = arith.constant 0 : index
    %24 = vector.load %arg8[%c0_21, %c0_22] : memref<256x128xf32, #tpu.memory_space<vmem>>, vector<256x128xf32>
    tpu.vector_store %arg8[%c0_21, %c0_22], %23 {strides = array<i32>} : memref<256x128xf32, #tpu.memory_space<vmem>>, vector<256x128xf32>,
    %c0_i32_23 = arith.constant 0 : i32
    %25 = arith.addi %0, %c0_i32_23 : i32
    %c0_24 = arith.constant 0 : index
    %26 = arith.index_cast %25 : i32 to index
    %c2 = arith.constant 2 : index
    %c0_25 = arith.constant 0 : index
    %27 = vector.load %arg3[%c0_24, %26, %c2, %c0_25] : memref<1x34x34x128xbf16, #tpu.memory_space<vmem>>, vector<1x8x32x128xbf16>
    %28 = vector.shape_cast %27 : vector<1x8x32x128xbf16> to vector<8x32x128xbf16>
    %c0_26 = arith.constant 0 : index
    %c0_27 = arith.constant 0 : index
    %29 = vector.load %arg8[%c0_26, %c0_27] : memref<256x128xf32, #tpu.memory_space<vmem>>, vector<256x128xf32>
    %30 = vector.shape_cast %28 : vector<8x32x128xbf16> to vector<256x128xbf16>
    %c2_28 = arith.constant 2 : index
    %c0_29 = arith.constant 0 : index
    %c0_30 = arith.constant 0 : index
    %31 = vector.load %arg4[%c2_28, %c0_29, %c0_30] : memref<9x128x128xbf16, #tpu.memory_space<vmem>>, vector<1x128x128xbf16>
    %32 = vector.shape_cast %31 : vector<1x128x128xbf16> to vector<128x128xbf16>
    %cst_31 = arith.constant dense<0.000000e+00> : vector<256x128xf32>
    %33 = tpu.matmul %30, %32, %cst_31 {dimension_numbers = #tpu.dot_dimension_numbers<[1], [0], [0], [1], [0, 0, 1, 1], [], []>} : vector<256x128xbf16>, vector<128x128xbf16>, vector<256x128xf32> -> vector<256x128xf32>
    %34 = arith.addf %29, %33 : vector<256x128xf32>
    %c0_32 = arith.constant 0 : index
    %c0_33 = arith.constant 0 : index
    %35 = vector.load %arg8[%c0_32, %c0_33] : memref<256x128xf32, #tpu.memory_space<vmem>>, vector<256x128xf32>
    tpu.vector_store %arg8[%c0_32, %c0_33], %34 {strides = array<i32>} : memref<256x128xf32, #tpu.memory_space<vmem>>, vector<256x128xf32>,
    %c1_i32 = arith.constant 1 : i32
    %36 = arith.addi %0, %c1_i32 : i32
    %c0_34 = arith.constant 0 : index
    %37 = arith.index_cast %36 : i32 to index
    %c0_35 = arith.constant 0 : index
    %c0_36 = arith.constant 0 : index
    %38 = vector.load %arg3[%c0_34, %37, %c0_35, %c0_36] : memref<1x34x34x128xbf16, #tpu.memory_space<vmem>>, vector<1x8x32x128xbf16>
    %39 = vector.shape_cast %38 : vector<1x8x32x128xbf16> to vector<8x32x128xbf16>
    %c0_37 = arith.constant 0 : index
    %c0_38 = arith.constant 0 : index
    %40 = vector.load %arg8[%c0_37, %c0_38] : memref<256x128xf32, #tpu.memory_space<vmem>>, vector<256x128xf32>
    %41 = vector.shape_cast %39 : vector<8x32x128xbf16> to vector<256x128xbf16>
    %c3 = arith.constant 3 : index
    %c0_39 = arith.constant 0 : index
    %c0_40 = arith.constant 0 : index
    %42 = vector.load %arg4[%c3, %c0_39, %c0_40] : memref<9x128x128xbf16, #tpu.memory_space<vmem>>, vector<1x128x128xbf16>
    %43 = vector.shape_cast %42 : vector<1x128x128xbf16> to vector<128x128xbf16>
    %cst_41 = arith.constant dense<0.000000e+00> : vector<256x128xf32>
    %44 = tpu.matmul %41, %43, %cst_41 {dimension_numbers = #tpu.dot_dimension_numbers<[1], [0], [0], [1], [0, 0, 1, 1], [], []>} : vector<256x128xbf16>, vector<128x128xbf16>, vector<256x128xf32> -> vector<256x128xf32>
    %45 = arith.addf %40, %44 : vector<256x128xf32>
    %c0_42 = arith.constant 0 : index
    %c0_43 = arith.constant 0 : index
    %46 = vector.load %arg8[%c0_42, %c0_43] : memref<256x128xf32, #tpu.memory_space<vmem>>, vector<256x128xf32>
    tpu.vector_store %arg8[%c0_42, %c0_43], %45 {strides = array<i32>} : memref<256x128xf32, #tpu.memory_space<vmem>>, vector<256x128xf32>,
    %c1_i32_44 = arith.constant 1 : i32
    %47 = arith.addi %0, %c1_i32_44 : i32
    %c0_45 = arith.constant 0 : index
    %48 = arith.index_cast %47 : i32 to index
    %c1_46 = arith.constant 1 : index
    %c0_47 = arith.constant 0 : index
    %49 = vector.load %arg3[%c0_45, %48, %c1_46, %c0_47] : memref<1x34x34x128xbf16, #tpu.memory_space<vmem>>, vector<1x8x32x128xbf16>
    %50 = vector.shape_cast %49 : vector<1x8x32x128xbf16> to vector<8x32x128xbf16>
    %c0_48 = arith.constant 0 : index
    %c0_49 = arith.constant 0 : index
    %51 = vector.load %arg8[%c0_48, %c0_49] : memref<256x128xf32, #tpu.memory_space<vmem>>, vector<256x128xf32>
    %52 = vector.shape_cast %50 : vector<8x32x128xbf16> to vector<256x128xbf16>
    %c4 = arith.constant 4 : index
    %c0_50 = arith.constant 0 : index
    %c0_51 = arith.constant 0 : index
    %53 = vector.load %arg4[%c4, %c0_50, %c0_51] : memref<9x128x128xbf16, #tpu.memory_space<vmem>>, vector<1x128x128xbf16>
    %54 = vector.shape_cast %53 : vector<1x128x128xbf16> to vector<128x128xbf16>
    %cst_52 = arith.constant dense<0.000000e+00> : vector<256x128xf32>
    %55 = tpu.matmul %52, %54, %cst_52 {dimension_numbers = #tpu.dot_dimension_numbers<[1], [0], [0], [1], [0, 0, 1, 1], [], []>} : vector<256x128xbf16>, vector<128x128xbf16>, vector<256x128xf32> -> vector<256x128xf32>
    %56 = arith.addf %51, %55 : vector<256x128xf32>
    %c0_53 = arith.constant 0 : index
    %c0_54 = arith.constant 0 : index
    %57 = vector.load %arg8[%c0_53, %c0_54] : memref<256x128xf32, #tpu.memory_space<vmem>>, vector<256x128xf32>
    tpu.vector_store %arg8[%c0_53, %c0_54], %56 {strides = array<i32>} : memref<256x128xf32, #tpu.memory_space<vmem>>, vector<256x128xf32>,
    %c1_i32_55 = arith.constant 1 : i32
    %58 = arith.addi %0, %c1_i32_55 : i32
    %c0_56 = arith.constant 0 : index
    %59 = arith.index_cast %58 : i32 to index
    %c2_57 = arith.constant 2 : index
    %c0_58 = arith.constant 0 : index
    %60 = vector.load %arg3[%c0_56, %59, %c2_57, %c0_58] : memref<1x34x34x128xbf16, #tpu.memory_space<vmem>>, vector<1x8x32x128xbf16>
    %61 = vector.shape_cast %60 : vector<1x8x32x128xbf16> to vector<8x32x128xbf16>
    %c0_59 = arith.constant 0 : index
    %c0_60 = arith.constant 0 : index
    %62 = vector.load %arg8[%c0_59, %c0_60] : memref<256x128xf32, #tpu.memory_space<vmem>>, vector<256x128xf32>
    %63 = vector.shape_cast %61 : vector<8x32x128xbf16> to vector<256x128xbf16>
    %c5 = arith.constant 5 : index
    %c0_61 = arith.constant 0 : index
    %c0_62 = arith.constant 0 : index
    %64 = vector.load %arg4[%c5, %c0_61, %c0_62] : memref<9x128x128xbf16, #tpu.memory_space<vmem>>, vector<1x128x128xbf16>
    %65 = vector.shape_cast %64 : vector<1x128x128xbf16> to vector<128x128xbf16>
    %cst_63 = arith.constant dense<0.000000e+00> : vector<256x128xf32>
    %66 = tpu.matmul %63, %65, %cst_63 {dimension_numbers = #tpu.dot_dimension_numbers<[1], [0], [0], [1], [0, 0, 1, 1], [], []>} : vector<256x128xbf16>, vector<128x128xbf16>, vector<256x128xf32> -> vector<256x128xf32>
    %67 = arith.addf %62, %66 : vector<256x128xf32>
    %c0_64 = arith.constant 0 : index
    %c0_65 = arith.constant 0 : index
    %68 = vector.load %arg8[%c0_64, %c0_65] : memref<256x128xf32, #tpu.memory_space<vmem>>, vector<256x128xf32>
    tpu.vector_store %arg8[%c0_64, %c0_65], %67 {strides = array<i32>} : memref<256x128xf32, #tpu.memory_space<vmem>>, vector<256x128xf32>,
    %c2_i32 = arith.constant 2 : i32
    %69 = arith.addi %0, %c2_i32 : i32
    %c0_66 = arith.constant 0 : index
    %70 = arith.index_cast %69 : i32 to index
    %c0_67 = arith.constant 0 : index
    %c0_68 = arith.constant 0 : index
    %71 = vector.load %arg3[%c0_66, %70, %c0_67, %c0_68] : memref<1x34x34x128xbf16, #tpu.memory_space<vmem>>, vector<1x8x32x128xbf16>
    %72 = vector.shape_cast %71 : vector<1x8x32x128xbf16> to vector<8x32x128xbf16>
    %c0_69 = arith.constant 0 : index
    %c0_70 = arith.constant 0 : index
    %73 = vector.load %arg8[%c0_69, %c0_70] : memref<256x128xf32, #tpu.memory_space<vmem>>, vector<256x128xf32>
    %74 = vector.shape_cast %72 : vector<8x32x128xbf16> to vector<256x128xbf16>
    %c6 = arith.constant 6 : index
    %c0_71 = arith.constant 0 : index
    %c0_72 = arith.constant 0 : index
    %75 = vector.load %arg4[%c6, %c0_71, %c0_72] : memref<9x128x128xbf16, #tpu.memory_space<vmem>>, vector<1x128x128xbf16>
    %76 = vector.shape_cast %75 : vector<1x128x128xbf16> to vector<128x128xbf16>
    %cst_73 = arith.constant dense<0.000000e+00> : vector<256x128xf32>
    %77 = tpu.matmul %74, %76, %cst_73 {dimension_numbers = #tpu.dot_dimension_numbers<[1], [0], [0], [1], [0, 0, 1, 1], [], []>} : vector<256x128xbf16>, vector<128x128xbf16>, vector<256x128xf32> -> vector<256x128xf32>
    %78 = arith.addf %73, %77 : vector<256x128xf32>
    %c0_74 = arith.constant 0 : index
    %c0_75 = arith.constant 0 : index
    %79 = vector.load %arg8[%c0_74, %c0_75] : memref<256x128xf32, #tpu.memory_space<vmem>>, vector<256x128xf32>
    tpu.vector_store %arg8[%c0_74, %c0_75], %78 {strides = array<i32>} : memref<256x128xf32, #tpu.memory_space<vmem>>, vector<256x128xf32>,
    %c2_i32_76 = arith.constant 2 : i32
    %80 = arith.addi %0, %c2_i32_76 : i32
    %c0_77 = arith.constant 0 : index
    %81 = arith.index_cast %80 : i32 to index
    %c1_78 = arith.constant 1 : index
    %c0_79 = arith.constant 0 : index
    %82 = vector.load %arg3[%c0_77, %81, %c1_78, %c0_79] : memref<1x34x34x128xbf16, #tpu.memory_space<vmem>>, vector<1x8x32x128xbf16>
    %83 = vector.shape_cast %82 : vector<1x8x32x128xbf16> to vector<8x32x128xbf16>
    %c0_80 = arith.constant 0 : index
    %c0_81 = arith.constant 0 : index
    %84 = vector.load %arg8[%c0_80, %c0_81] : memref<256x128xf32, #tpu.memory_space<vmem>>, vector<256x128xf32>
    %85 = vector.shape_cast %83 : vector<8x32x128xbf16> to vector<256x128xbf16>
    %c7 = arith.constant 7 : index
    %c0_82 = arith.constant 0 : index
    %c0_83 = arith.constant 0 : index
    %86 = vector.load %arg4[%c7, %c0_82, %c0_83] : memref<9x128x128xbf16, #tpu.memory_space<vmem>>, vector<1x128x128xbf16>
    %87 = vector.shape_cast %86 : vector<1x128x128xbf16> to vector<128x128xbf16>
    %cst_84 = arith.constant dense<0.000000e+00> : vector<256x128xf32>
    %88 = tpu.matmul %85, %87, %cst_84 {dimension_numbers = #tpu.dot_dimension_numbers<[1], [0], [0], [1], [0, 0, 1, 1], [], []>} : vector<256x128xbf16>, vector<128x128xbf16>, vector<256x128xf32> -> vector<256x128xf32>
    %89 = arith.addf %84, %88 : vector<256x128xf32>
    %c0_85 = arith.constant 0 : index
    %c0_86 = arith.constant 0 : index
    %90 = vector.load %arg8[%c0_85, %c0_86] : memref<256x128xf32, #tpu.memory_space<vmem>>, vector<256x128xf32>
    tpu.vector_store %arg8[%c0_85, %c0_86], %89 {strides = array<i32>} : memref<256x128xf32, #tpu.memory_space<vmem>>, vector<256x128xf32>,
    %c2_i32_87 = arith.constant 2 : i32
    %91 = arith.addi %0, %c2_i32_87 : i32
    %c0_88 = arith.constant 0 : index
    %92 = arith.index_cast %91 : i32 to index
    %c2_89 = arith.constant 2 : index
    %c0_90 = arith.constant 0 : index
    %93 = vector.load %arg3[%c0_88, %92, %c2_89, %c0_90] : memref<1x34x34x128xbf16, #tpu.memory_space<vmem>>, vector<1x8x32x128xbf16>
    %94 = vector.shape_cast %93 : vector<1x8x32x128xbf16> to vector<8x32x128xbf16>
    %c0_91 = arith.constant 0 : index
    %c0_92 = arith.constant 0 : index
    %95 = vector.load %arg8[%c0_91, %c0_92] : memref<256x128xf32, #tpu.memory_space<vmem>>, vector<256x128xf32>
    %96 = vector.shape_cast %94 : vector<8x32x128xbf16> to vector<256x128xbf16>
    %c8 = arith.constant 8 : index
    %c0_93 = arith.constant 0 : index
    %c0_94 = arith.constant 0 : index
    %97 = vector.load %arg4[%c8, %c0_93, %c0_94] : memref<9x128x128xbf16, #tpu.memory_space<vmem>>, vector<1x128x128xbf16>
    %98 = vector.shape_cast %97 : vector<1x128x128xbf16> to vector<128x128xbf16>
    %cst_95 = arith.constant dense<0.000000e+00> : vector<256x128xf32>
    %99 = tpu.matmul %96, %98, %cst_95 {dimension_numbers = #tpu.dot_dimension_numbers<[1], [0], [0], [1], [0, 0, 1, 1], [], []>} : vector<256x128xbf16>, vector<128x128xbf16>, vector<256x128xf32> -> vector<256x128xf32>
    %100 = arith.addf %95, %99 : vector<256x128xf32>
    %c0_96 = arith.constant 0 : index
    %c0_97 = arith.constant 0 : index
    %101 = vector.load %arg8[%c0_96, %c0_97] : memref<256x128xf32, #tpu.memory_space<vmem>>, vector<256x128xf32>
    tpu.vector_store %arg8[%c0_96, %c0_97], %100 {strides = array<i32>} : memref<256x128xf32, #tpu.memory_space<vmem>>, vector<256x128xf32>,
    %c0_98 = arith.constant 0 : index
    %c0_99 = arith.constant 0 : index
    %102 = vector.load %arg8[%c0_98, %c0_99] : memref<256x128xf32, #tpu.memory_space<vmem>>, vector<256x128xf32>
    %c0_100 = arith.constant 0 : index
    %c0_101 = arith.constant 0 : index
    %103 = vector.load %arg5[%c0_100, %c0_101] : memref<1x128xf32, #tpu.memory_space<vmem>>, vector<1x128xf32>
    %104 = vector.broadcast %103 : vector<1x128xf32> to vector<256x128xf32>
    %105 = arith.mulf %102, %104 : vector<256x128xf32>
    %c0_102 = arith.constant 0 : index
    %c0_103 = arith.constant 0 : index
    %106 = vector.load %arg6[%c0_102, %c0_103] : memref<1x128xf32, #tpu.memory_space<vmem>>, vector<1x128xf32>
    %107 = vector.broadcast %106 : vector<1x128xf32> to vector<256x128xf32>
    %108 = arith.addf %105, %107 : vector<256x128xf32>
    %cst_104 = arith.constant 0.000000e+00 : f32
    %109 = vector.broadcast %cst_104 : f32 to vector<256x128xf32>
    %110 = arith.maximumf %108, %109 : vector<256x128xf32>
    %111 = vector.shape_cast %110 : vector<256x128xf32> to vector<8x32x128xf32>
    %112 = arith.truncf %111 : vector<8x32x128xf32> to vector<8x32x128xbf16>
    %c0_105 = arith.constant 0 : index
    %c0_106 = arith.constant 0 : index
    %c0_107 = arith.constant 0 : index
    %c0_108 = arith.constant 0 : index
    %113 = vector.load %arg7[%c0_105, %c0_106, %c0_107, %c0_108] : memref<1x8x32x128xbf16, #tpu.memory_space<vmem>>, vector<1x8x32x128xbf16>
    %114 = vector.shape_cast %113 : vector<1x8x32x128xbf16> to vector<8x32x128xbf16>
    %115 = vector.shape_cast %112 : vector<8x32x128xbf16> to vector<1x8x32x128xbf16>
    tpu.vector_store %arg7[%c0_105, %c0_106, %c0_107, %c0_108], %115 {strides = array<i32>} : memref<1x8x32x128xbf16, #tpu.memory_space<vmem>>, vector<1x8x32x128xbf16>,
    return
  }
  func.func @transform_0(%arg0: i32, %arg1: i32, %arg2: i32) -> (i32, i32, i32, i32) {
    %c0_i32 = arith.constant 0 : i32
    %c0_i32_0 = arith.constant 0 : i32
    %c0_i32_1 = arith.constant 0 : i32
    %c0_i32_2 = arith.constant 0 : i32
    return %arg1, %c0_i32, %c0_i32_0, %c0_i32_1 : i32, i32, i32, i32
  }
  func.func @transform_1(%arg0: i32, %arg1: i32, %arg2: i32) -> (i32, i32, i32) {
    %c0_i32 = arith.constant 0 : i32
    %c0_i32_0 = arith.constant 0 : i32
    %c0_i32_1 = arith.constant 0 : i32
    return %c0_i32, %c0_i32_0, %arg0 : i32, i32, i32
  }
  func.func @transform_2(%arg0: i32, %arg1: i32, %arg2: i32) -> (i32, i32) {
    %c0_i32 = arith.constant 0 : i32
    %c0_i32_0 = arith.constant 0 : i32
    return %c0_i32, %arg0 : i32, i32
  }
  func.func @transform_3(%arg0: i32, %arg1: i32, %arg2: i32) -> (i32, i32) {
    %c0_i32 = arith.constant 0 : i32
    %c0_i32_0 = arith.constant 0 : i32
    return %c0_i32, %arg0 : i32, i32
  }
  func.func @transform_4(%arg0: i32, %arg1: i32, %arg2: i32) -> (i32, i32, i32, i32) {
    %c0_i32 = arith.constant 0 : i32
    %c0_i32_0 = arith.constant 0 : i32
    return %arg1, %arg2, %c0_i32, %arg0 : i32, i32, i32, i32
  }
}

</mosaic_0001>

<llo_original>
// kernel: up_no_skip_forward.2
$region0: #{up_no_skip_forward.2}
  #allocation0 [shape = 'u32[]', space=smem, size = 0x4, offset = 0x4, fixed_abs, tag = 'smem constant byte address 0x4 - core index']
  #allocation1 [shape = 'u32[144,128]{1,0:T(1,128)}', space=vmem, size = 0x12000, scoped, tag = 'internal scratch']
  #allocation2 [shape = 'f32[256,128]{1,0:T(8,128)}', space=vmem, size = 0x20000, scoped, tag = 'scratch operand']
  %s0 = inlined_call_operand.vmem [shape: bf16[2,34,34,128], index: 0, kind: input, shape index: {}]
  %s1 = inlined_call_operand.vmem [shape: bf16[9,128,128], index: 1, kind: input, shape index: {}]
  %s2 = inlined_call_operand.vmem [shape: f32[1,128], index: 2, kind: input, shape index: {}]
  %s3 = inlined_call_operand.vmem [shape: f32[1,128], index: 3, kind: input, shape index: {}]
  %s4 = inlined_call_operand.vmem [shape: bf16[2,32,32,128], index: 4, kind: output, shape index: {}]
  %s5 = sld [smem:[#allocation0]]
  $region49: #{up_no_skip_forward.2} parent=0
    _
  %s7 = ssub.s32 1, %s5
  %s8 = scalar_select 0, %s7, %s5
  loop: start=0, step=1, limit=10
  $region2: #{up_no_skip_forward.2} parent=0 // loop_pre_header
    _
  $region3: #{up_no_skip_forward.2} parent=0 // loop_header
    %s10 = sphi 0, %s14
    %p11 = scmp.ge.s32.totalorder %s10, 10
    %s17 = sphi 0, %s36
    %s18 = sphi 0, %s32
    %s19 = sphi 0, %s28
    %s20 = sphi 0, %s17
    %s21 = sphi 0, %s18
    %s22 = sphi 0, %s19
    %s23 = sphi 0, %s20
    %s24 = sphi 0, %s21
    %s25 = sphi 0, %s22
    %s39 = sphi 0, %s41
    %s42 = sphi 0, %s39
    %s43 = sphi 0, %s42
    %s59 = sphi 0, %s43
    %s65 = sphi 0, %s67
    %s68 = sphi 0, %s65
    %s69 = sphi 0, %s68
    %s85 = sphi 0, %s69
    %s91 = sphi 0, %s93
    %s94 = sphi 0, %s91
    %s95 = sphi 0, %s94
    %s111 = sphi 0, %s95
    %s117 = sphi 0, %s119
    %s120 = sphi 0, %s117
    %s121 = sphi 0, %s120
    %s137 = sphi 0, %s121
    %s147 = sphi 0, %s149
    %s150 = sphi 0, %s147
    %s151 = sphi 0, %s150
    %s167 = sphi 0, %s151
  $region4: #{up_no_skip_forward.2} parent=0 // loop_header_branch
    %13 = sbr.rel (%p11) target = $region8
  $region5: #{up_no_skip_forward.2} parent=0 // loop_body
    %s15 = ssub.s32 %s10, 1
    %s16 = ssub.s32 %s10, 2
    %s26 = sadd.s32 1, %s19
    %p27 = scmp.ge.s32.totalorder %s26, 4
    %s28 = scalar_select %p27, 0, %s26
    %s29 = sadd.s32 1, %s18
    %s30 = scalar_select %p27, %s29, %s18
    %p31 = scmp.ge.s32.totalorder %s30, 2
    %s32 = scalar_select %p31, 0, %s30
    %s33 = sadd.s32 1, %s17
    %s34 = scalar_select %p31, %s33, %s17
    %p35 = scmp.ge.s32.totalorder %s34, 1
    %s36 = scalar_select %p35, 0, %s34
    %s37 = ssub.s32 %s18, %s32
    %p38 = scmp.eq.s32.totalorder %s37, 0
    %s40 = sadd.s32 %s39, 1
    %s41 = scalar_select %p38, %s39, %s40
    %p44 = pneg %p38
    %p45 = scmp.eq.s32.totalorder %s10, 7
    %p46 = por %p44, %p45
    %p47 = scmp.ne.s32.totalorder %s39, %s42
    %p48 = scmp.eq.s32.totalorder %s10, 0
    %p49 = por %p47, %p48
    %p50 = scmp.ne.s32.totalorder %s39, %s42
    %p51 = scmp.eq.s32.totalorder %s15, 7
    %p52 = por %p50, %p51
    %p53 = scmp.ne.s32.totalorder %s42, %s43
    %p54 = scmp.eq.s32.totalorder %s15, 0
    %p55 = por %p53, %p54
    %p56 = scmp.ne.s32.totalorder %s42, %s43
    %p57 = scmp.eq.s32.totalorder %s16, 7
    %p58 = por %p56, %p57
    %p60 = scmp.ne.s32.totalorder %s43, %s59
    %p61 = scmp.eq.s32.totalorder %s16, 0
    %p62 = por %p60, %p61
    %s63 = ssub.s32 %s17, %s36
    %p64 = scmp.eq.s32.totalorder %s63, 0
    %s66 = sadd.s32 %s65, 1
    %s67 = scalar_select %p64, %s65, %s66
    %p70 = pneg %p64
    %p71 = scmp.eq.s32.totalorder %s10, 7
    %p72 = por %p70, %p71
    %p73 = scmp.ne.s32.totalorder %s65, %s68
    %p74 = scmp.eq.s32.totalorder %s10, 0
    %p75 = por %p73, %p74
    %p76 = scmp.ne.s32.totalorder %s65, %s68
    %p77 = scmp.eq.s32.totalorder %s15, 7
    %p78 = por %p76, %p77
    %p79 = scmp.ne.s32.totalorder %s68, %s69
    %p80 = scmp.eq.s32.totalorder %s15, 0
    %p81 = por %p79, %p80
    %p82 = scmp.ne.s32.totalorder %s68, %s69
    %p83 = scmp.eq.s32.totalorder %s16, 7
    %p84 = por %p82, %p83
    %p86 = scmp.ne.s32.totalorder %s69, %s85
    %p87 = scmp.eq.s32.totalorder %s16, 0
    %p88 = por %p86, %p87
    %s89 = ssub.s32 %s17, %s36
    %p90 = scmp.eq.s32.totalorder %s89, 0
    %s92 = sadd.s32 %s91, 1
    %s93 = scalar_select %p90, %s91, %s92
    %p96 = pneg %p90
    %p97 = scmp.eq.s32.totalorder %s10, 7
    %p98 = por %p96, %p97
    %p99 = scmp.ne.s32.totalorder %s91, %s94
    %p100 = scmp.eq.s32.totalorder %s10, 0
    %p101 = por %p99, %p100
    %p102 = scmp.ne.s32.totalorder %s91, %s94
    %p103 = scmp.eq.s32.totalorder %s15, 7
    %p104 = por %p102, %p103
    %p105 = scmp.ne.s32.totalorder %s94, %s95
    %p106 = scmp.eq.s32.totalorder %s15, 0
    %p107 = por %p105, %p106
    %p108 = scmp.ne.s32.totalorder %s94, %s95
    %p109 = scmp.eq.s32.totalorder %s16, 7
    %p110 = por %p108, %p109
    %p112 = scmp.ne.s32.totalorder %s95, %s111
    %p113 = scmp.eq.s32.totalorder %s16, 0
    %p114 = por %p112, %p113
    %s115 = ssub.s32 %s17, %s36
    %p116 = scmp.eq.s32.totalorder %s115, 0
    %s118 = sadd.s32 %s117, 1
    %s119 = scalar_select %p116, %s117, %s118
    %p122 = pneg %p116
    %p123 = scmp.eq.s32.totalorder %s10, 7
    %p124 = por %p122, %p123
    %p125 = scmp.ne.s32.totalorder %s117, %s120
    %p126 = scmp.eq.s32.totalorder %s10, 0
    %p127 = por %p125, %p126
    %p128 = scmp.ne.s32.totalorder %s117, %s120
    %p129 = scmp.eq.s32.totalorder %s15, 7
    %p130 = por %p128, %p129
    %p131 = scmp.ne.s32.totalorder %s120, %s121
    %p132 = scmp.eq.s32.totalorder %s15, 0
    %p133 = por %p131, %p132
    %p134 = scmp.ne.s32.totalorder %s120, %s121
    %p135 = scmp.eq.s32.totalorder %s16, 7
    %p136 = por %p134, %p135
    %p138 = scmp.ne.s32.totalorder %s121, %s137
    %p139 = scmp.eq.s32.totalorder %s16, 0
    %p140 = por %p138, %p139
    %s141 = ssub.s32 %s18, %s32
    %s142 = ssub.s32 %s19, %s28
    %s143 = sor.u32 %s141, %s142
    %s144 = ssub.s32 %s17, %s36
    %s145 = sor.u32 %s143, %s144
    %p146 = scmp.eq.s32.totalorder %s145, 0
    %s148 = sadd.s32 %s147, 1
    %s149 = scalar_select %p146, %s147, %s148
    %p152 = pneg %p146
    %p153 = scmp.eq.s32.totalorder %s10, 7
    %p154 = por %p152, %p153
    %p155 = scmp.ne.s32.totalorder %s147, %s150
    %p156 = scmp.eq.s32.totalorder %s10, 0
    %p157 = por %p155, %p156
    %p158 = scmp.ne.s32.totalorder %s147, %s150
    %p159 = scmp.eq.s32.totalorder %s15, 7
    %p160 = por %p158, %p159
    %p161 = scmp.ne.s32.totalorder %s150, %s151
    %p162 = scmp.eq.s32.totalorder %s15, 0
    %p163 = por %p161, %p162
    %p164 = scmp.ne.s32.totalorder %s150, %s151
    %p165 = scmp.eq.s32.totalorder %s16, 7
    %p166 = por %p164, %p165
    %p168 = scmp.ne.s32.totalorder %s151, %s167
    %p169 = scmp.eq.s32.totalorder %s16, 0
    %p170 = por %p168, %p169
    %p171 = scmp.le.s32.totalorder 1, %s10
    %p172 = scmp.lt.s32.totalorder %s10, 9
    %p173 = pnand %p171, %p172
    %p174 = pneg %p173
    // Predicated region
    $region9: #{up_no_skip_forward.2} parent=5 // pred_check
      _
    $region10: #{up_no_skip_forward.2} parent=5 // pred_check_branch
      %176 = sbr.rel (%p173) target = $region12
    $region11: #{up_no_skip_forward.2} parent=5 // pred_region
      %s177 = ssub.s32 %s10, 1
      // Predicated region
      $region13: #{up_no_skip_forward.2} parent=11 // pred_check
        %p178 = pneg %p81
      $region14: #{up_no_skip_forward.2} parent=11 // pred_check_branch
        %180 = sbr.rel (%p178) target = $region16
      $region15: #{up_no_skip_forward.2} parent=11 // pred_region
        %p181 = scmp.lt.s32.totalorder %s20, 0
        %s182 = scalar_select %p181, %s20, 0
        %s183 = smul.addr %s182, 4
        %s184 = scalar_lea.vmem %s1, %s183
      $region16: #{up_no_skip_forward.2} parent=11 // pred_fallthru
        _
      // Predicated region
      $region17: #{up_no_skip_forward.2} parent=11 // pred_check
        %p185 = pneg %p107
      $region18: #{up_no_skip_forward.2} parent=11 // pred_check_branch
        %187 = sbr.rel (%p185) target = $region20
      $region19: #{up_no_skip_forward.2} parent=11 // pred_region
        %p188 = scmp.lt.s32.totalorder %s20, 0
        %s189 = scalar_select %p188, %s20, 0
        %s190 = scalar_lea.vmem %s2, %s189
      $region20: #{up_no_skip_forward.2} parent=11 // pred_fallthru
        _
      // Predicated region
      $region21: #{up_no_skip_forward.2} parent=11 // pred_check
        %p191 = pneg %p133
      $region22: #{up_no_skip_forward.2} parent=11 // pred_check_branch
        %193 = sbr.rel (%p191) target = $region24
      $region23: #{up_no_skip_forward.2} parent=11 // pred_region
        %p194 = scmp.lt.s32.totalorder %s20, 0
        %s195 = scalar_select %p194, %s20, 0
        %s196 = scalar_lea.vmem %s3, %s195
      $region24: #{up_no_skip_forward.2} parent=11 // pred_fallthru
        _
    $region12: #{up_no_skip_forward.2} parent=5 // pred_fallthru
      _
    %p197 = scmp.lt.s32.totalorder %s10, 8
    // Predicated region
    $region25: #{up_no_skip_forward.2} parent=5 // pred_check
      %p198 = pneg %p197
    $region26: #{up_no_skip_forward.2} parent=5 // pred_check_branch
      %200 = sbr.rel (%p198) target = $region28
    $region27: #{up_no_skip_forward.2} parent=5 // pred_region
      // Predicated region
      $region29: #{up_no_skip_forward.2} parent=27 // pred_check
        %p201 = pneg %p49
      $region30: #{up_no_skip_forward.2} parent=27 // pred_check_branch
        %203 = sbr.rel (%p201) target = $region32
      $region31: #{up_no_skip_forward.2} parent=27 // pred_region
        %p204 = scmp.lt.s32.totalorder %s18, 1
        %s205 = scalar_select %p204, %s18, 1
        %s206 = smul.addr %s205, 170
        %s207 = smul.addr %s206, 4
        %s208 = scalar_lea.vmem %s0, %s207
      $region32: #{up_no_skip_forward.2} parent=27 // pred_fallthru
        _
    $region28: #{up_no_skip_forward.2} parent=5 // pred_fallthru
      _
    %p209 = scmp.le.s32.totalorder 1, %s10
    %p210 = scmp.lt.s32.totalorder %s10, 9
    %p211 = pnand %p209, %p210
    %p212 = pneg %p211
    // Predicated region
    $region33: #{up_no_skip_forward.2} parent=5 // pred_check
      _
    $region34: #{up_no_skip_forward.2} parent=5 // pred_check_branch
      %214 = sbr.rel (%p211) target = $region36
    $region35: #{up_no_skip_forward.2} parent=5 // pred_region
      %s215 = ssub.s32 %s10, 1
      %p216 = scmp.lt.s32.totalorder %s21, 1
      %s217 = scalar_select %p216, %s21, 1
      %s218 = smul.addr %s217, 170
      %s219 = smul.addr %s218, 4
      %s220 = scalar_lea.vmem %s0, %s219
      %p221 = pneg %p55
      %p222 = pneg %p52
      %p223 = scmp.lt.s32.totalorder %s20, 0
      %s224 = scalar_select %p223, %s20, 0
      %s225 = smul.addr %s224, 4
      %s226 = scalar_lea.vmem %s1, %s225
      %p227 = pneg %p81
      %p228 = pneg %p78
      %p229 = scmp.lt.s32.totalorder %s20, 0
      %s230 = scalar_select %p229, %s20, 0
      %s231 = scalar_lea.vmem %s2, %s230
      %p232 = pneg %p107
      %p233 = pneg %p104
      %p234 = scmp.lt.s32.totalorder %s20, 0
      %s235 = scalar_select %p234, %s20, 0
      %s236 = scalar_lea.vmem %s3, %s235
      %p237 = pneg %p133
      %p238 = pneg %p130
      %p239 = pneg %p163
      %p240 = pneg %p160
      %s241 = smul.u32 8, %s22
      %p242 = scmp.lt.s32.totalorder %s21, 1
      %s243 = scalar_select %p242, %s21, 1
      %p244 = scmp.lt.s32.totalorder %s241, 31
      %s245 = scalar_select %p244, %s241, 31
      %p246 = scmp.lt.s32.totalorder %s20, 0
      %s247 = scalar_select %p246, %s20, 0
      %s248 = smul.addr %s245, 4
      %s249 = sadd.s32 %s247, %s248
      %s250 = smul.addr %s243, 128
      %s251 = sadd.s32 %s249, %s250
      %s252 = smul.addr %s251, 4
      %s253 = scalar_lea.vmem %s4, %s252
      %p254 = scmp.lt.s32.totalorder %s21, 1
      %s255 = scalar_select %p254, %s21, 1
      %s256 = smul.addr %s255, 170
      %s257 = smul.addr %s256, 4
      %s258 = scalar_lea.vmem %s0, %s257
      %p259 = scmp.lt.s32.totalorder %s20, 0
      %s260 = scalar_select %p259, %s20, 0
      %s261 = smul.addr %s260, 4
      %s262 = scalar_lea.vmem %s1, %s261
      %p263 = scmp.lt.s32.totalorder %s20, 0
      %s264 = scalar_select %p263, %s20, 0
      %s265 = scalar_lea.vmem %s2, %s264
      %p266 = scmp.lt.s32.totalorder %s20, 0
      %s267 = scalar_select %p266, %s20, 0
      %s268 = scalar_lea.vmem %s3, %s267
      %s269 = smul.u32 8, %s22
      %p270 = scmp.lt.s32.totalorder %s21, 1
      %s271 = scalar_select %p270, %s21, 1
      %p272 = scmp.lt.s32.totalorder %s269, 31
      %s273 = scalar_select %p272, %s269, 31
      %p274 = scmp.lt.s32.totalorder %s20, 0
      %s275 = scalar_select %p274, %s20, 0
      %s276 = smul.addr %s273, 4
      %s277 = sadd.s32 %s275, %s276
      %s278 = smul.addr %s271, 128
      %s279 = sadd.s32 %s277, %s278
      %s280 = smul.addr %s279, 4
      %s281 = scalar_lea.vmem %s4, %s280
      %s282 = smul.u32 8, %s22
      %s284 = smul.u32 %s22, 8
      %285 = vst [vmem:[#allocation2] sm:$0xff] 0.0
      %286 = vst [vmem:[#allocation2 + $0x8] sm:$0xff] 0.0
      %287 = vst [vmem:[#allocation2 + $0x10] sm:$0xff] 0.0
      %288 = vst [vmem:[#allocation2 + $0x18] sm:$0xff] 0.0
      %289 = vst [vmem:[#allocation2 + $0x20] sm:$0xff] 0.0
      %290 = vst [vmem:[#allocation2 + $0x28] sm:$0xff] 0.0
      %291 = vst [vmem:[#allocation2 + $0x30] sm:$0xff] 0.0
      %292 = vst [vmem:[#allocation2 + $0x38] sm:$0xff] 0.0
      %293 = vst [vmem:[#allocation2 + $0x40] sm:$0xff] 0.0
      %294 = vst [vmem:[#allocation2 + $0x48] sm:$0xff] 0.0
      %295 = vst [vmem:[#allocation2 + $0x50] sm:$0xff] 0.0
      %296 = vst [vmem:[#allocation2 + $0x58] sm:$0xff] 0.0
      %297 = vst [vmem:[#allocation2 + $0x60] sm:$0xff] 0.0
      %298 = vst [vmem:[#allocation2 + $0x68] sm:$0xff] 0.0
      %299 = vst [vmem:[#allocation2 + $0x70] sm:$0xff] 0.0
      %300 = vst [vmem:[#allocation2 + $0x78] sm:$0xff] 0.0
      %301 = vst [vmem:[#allocation2 + $0x80] sm:$0xff] 0.0
      %302 = vst [vmem:[#allocation2 + $0x88] sm:$0xff] 0.0
      %303 = vst [vmem:[#allocation2 + $0x90] sm:$0xff] 0.0
      %304 = vst [vmem:[#allocation2 + $0x98] sm:$0xff] 0.0
      %305 = vst [vmem:[#allocation2 + $0xa0] sm:$0xff] 0.0
      %306 = vst [vmem:[#allocation2 + $0xa8] sm:$0xff] 0.0
      %307 = vst [vmem:[#allocation2 + $0xb0] sm:$0xff] 0.0
      %308 = vst [vmem:[#allocation2 + $0xb8] sm:$0xff] 0.0
      %309 = vst [vmem:[#allocation2 + $0xc0] sm:$0xff] 0.0
      %310 = vst [vmem:[#allocation2 + $0xc8] sm:$0xff] 0.0
      %311 = vst [vmem:[#allocation2 + $0xd0] sm:$0xff] 0.0
      %312 = vst [vmem:[#allocation2 + $0xd8] sm:$0xff] 0.0
      %313 = vst [vmem:[#allocation2 + $0xe0] sm:$0xff] 0.0
      %314 = vst [vmem:[#allocation2 + $0xe8] sm:$0xff] 0.0
      %315 = vst [vmem:[#allocation2 + $0xf0] sm:$0xff] 0.0
      %316 = vst [vmem:[#allocation2 + $0xf8] sm:$0xff] 0.0
      %s317 = smul.u32 %s284, 5
      %s318 = smul.addr %s317, 4
      %s319 = scalar_lea.vmem %s258, %s318
      %v320 = vld [vmem:[%s319] sm:$0xf]
      %v321 = vld [vmem:[%s319 + $0x4] sm:$0xf]
      %v322 = vld [vmem:[%s319 + $0x8] sm:$0xf]
      %v323 = vld [vmem:[%s319 + $0xc] sm:$0xf]
      %v324 = vld [vmem:[%s319 + $0x14] sm:$0xf]
      %v325 = vld [vmem:[%s319 + $0x18] sm:$0xf]
      %v326 = vld [vmem:[%s319 + $0x1c] sm:$0xf]
      %v327 = vld [vmem:[%s319 + $0x20] sm:$0xf]
      %v328 = vld [vmem:[%s319 + $0x28] sm:$0xf]
      %v329 = vld [vmem:[%s319 + $0x2c] sm:$0xf]
      %v330 = vld [vmem:[%s319 + $0x30] sm:$0xf]
      %v331 = vld [vmem:[%s319 + $0x34] sm:$0xf]
      %v332 = vld [vmem:[%s319 + $0x3c] sm:$0xf]
      %v333 = vld [vmem:[%s319 + $0x40] sm:$0xf]
      %v334 = vld [vmem:[%s319 + $0x44] sm:$0xf]
      %v335 = vld [vmem:[%s319 + $0x48] sm:$0xf]
      %v336 = vld [vmem:[%s319 + $0x50] sm:$0xf]
      %v337 = vld [vmem:[%s319 + $0x54] sm:$0xf]
      %v338 = vld [vmem:[%s319 + $0x58] sm:$0xf]
      %v339 = vld [vmem:[%s319 + $0x5c] sm:$0xf]
      %v340 = vld [vmem:[%s319 + $0x64] sm:$0xf]
      %v341 = vld [vmem:[%s319 + $0x68] sm:$0xf]
      %v342 = vld [vmem:[%s319 + $0x6c] sm:$0xf]
      %v343 = vld [vmem:[%s319 + $0x70] sm:$0xf]
      %v344 = vld [vmem:[%s319 + $0x78] sm:$0xf]
      %v345 = vld [vmem:[%s319 + $0x7c] sm:$0xf]
      %v346 = vld [vmem:[%s319 + $0x80] sm:$0xf]
      %v347 = vld [vmem:[%s319 + $0x84] sm:$0xf]
      %v348 = vld [vmem:[%s319 + $0x8c] sm:$0xf]
      %v349 = vld [vmem:[%s319 + $0x90] sm:$0xf]
      %v350 = vld [vmem:[%s319 + $0x94] sm:$0xf]
      %v351 = vld [vmem:[%s319 + $0x98] sm:$0xf]
      %v352 = vld [vmem:[#allocation2] sm:$0xff]
      %v353 = vld [vmem:[#allocation2 + $0x8] sm:$0xff]
      %v354 = vld [vmem:[#allocation2 + $0x10] sm:$0xff]
      %v355 = vld [vmem:[#allocation2 + $0x18] sm:$0xff]
      %v356 = vld [vmem:[#allocation2 + $0x20] sm:$0xff]
      %v357 = vld [vmem:[#allocation2 + $0x28] sm:$0xff]
      %v358 = vld [vmem:[#allocation2 + $0x30] sm:$0xff]
      %v359 = vld [vmem:[#allocation2 + $0x38] sm:$0xff]
      %v360 = vld [vmem:[#allocation2 + $0x40] sm:$0xff]
      %v361 = vld [vmem:[#allocation2 + $0x48] sm:$0xff]
      %v362 = vld [vmem:[#allocation2 + $0x50] sm:$0xff]
      %v363 = vld [vmem:[#allocation2 + $0x58] sm:$0xff]
      %v364 = vld [vmem:[#allocation2 + $0x60] sm:$0xff]
      %v365 = vld [vmem:[#allocation2 + $0x68] sm:$0xff]
      %v366 = vld [vmem:[#allocation2 + $0x70] sm:$0xff]
      %v367 = vld [vmem:[#allocation2 + $0x78] sm:$0xff]
      %v368 = vld [vmem:[#allocation2 + $0x80] sm:$0xff]
      %v369 = vld [vmem:[#allocation2 + $0x88] sm:$0xff]
      %v370 = vld [vmem:[#allocation2 + $0x90] sm:$0xff]
      %v371 = vld [vmem:[#allocation2 + $0x98] sm:$0xff]
      %v372 = vld [vmem:[#allocation2 + $0xa0] sm:$0xff]
      %v373 = vld [vmem:[#allocation2 + $0xa8] sm:$0xff]
      %v374 = vld [vmem:[#allocation2 + $0xb0] sm:$0xff]
      %v375 = vld [vmem:[#allocation2 + $0xb8] sm:$0xff]
      %v376 = vld [vmem:[#allocation2 + $0xc0] sm:$0xff]
      %v377 = vld [vmem:[#allocation2 + $0xc8] sm:$0xff]
      %v378 = vld [vmem:[#allocation2 + $0xd0] sm:$0xff]
      %v379 = vld [vmem:[#allocation2 + $0xd8] sm:$0xff]
      %v380 = vld [vmem:[#allocation2 + $0xe0] sm:$0xff]
      %v381 = vld [vmem:[#allocation2 + $0xe8] sm:$0xff]
      %v382 = vld [vmem:[#allocation2 + $0xf0] sm:$0xff]
      %v383 = vld [vmem:[#allocation2 + $0xf8] sm:$0xff]
      %v384 = vld [vmem:[%s262] sm:$0xf]
      %v385 = vld [vmem:[%s262 + $0x4] sm:$0xf]
      %v386 = vld [vmem:[%s262 + $0x8] sm:$0xf]
      %v387 = vld [vmem:[%s262 + $0xc] sm:$0xf]
      %v388 = vld [vmem:[%s262 + $0x10] sm:$0xf]
      %v389 = vld [vmem:[%s262 + $0x14] sm:$0xf]
      %v390 = vld [vmem:[%s262 + $0x18] sm:$0xf]
      %v391 = vld [vmem:[%s262 + $0x1c] sm:$0xf]
      %v392 = vld [vmem:[%s262 + $0x20] sm:$0xf]
      %v393 = vld [vmem:[%s262 + $0x24] sm:$0xf]
      %v394 = vld [vmem:[%s262 + $0x28] sm:$0xf]
      %v395 = vld [vmem:[%s262 + $0x2c] sm:$0xf]
      %v396 = vld [vmem:[%s262 + $0x30] sm:$0xf]
      %v397 = vld [vmem:[%s262 + $0x34] sm:$0xf]
      %v398 = vld [vmem:[%s262 + $0x38] sm:$0xf]
      %v399 = vld [vmem:[%s262 + $0x3c] sm:$0xf]
      %v432 = vunpack.c.l.b16 %v320
      %v433 = vunpack.c.l.b16 %v321
      %v434 = vunpack.c.l.b16 %v322
      %v435 = vunpack.c.l.b16 %v323
      %v436 = vunpack.c.l.b16 %v324
      %v437 = vunpack.c.l.b16 %v325
      %v438 = vunpack.c.l.b16 %v326
      %v439 = vunpack.c.l.b16 %v327
      %v440 = vunpack.c.l.b16 %v328
      %v441 = vunpack.c.l.b16 %v329
      %v442 = vunpack.c.l.b16 %v330
      %v443 = vunpack.c.l.b16 %v331
      %v444 = vunpack.c.l.b16 %v332
      %v445 = vunpack.c.l.b16 %v333
      %v446 = vunpack.c.l.b16 %v334
      %v447 = vunpack.c.l.b16 %v335
      %v448 = vunpack.c.l.b16 %v336
      %v449 = vunpack.c.l.b16 %v337
      %v450 = vunpack.c.l.b16 %v338
      %v451 = vunpack.c.l.b16 %v339
      %v452 = vunpack.c.l.b16 %v340
      %v453 = vunpack.c.l.b16 %v341
      %v454 = vunpack.c.l.b16 %v342
      %v455 = vunpack.c.l.b16 %v343
      %v456 = vunpack.c.l.b16 %v344
      %v457 = vunpack.c.l.b16 %v345
      %v458 = vunpack.c.l.b16 %v346
      %v459 = vunpack.c.l.b16 %v347
      %v460 = vunpack.c.l.b16 %v348
      %v461 = vunpack.c.l.b16 %v349
      %v462 = vunpack.c.l.b16 %v350
      %v463 = vunpack.c.l.b16 %v351
      %v464 = vpack.c.b16 %v433, %v432
      %v465 = vpack.c.b16 %v435, %v434
      %v466 = vpack.c.b16 %v437, %v436
      %v467 = vpack.c.b16 %v439, %v438
      %v468 = vpack.c.b16 %v441, %v440
      %v469 = vpack.c.b16 %v443, %v442
      %v470 = vpack.c.b16 %v445, %v444
      %v471 = vpack.c.b16 %v447, %v446
      %v472 = vpack.c.b16 %v449, %v448
      %v473 = vpack.c.b16 %v451, %v450
      %v474 = vpack.c.b16 %v453, %v452
      %v475 = vpack.c.b16 %v455, %v454
      %v476 = vpack.c.b16 %v457, %v456
      %v477 = vpack.c.b16 %v459, %v458
      %v478 = vpack.c.b16 %v461, %v460
      %v479 = vpack.c.b16 %v463, %v462
      %v512 = vunpack.c.l.b16 %v384
      %v513 = vunpack.c.l.b16 %v385
      %v514 = vunpack.c.l.b16 %v386
      %v515 = vunpack.c.l.b16 %v387
      %v516 = vunpack.c.l.b16 %v388
      %v517 = vunpack.c.l.b16 %v389
      %v518 = vunpack.c.l.b16 %v390
      %v519 = vunpack.c.l.b16 %v391
      %v520 = vunpack.c.l.b16 %v392
      %v521 = vunpack.c.l.b16 %v393
      %v522 = vunpack.c.l.b16 %v394
      %v523 = vunpack.c.l.b16 %v395
      %v524 = vunpack.c.l.b16 %v396
      %v525 = vunpack.c.l.b16 %v397
      %v526 = vunpack.c.l.b16 %v398
      %v527 = vunpack.c.l.b16 %v399
      %v528 = vpack.c.b16 %v513, %v512
      %v529 = vpack.c.b16 %v515, %v514
      %v530 = vpack.c.b16 %v517, %v516
      %v531 = vpack.c.b16 %v519, %v518
      %v532 = vpack.c.b16 %v521, %v520
      %v533 = vpack.c.b16 %v523, %v522
      %v534 = vpack.c.b16 %v525, %v524
      %v535 = vpack.c.b16 %v527, %v526
      %544 = vmatprep.subr.bf16.mxu0 0
      %545 = vmatpush1.bf16.msra.mxu0 %v528
      %546 = vmatprep.subr.bf16.mxu0 0
      %547 = vmatpush1.bf16.msra.mxu0 %v529
      %548 = vmatprep.subr.bf16.mxu0 0
      %549 = vmatpush1.bf16.msra.mxu0 %v530
      %550 = vmatprep.subr.bf16.mxu0 0
      %551 = vmatpush1.bf16.msra.mxu0 %v531
      %552 = vmatprep.subr.bf16.mxu0 0
      %553 = vmatpush1.bf16.msra.mxu0 %v532
      %554 = vmatprep.subr.bf16.mxu0 0
      %555 = vmatpush1.bf16.msra.mxu0 %v533
      %556 = vmatprep.subr.bf16.mxu0 0
      %557 = vmatpush1.bf16.msra.mxu0 %v534
      %558 = vmatprep.subr.bf16.mxu0 0
      %559 = vmatpush1.bf16.msra.mxu0 %v535
      %560 = vmatprep.subr.bf16.mxu0 0
      %561 = vmatpush1.bf16.msra.mxu0 0
      %562 = vmatprep.subr.bf16.mxu0 0
      %563 = vmatpush1.bf16.msra.mxu0 0
      %564 = vmatprep.subr.bf16.mxu0 0
      %565 = vmatpush1.bf16.msra.mxu0 0
      %566 = vmatprep.subr.bf16.mxu0 0
      %567 = vmatpush1.bf16.msra.mxu0 0
      %568 = vmatprep.subr.bf16.mxu0 0
      %569 = vmatpush1.bf16.msra.mxu0 0
      %570 = vmatprep.subr.bf16.mxu0 0
      %571 = vmatpush1.bf16.msra.mxu0 0
      %572 = vmatprep.subr.bf16.mxu0 0
      %573 = vmatpush1.bf16.msra.mxu0 0
      %574 = vmatprep.subr.bf16.mxu0 0
      %575 = vmatpush1.bf16.msra.mxu0 0
      %576 = vmatprep.mubr.bf16.mxu0 0
      %577 = vmatmul.mubr.bf16.gmra.mrb[0].mxu0 %v464
      %v578 = vpop.f32.mrb[0].mxu0
      %v579 = vadd.f32 0.0, %v578
      %v580 = vpop.f32.mrb[0].mxu0
      %v581 = vpop.f32.mrb[0].mxu0
      %v582 = vadd.f32 0.0, %v581
      %v583 = vpop.f32.mrb[0].mxu0
      %584 = vmatprep.mubr.bf16.mxu0 0
      %585 = vmatmul.mubr.bf16.gmra.mrb[0].mxu0 %v465
      %v586 = vpop.f32.mrb[0].mxu0
      %v587 = vadd.f32 0.0, %v586
      %v588 = vpop.f32.mrb[0].mxu0
      %v589 = vpop.f32.mrb[0].mxu0
      %v590 = vadd.f32 0.0, %v589
      %v591 = vpop.f32.mrb[0].mxu0
      %592 = vmatprep.mubr.bf16.mxu0 0
      %593 = vmatmul.mubr.bf16.gmra.mrb[0].mxu0 %v466
      %v594 = vpop.f32.mrb[0].mxu0
      %v595 = vadd.f32 0.0, %v594
      %v596 = vpop.f32.mrb[0].mxu0
      %v597 = vpop.f32.mrb[0].mxu0
      %v598 = vadd.f32 0.0, %v597
      %v599 = vpop.f32.mrb[0].mxu0
      %600 = vmatprep.mubr.bf16.mxu0 0
      %601 = vmatmul.mubr.bf16.gmra.mrb[0].mxu0 %v467
      %v602 = vpop.f32.mrb[0].mxu0
      %v603 = vadd.f32 0.0, %v602
      %v604 = vpop.f32.mrb[0].mxu0
      %v605 = vpop.f32.mrb[0].mxu0
      %v606 = vadd.f32 0.0, %v605
      %v607 = vpop.f32.mrb[0].mxu0
      %608 = vmatprep.mubr.bf16.mxu0 0
      %609 = vmatmul.mubr.bf16.gmra.mrb[0].mxu0 %v468
      %v610 = vpop.f32.mrb[0].mxu0
      %v611 = vadd.f32 0.0, %v610
      %v612 = vpop.f32.mrb[0].mxu0
      %v613 = vpop.f32.mrb[0].mxu0
      %v614 = vadd.f32 0.0, %v613
      %v615 = vpop.f32.mrb[0].mxu0
      %616 = vmatprep.mubr.bf16.mxu0 0
      %617 = vmatmul.mubr.bf16.gmra.mrb[0].mxu0 %v469
      %v618 = vpop.f32.mrb[0].mxu0
      %v619 = vadd.f32 0.0, %v618
      %v620 = vpop.f32.mrb[0].mxu0
      %v621 = vpop.f32.mrb[0].mxu0
      %v622 = vadd.f32 0.0, %v621
      %v623 = vpop.f32.mrb[0].mxu0
      %624 = vmatprep.mubr.bf16.mxu0 0
      %625 = vmatmul.mubr.bf16.gmra.mrb[0].mxu0 %v470
      %v626 = vpop.f32.mrb[0].mxu0
      %v627 = vadd.f32 0.0, %v626
      %v628 = vpop.f32.mrb[0].mxu0
      %v629 = vpop.f32.mrb[0].mxu0
      %v630 = vadd.f32 0.0, %v629
      %v631 = vpop.f32.mrb[0].mxu0
      %632 = vmatprep.mubr.bf16.mxu0 0
      %633 = vmatmul.mubr.bf16.gmra.mrb[0].mxu0 %v471
      %v634 = vpop.f32.mrb[0].mxu0
      %v635 = vadd.f32 0.0, %v634
      %v636 = vpop.f32.mrb[0].mxu0
      %v637 = vpop.f32.mrb[0].mxu0
      %v638 = vadd.f32 0.0, %v637
      %v639 = vpop.f32.mrb[0].mxu0
      %640 = vmatprep.mubr.bf16.mxu0 0
      %641 = vmatmul.mubr.bf16.gmra.mrb[0].mxu0 %v472
      %v642 = vpop.f32.mrb[0].mxu0
      %v643 = vadd.f32 0.0, %v642
      %v644 = vpop.f32.mrb[0].mxu0
      %v645 = vpop.f32.mrb[0].mxu0
      %v646 = vadd.f32 0.0, %v645
      %v647 = vpop.f32.mrb[0].mxu0
      %648 = vmatprep.mubr.bf16.mxu0 0
      %649 = vmatmul.mubr.bf16.gmra.mrb[0].mxu0 %v473
      %v650 = vpop.f32.mrb[0].mxu0
      %v651 = vadd.f32 0.0, %v650
      %v652 = vpop.f32.mrb[0].mxu0
      %v653 = vpop.f32.mrb[0].mxu0
      %v654 = vadd.f32 0.0, %v653
      %v655 = vpop.f32.mrb[0].mxu0
      %656 = vmatprep.mubr.bf16.mxu0 0
      %657 = vmatmul.mubr.bf16.gmra.mrb[0].mxu0 %v474
      %v658 = vpop.f32.mrb[0].mxu0
      %v659 = vadd.f32 0.0, %v658
      %v660 = vpop.f32.mrb[0].mxu0
      %v661 = vpop.f32.mrb[0].mxu0
      %v662 = vadd.f32 0.0, %v661
      %v663 = vpop.f32.mrb[0].mxu0
      %664 = vmatprep.mubr.bf16.mxu0 0
      %665 = vmatmul.mubr.bf16.gmra.mrb[0].mxu0 %v475
      %v666 = vpop.f32.mrb[0].mxu0
      %v667 = vadd.f32 0.0, %v666
      %v668 = vpop.f32.mrb[0].mxu0
      %v669 = vpop.f32.mrb[0].mxu0
      %v670 = vadd.f32 0.0, %v669
      %v671 = vpop.f32.mrb[0].mxu0
      %672 = vmatprep.mubr.bf16.mxu0 0
      %673 = vmatmul.mubr.bf16.gmra.mrb[0].mxu0 %v476
      %v674 = vpop.f32.mrb[0].mxu0
      %v675 = vadd.f32 0.0, %v674
      %v676 = vpop.f32.mrb[0].mxu0
      %v677 = vpop.f32.mrb[0].mxu0
      %v678 = vadd.f32 0.0, %v677
      %v679 = vpop.f32.mrb[0].mxu0
      %680 = vmatprep.mubr.bf16.mxu0 0
      %681 = vmatmul.mubr.bf16.gmra.mrb[0].mxu0 %v477
      %v682 = vpop.f32.mrb[0].mxu0
      %v683 = vadd.f32 0.0, %v682
      %v684 = vpop.f32.mrb[0].mxu0
      %v685 = vpop.f32.mrb[0].mxu0
      %v686 = vadd.f32 0.0, %v685
      %v687 = vpop.f32.mrb[0].mxu0
      %688 = vmatprep.mubr.bf16.mxu0 0
      %689 = vmatmul.mubr.bf16.gmra.mrb[0].mxu0 %v478
      %v690 = vpop.f32.mrb[0].mxu0
      %v691 = vadd.f32 0.0, %v690
      %v692 = vpop.f32.mrb[0].mxu0
      %v693 = vpop.f32.mrb[0].mxu0
      %v694 = vadd.f32 0.0, %v693
      %v695 = vpop.f32.mrb[0].mxu0
      %696 = vmatprep.mubr.bf16.mxu0 0
      %697 = vmatmul.mubr.bf16.gmra.mrb[0].mxu0 %v479
      %v698 = vpop.f32.mrb[0].mxu0
      %v699 = vadd.f32 0.0, %v698
      %v700 = vpop.f32.mrb[0].mxu0
      %v701 = vpop.f32.mrb[0].mxu0
      %v702 = vadd.f32 0.0, %v701
      %v703 = vpop.f32.mrb[0].mxu0
      %704 = vdwg.mxu0
      %v705 = vadd.f32 %v352, %v579
      %v706 = vadd.f32 %v353, %v582
      %v707 = vadd.f32 %v354, %v587
      %v708 = vadd.f32 %v355, %v590
      %v709 = vadd.f32 %v356, %v595
      %v710 = vadd.f32 %v357, %v598
      %v711 = vadd.f32 %v358, %v603
      %v712 = vadd.f32 %v359, %v606
      %v713 = vadd.f32 %v360, %v611
      %v714 = vadd.f32 %v361, %v614
      %v715 = vadd.f32 %v362, %v619
      %v716 = vadd.f32 %v363, %v622
      %v717 = vadd.f32 %v364, %v627
      %v718 = vadd.f32 %v365, %v630
      %v719 = vadd.f32 %v366, %v635
      %v720 = vadd.f32 %v367, %v638
      %v721 = vadd.f32 %v368, %v643
      %v722 = vadd.f32 %v369, %v646
      %v723 = vadd.f32 %v370, %v651
      %v724 = vadd.f32 %v371, %v654
      %v725 = vadd.f32 %v372, %v659
      %v726 = vadd.f32 %v373, %v662
      %v727 = vadd.f32 %v374, %v667
      %v728 = vadd.f32 %v375, %v670
      %v729 = vadd.f32 %v376, %v675
      %v730 = vadd.f32 %v377, %v678
      %v731 = vadd.f32 %v378, %v683
      %v732 = vadd.f32 %v379, %v686
      %v733 = vadd.f32 %v380, %v691
      %v734 = vadd.f32 %v381, %v694
      %v735 = vadd.f32 %v382, %v699
      %v736 = vadd.f32 %v383, %v702
      %737 = vst [vmem:[#allocation2] sm:$0xff] %v705
      %738 = vst [vmem:[#allocation2 + $0x8] sm:$0xff] %v706
      %739 = vst [vmem:[#allocation2 + $0x10] sm:$0xff] %v707
      %740 = vst [vmem:[#allocation2 + $0x18] sm:$0xff] %v708
      %741 = vst [vmem:[#allocation2 + $0x20] sm:$0xff] %v709
      %742 = vst [vmem:[#allocation2 + $0x28] sm:$0xff] %v710
      %743 = vst [vmem:[#allocation2 + $0x30] sm:$0xff] %v711
      %744 = vst [vmem:[#allocation2 + $0x38] sm:$0xff] %v712
      %745 = vst [vmem:[#allocation2 + $0x40] sm:$0xff] %v713
      %746 = vst [vmem:[#allocation2 + $0x48] sm:$0xff] %v714
      %747 = vst [vmem:[#allocation2 + $0x50] sm:$0xff] %v715
      %748 = vst [vmem:[#allocation2 + $0x58] sm:$0xff] %v716
      %749 = vst [vmem:[#allocation2 + $0x60] sm:$0xff] %v717
      %750 = vst [vmem:[#allocation2 + $0x68] sm:$0xff] %v718
      %751 = vst [vmem:[#allocation2 + $0x70] sm:$0xff] %v719
      %752 = vst [vmem:[#allocation2 + $0x78] sm:$0xff] %v720
      %753 = vst [vmem:[#allocation2 + $0x80] sm:$0xff] %v721
      %754 = vst [vmem:[#allocation2 + $0x88] sm:$0xff] %v722
      %755 = vst [vmem:[#allocation2 + $0x90] sm:$0xff] %v723
      %756 = vst [vmem:[#allocation2 + $0x98] sm:$0xff] %v724
      %757 = vst [vmem:[#allocation2 + $0xa0] sm:$0xff] %v725
      %758 = vst [vmem:[#allocation2 + $0xa8] sm:$0xff] %v726
      %759 = vst [vmem:[#allocation2 + $0xb0] sm:$0xff] %v727
      %760 = vst [vmem:[#allocation2 + $0xb8] sm:$0xff] %v728
      %761 = vst [vmem:[#allocation2 + $0xc0] sm:$0xff] %v729
      %762 = vst [vmem:[#allocation2 + $0xc8] sm:$0xff] %v730
      %763 = vst [vmem:[#allocation2 + $0xd0] sm:$0xff] %v731
      %764 = vst [vmem:[#allocation2 + $0xd8] sm:$0xff] %v732
      %765 = vst [vmem:[#allocation2 + $0xe0] sm:$0xff] %v733
      %766 = vst [vmem:[#allocation2 + $0xe8] sm:$0xff] %v734
      %767 = vst [vmem:[#allocation2 + $0xf0] sm:$0xff] %v735
      %768 = vst [vmem:[#allocation2 + $0xf8] sm:$0xff] %v736
      %v769 = vld [vmem:[%s319] sm:$0xf]
      %v770 = vld [vmem:[%s319 + $0x4] sm:$0xf]
      %v771 = vld [vmem:[%s319 + $0x8] sm:$0xf]
      %v772 = vld [vmem:[%s319 + $0xc] sm:$0xf]
      %v773 = vld [vmem:[%s319 + $0x10] sm:$0x1]
      %v774 = vld [vmem:[%s319 + $0x14] sm:$0xf]
      %v775 = vld [vmem:[%s319 + $0x18] sm:$0xf]
      %v776 = vld [vmem:[%s319 + $0x1c] sm:$0xf]
      %v777 = vld [vmem:[%s319 + $0x20] sm:$0xf]
      %v778 = vld [vmem:[%s319 + $0x24] sm:$0x1]
      %v779 = vld [vmem:[%s319 + $0x28] sm:$0xf]
      %v780 = vld [vmem:[%s319 + $0x2c] sm:$0xf]
      %v781 = vld [vmem:[%s319 + $0x30] sm:$0xf]
      %v782 = vld [vmem:[%s319 + $0x34] sm:$0xf]
      %v783 = vld [vmem:[%s319 + $0x38] sm:$0x1]
      %v784 = vld [vmem:[%s319 + $0x3c] sm:$0xf]
      %v785 = vld [vmem:[%s319 + $0x40] sm:$0xf]
      %v786 = vld [vmem:[%s319 + $0x44] sm:$0xf]
      %v787 = vld [vmem:[%s319 + $0x48] sm:$0xf]
      %v788 = vld [vmem:[%s319 + $0x4c] sm:$0x1]
      %v789 = vld [vmem:[%s319 + $0x50] sm:$0xf]
      %v790 = vld [vmem:[%s319 + $0x54] sm:$0xf]
      %v791 = vld [vmem:[%s319 + $0x58] sm:$0xf]
      %v792 = vld [vmem:[%s319 + $0x5c] sm:$0xf]
      %v793 = vld [vmem:[%s319 + $0x60] sm:$0x1]
      %v794 = vld [vmem:[%s319 + $0x64] sm:$0xf]
      %v795 = vld [vmem:[%s319 + $0x68] sm:$0xf]
      %v796 = vld [vmem:[%s319 + $0x6c] sm:$0xf]
      %v797 = vld [vmem:[%s319 + $0x70] sm:$0xf]
      %v798 = vld [vmem:[%s319 + $0x74] sm:$0x1]
      %v799 = vld [vmem:[%s319 + $0x78] sm:$0xf]
      %v800 = vld [vmem:[%s319 + $0x7c] sm:$0xf]
      %v801 = vld [vmem:[%s319 + $0x80] sm:$0xf]
      %v802 = vld [vmem:[%s319 + $0x84] sm:$0xf]
      %v803 = vld [vmem:[%s319 + $0x88] sm:$0x1]
      %v804 = vld [vmem:[%s319 + $0x8c] sm:$0xf]
      %v805 = vld [vmem:[%s319 + $0x90] sm:$0xf]
      %v806 = vld [vmem:[%s319 + $0x94] sm:$0xf]
      %v807 = vld [vmem:[%s319 + $0x98] sm:$0xf]
      %v808 = vld [vmem:[%s319 + $0x9c] sm:$0x1]
      %v809 = vld [vmem:[#allocation2] sm:$0xff]
      %v810 = vld [vmem:[#allocation2 + $0x8] sm:$0xff]
      %v811 = vld [vmem:[#allocation2 + $0x10] sm:$0xff]
      %v812 = vld [vmem:[#allocation2 + $0x18] sm:$0xff]
      %v813 = vld [vmem:[#allocation2 + $0x20] sm:$0xff]
      %v814 = vld [vmem:[#allocation2 + $0x28] sm:$0xff]
      %v815 = vld [vmem:[#allocation2 + $0x30] sm:$0xff]
      %v816 = vld [vmem:[#allocation2 + $0x38] sm:$0xff]
      %v817 = vld [vmem:[#allocation2 + $0x40] sm:$0xff]
      %v818 = vld [vmem:[#allocation2 + $0x48] sm:$0xff]
      %v819 = vld [vmem:[#allocation2 + $0x50] sm:$0xff]
      %v820 = vld [vmem:[#allocation2 + $0x58] sm:$0xff]
      %v821 = vld [vmem:[#allocation2 + $0x60] sm:$0xff]
      %v822 = vld [vmem:[#allocation2 + $0x68] sm:$0xff]
      %v823 = vld [vmem:[#allocation2 + $0x70] sm:$0xff]
      %v824 = vld [vmem:[#allocation2 + $0x78] sm:$0xff]
      %v825 = vld [vmem:[#allocation2 + $0x80] sm:$0xff]
      %v826 = vld [vmem:[#allocation2 + $0x88] sm:$0xff]
      %v827 = vld [vmem:[#allocation2 + $0x90] sm:$0xff]
      %v828 = vld [vmem:[#allocation2 + $0x98] sm:$0xff]
      %v829 = vld [vmem:[#allocation2 + $0xa0] sm:$0xff]
      %v830 = vld [vmem:[#allocation2 + $0xa8] sm:$0xff]
      %v831 = vld [vmem:[#allocation2 + $0xb0] sm:$0xff]
      %v832 = vld [vmem:[#allocation2 + $0xb8] sm:$0xff]
      %v833 = vld [vmem:[#allocation2 + $0xc0] sm:$0xff]
      %v834 = vld [vmem:[#allocation2 + $0xc8] sm:$0xff]
      %v835 = vld [vmem:[#allocation2 + $0xd0] sm:$0xff]
      %v836 = vld [vmem:[#allocation2 + $0xd8] sm:$0xff]
      %v837 = vld [vmem:[#allocation2 + $0xe0] sm:$0xff]
      %v838 = vld [vmem:[#allocation2 + $0xe8] sm:$0xff]
      %v839 = vld [vmem:[#allocation2 + $0xf0] sm:$0xff]
      %v840 = vld [vmem:[#allocation2 + $0xf8] sm:$0xff]
      %vm841 = vsmask.f32 3328
      %vm842 = vsmask.f32 7440
      %vm843 = vmor %vm841, %vm842
      %v845 = vshrl.u32 %v769, 16
      %v847 = vrot.slane %v845, 4
      %v848 = vshll.u32 %v769, 16
      %v850 = vrot.slane %v848, 5
      %v851 = vor.u32 %v847, %v850
      %v852 = vrot.slane %v851, 4
      %v854 = vshll.u32 %v770, 16
      %v856 = vrot.slane %v854, 5
      %v857 = vsel %vm843, %v852, %v856
      %v858 = vshrl.u32 %v770, 16
      %v860 = vrot.slane %v858, 4
      %v861 = vor.u32 %v860, %v856
      %v862 = vrot.slane %v861, 4
      %v864 = vshll.u32 %v771, 16
      %v866 = vrot.slane %v864, 5
      %v867 = vsel %vm843, %v862, %v866
      %v868 = vshrl.u32 %v771, 16
      %v870 = vrot.slane %v868, 4
      %v871 = vor.u32 %v870, %v866
      %v872 = vrot.slane %v871, 4
      %v874 = vshll.u32 %v772, 16
      %v876 = vrot.slane %v874, 5
      %v877 = vsel %vm843, %v872, %v876
      %v878 = vshrl.u32 %v772, 16
      %v880 = vrot.slane %v878, 4
      %v881 = vor.u32 %v880, %v876
      %v882 = vrot.slane %v881, 4
      %v884 = vshll.u32 %v773, 16
      %v886 = vrot.slane %v884, 5
      %v887 = vsel %vm843, %v882, %v886
      %v889 = vshrl.u32 %v774, 16
      %v891 = vrot.slane %v889, 4
      %v892 = vshll.u32 %v774, 16
      %v894 = vrot.slane %v892, 5
      %v895 = vor.u32 %v891, %v894
      %v896 = vrot.slane %v895, 4
      %v898 = vshll.u32 %v775, 16
      %v900 = vrot.slane %v898, 5
      %v901 = vsel %vm843, %v896, %v900
      %v902 = vshrl.u32 %v775, 16
      %v904 = vrot.slane %v902, 4
      %v905 = vor.u32 %v904, %v900
      %v906 = vrot.slane %v905, 4
      %v908 = vshll.u32 %v776, 16
      %v910 = vrot.slane %v908, 5
      %v911 = vsel %vm843, %v906, %v910
      %v912 = vshrl.u32 %v776, 16
      %v914 = vrot.slane %v912, 4
      %v915 = vor.u32 %v914, %v910
      %v916 = vrot.slane %v915, 4
      %v918 = vshll.u32 %v777, 16
      %v920 = vrot.slane %v918, 5
      %v921 = vsel %vm843, %v916, %v920
      %v922 = vshrl.u32 %v777, 16
      %v924 = vrot.slane %v922, 4
      %v925 = vor.u32 %v924, %v920
      %v926 = vrot.slane %v925, 4
      %v928 = vshll.u32 %v778, 16
      %v930 = vrot.slane %v928, 5
      %v931 = vsel %vm843, %v926, %v930
      %v933 = vshrl.u32 %v779, 16
      %v935 = vrot.slane %v933, 4
      %v936 = vshll.u32 %v779, 16
      %v938 = vrot.slane %v936, 5
      %v939 = vor.u32 %v935, %v938
      %v940 = vrot.slane %v939, 4
      %v942 = vshll.u32 %v780, 16
      %v944 = vrot.slane %v942, 5
      %v945 = vsel %vm843, %v940, %v944
      %v946 = vshrl.u32 %v780, 16
      %v948 = vrot.slane %v946, 4
      %v949 = vor.u32 %v948, %v944
      %v950 = vrot.slane %v949, 4
      %v952 = vshll.u32 %v781, 16
      %v954 = vrot.slane %v952, 5
      %v955 = vsel %vm843, %v950, %v954
      %v956 = vshrl.u32 %v781, 16
      %v958 = vrot.slane %v956, 4
      %v959 = vor.u32 %v958, %v954
      %v960 = vrot.slane %v959, 4
      %v962 = vshll.u32 %v782, 16
      %v964 = vrot.slane %v962, 5
      %v965 = vsel %vm843, %v960, %v964
      %v966 = vshrl.u32 %v782, 16
      %v968 = vrot.slane %v966, 4
      %v969 = vor.u32 %v968, %v964
      %v970 = vrot.slane %v969, 4
      %v972 = vshll.u32 %v783, 16
      %v974 = vrot.slane %v972, 5
      %v975 = vsel %vm843, %v970, %v974
      %v977 = vshrl.u32 %v784, 16
      %v979 = vrot.slane %v977, 4
      %v980 = vshll.u32 %v784, 16
      %v982 = vrot.slane %v980, 5
      %v983 = vor.u32 %v979, %v982
      %v984 = vrot.slane %v983, 4
      %v986 = vshll.u32 %v785, 16
      %v988 = vrot.slane %v986, 5
      %v989 = vsel %vm843, %v984, %v988
      %v990 = vshrl.u32 %v785, 16
      %v992 = vrot.slane %v990, 4
      %v993 = vor.u32 %v992, %v988
      %v994 = vrot.slane %v993, 4
      %v996 = vshll.u32 %v786, 16
      %v998 = vrot.slane %v996, 5
      %v999 = vsel %vm843, %v994, %v998
      %v1000 = vshrl.u32 %v786, 16
      %v1002 = vrot.slane %v1000, 4
      %v1003 = vor.u32 %v1002, %v998
      %v1004 = vrot.slane %v1003, 4
      %v1006 = vshll.u32 %v787, 16
      %v1008 = vrot.slane %v1006, 5
      %v1009 = vsel %vm843, %v1004, %v1008
      %v1010 = vshrl.u32 %v787, 16
      %v1012 = vrot.slane %v1010, 4
      %v1013 = vor.u32 %v1012, %v1008
      %v1014 = vrot.slane %v1013, 4
      %v1016 = vshll.u32 %v788, 16
      %v1018 = vrot.slane %v1016, 5
      %v1019 = vsel %vm843, %v1014, %v1018
      %v1021 = vshrl.u32 %v789, 16
      %v1023 = vrot.slane %v1021, 4
      %v1024 = vshll.u32 %v789, 16
      %v1026 = vrot.slane %v1024, 5
      %v1027 = vor.u32 %v1023, %v1026
      %v1028 = vrot.slane %v1027, 4
      %v1030 = vshll.u32 %v790, 16
      %v1032 = vrot.slane %v1030, 5
      %v1033 = vsel %vm843, %v1028, %v1032
      %v1034 = vshrl.u32 %v790, 16
      %v1036 = vrot.slane %v1034, 4
      %v1037 = vor.u32 %v1036, %v1032
      %v1038 = vrot.slane %v1037, 4
      %v1040 = vshll.u32 %v791, 16
      %v1042 = vrot.slane %v1040, 5
      %v1043 = vsel %vm843, %v1038, %v1042
      %v1044 = vshrl.u32 %v791, 16
      %v1046 = vrot.slane %v1044, 4
      %v1047 = vor.u32 %v1046, %v1042
      %v1048 = vrot.slane %v1047, 4
      %v1050 = vshll.u32 %v792, 16
      %v1052 = vrot.slane %v1050, 5
      %v1053 = vsel %vm843, %v1048, %v1052
      %v1054 = vshrl.u32 %v792, 16
      %v1056 = vrot.slane %v1054, 4
      %v1057 = vor.u32 %v1056, %v1052
      %v1058 = vrot.slane %v1057, 4
      %v1060 = vshll.u32 %v793, 16
      %v1062 = vrot.slane %v1060, 5
      %v1063 = vsel %vm843, %v1058, %v1062
      %v1065 = vshrl.u32 %v794, 16
      %v1067 = vrot.slane %v1065, 4
      %v1068 = vshll.u32 %v794, 16
      %v1070 = vrot.slane %v1068, 5
      %v1071 = vor.u32 %v1067, %v1070
      %v1072 = vrot.slane %v1071, 4
      %v1074 = vshll.u32 %v795, 16
      %v1076 = vrot.slane %v1074, 5
      %v1077 = vsel %vm843, %v1072, %v1076
      %v1078 = vshrl.u32 %v795, 16
      %v1080 = vrot.slane %v1078, 4
      %v1081 = vor.u32 %v1080, %v1076
      %v1082 = vrot.slane %v1081, 4
      %v1084 = vshll.u32 %v796, 16
      %v1086 = vrot.slane %v1084, 5
      %v1087 = vsel %vm843, %v1082, %v1086
      %v1088 = vshrl.u32 %v796, 16
      %v1090 = vrot.slane %v1088, 4
      %v1091 = vor.u32 %v1090, %v1086
      %v1092 = vrot.slane %v1091, 4
      %v1094 = vshll.u32 %v797, 16
      %v1096 = vrot.slane %v1094, 5
      %v1097 = vsel %vm843, %v1092, %v1096
      %v1098 = vshrl.u32 %v797, 16
      %v1100 = vrot.slane %v1098, 4
      %v1101 = vor.u32 %v1100, %v1096
      %v1102 = vrot.slane %v1101, 4
      %v1104 = vshll.u32 %v798, 16
      %v1106 = vrot.slane %v1104, 5
      %v1107 = vsel %vm843, %v1102, %v1106
      %v1109 = vshrl.u32 %v799, 16
      %v1111 = vrot.slane %v1109, 4
      %v1112 = vshll.u32 %v799, 16
      %v1114 = vrot.slane %v1112, 5
      %v1115 = vor.u32 %v1111, %v1114
      %v1116 = vrot.slane %v1115, 4
      %v1118 = vshll.u32 %v800, 16
      %v1120 = vrot.slane %v1118, 5
      %v1121 = vsel %vm843, %v1116, %v1120
      %v1122 = vshrl.u32 %v800, 16
      %v1124 = vrot.slane %v1122, 4
      %v1125 = vor.u32 %v1124, %v1120
      %v1126 = vrot.slane %v1125, 4
      %v1128 = vshll.u32 %v801, 16
      %v1130 = vrot.slane %v1128, 5
      %v1131 = vsel %vm843, %v1126, %v1130
      %v1132 = vshrl.u32 %v801, 16
      %v1134 = vrot.slane %v1132, 4
      %v1135 = vor.u32 %v1134, %v1130
      %v1136 = vrot.slane %v1135, 4
      %v1138 = vshll.u32 %v802, 16
      %v1140 = vrot.slane %v1138, 5
      %v1141 = vsel %vm843, %v1136, %v1140
      %v1142 = vshrl.u32 %v802, 16
      %v1144 = vrot.slane %v1142, 4
      %v1145 = vor.u32 %v1144, %v1140
      %v1146 = vrot.slane %v1145, 4
      %v1148 = vshll.u32 %v803, 16
      %v1150 = vrot.slane %v1148, 5
      %v1151 = vsel %vm843, %v1146, %v1150
      %v1153 = vshrl.u32 %v804, 16
      %v1155 = vrot.slane %v1153, 4
      %v1156 = vshll.u32 %v804, 16
      %v1158 = vrot.slane %v1156, 5
      %v1159 = vor.u32 %v1155, %v1158
      %v1160 = vrot.slane %v1159, 4
      %v1162 = vshll.u32 %v805, 16
      %v1164 = vrot.slane %v1162, 5
      %v1165 = vsel %vm843, %v1160, %v1164
      %v1166 = vshrl.u32 %v805, 16
      %v1168 = vrot.slane %v1166, 4
      %v1169 = vor.u32 %v1168, %v1164
      %v1170 = vrot.slane %v1169, 4
      %v1172 = vshll.u32 %v806, 16
      %v1174 = vrot.slane %v1172, 5
      %v1175 = vsel %vm843, %v1170, %v1174
      %v1176 = vshrl.u32 %v806, 16
      %v1178 = vrot.slane %v1176, 4
      %v1179 = vor.u32 %v1178, %v1174
      %v1180 = vrot.slane %v1179, 4
      %v1182 = vshll.u32 %v807, 16
      %v1184 = vrot.slane %v1182, 5
      %v1185 = vsel %vm843, %v1180, %v1184
      %v1186 = vshrl.u32 %v807, 16
      %v1188 = vrot.slane %v1186, 4
      %v1189 = vor.u32 %v1188, %v1184
      %v1190 = vrot.slane %v1189, 4
      %v1192 = vshll.u32 %v808, 16
      %v1194 = vrot.slane %v1192, 5
      %v1195 = vsel %vm843, %v1190, %v1194
      %s1196 = scalar_lea.vmem %s262, 64
      %v1197 = vld [vmem:[%s1196] sm:$0xf]
      %v1198 = vld [vmem:[%s1196 + $0x4] sm:$0xf]
      %v1199 = vld [vmem:[%s1196 + $0x8] sm:$0xf]
      %v1200 = vld [vmem:[%s1196 + $0xc] sm:$0xf]
      %v1201 = vld [vmem:[%s1196 + $0x10] sm:$0xf]
      %v1202 = vld [vmem:[%s1196 + $0x14] sm:$0xf]
      %v1203 = vld [vmem:[%s1196 + $0x18] sm:$0xf]
      %v1204 = vld [vmem:[%s1196 + $0x1c] sm:$0xf]
      %v1205 = vld [vmem:[%s1196 + $0x20] sm:$0xf]
      %v1206 = vld [vmem:[%s1196 + $0x24] sm:$0xf]
      %v1207 = vld [vmem:[%s1196 + $0x28] sm:$0xf]
      %v1208 = vld [vmem:[%s1196 + $0x2c] sm:$0xf]
      %v1209 = vld [vmem:[%s1196 + $0x30] sm:$0xf]
      %v1210 = vld [vmem:[%s1196 + $0x34] sm:$0xf]
      %v1211 = vld [vmem:[%s1196 + $0x38] sm:$0xf]
      %v1212 = vld [vmem:[%s1196 + $0x3c] sm:$0xf]
      %v1213 = vunpack.c.l.b16 %v857
      %v1214 = vunpack.c.l.b16 %v867
      %v1215 = vunpack.c.l.b16 %v877
      %v1216 = vunpack.c.l.b16 %v887
      %v1217 = vunpack.c.l.b16 %v901
      %v1218 = vunpack.c.l.b16 %v911
      %v1219 = vunpack.c.l.b16 %v921
      %v1220 = vunpack.c.l.b16 %v931
      %v1221 = vunpack.c.l.b16 %v945
      %v1222 = vunpack.c.l.b16 %v955
      %v1223 = vunpack.c.l.b16 %v965
      %v1224 = vunpack.c.l.b16 %v975
      %v1225 = vunpack.c.l.b16 %v989
      %v1226 = vunpack.c.l.b16 %v999
      %v1227 = vunpack.c.l.b16 %v1009
      %v1228 = vunpack.c.l.b16 %v1019
      %v1229 = vunpack.c.l.b16 %v1033
      %v1230 = vunpack.c.l.b16 %v1043
      %v1231 = vunpack.c.l.b16 %v1053
      %v1232 = vunpack.c.l.b16 %v1063
      %v1233 = vunpack.c.l.b16 %v1077
      %v1234 = vunpack.c.l.b16 %v1087
      %v1235 = vunpack.c.l.b16 %v1097
      %v1236 = vunpack.c.l.b16 %v1107
      %v1237 = vunpack.c.l.b16 %v1121
      %v1238 = vunpack.c.l.b16 %v1131
      %v1239 = vunpack.c.l.b16 %v1141
      %v1240 = vunpack.c.l.b16 %v1151
      %v1241 = vunpack.c.l.b16 %v1165
      %v1242 = vunpack.c.l.b16 %v1175
      %v1243 = vunpack.c.l.b16 %v1185
      %v1244 = vunpack.c.l.b16 %v1195
      %v1245 = vpack.c.b16 %v1214, %v1213
      %v1246 = vpack.c.b16 %v1216, %v1215
      %v1247 = vpack.c.b16 %v1218, %v1217
      %v1248 = vpack.c.b16 %v1220, %v1219
      %v1249 = vpack.c.b16 %v1222, %v1221
      %v1250 = vpack.c.b16 %v1224, %v1223
      %v1251 = vpack.c.b16 %v1226, %v1225
      %v1252 = vpack.c.b16 %v1228, %v1227
      %v1253 = vpack.c.b16 %v1230, %v1229
      %v1254 = vpack.c.b16 %v1232, %v1231
      %v1255 = vpack.c.b16 %v1234, %v1233
      %v1256 = vpack.c.b16 %v1236, %v1235
      %v1257 = vpack.c.b16 %v1238, %v1237
      %v1258 = vpack.c.b16 %v1240, %v1239
      %v1259 = vpack.c.b16 %v1242, %v1241
      %v1260 = vpack.c.b16 %v1244, %v1243
      %v1293 = vunpack.c.l.b16 %v1197
      %v1294 = vunpack.c.l.b16 %v1198
      %v1295 = vunpack.c.l.b16 %v1199
      %v1296 = vunpack.c.l.b16 %v1200
      %v1297 = vunpack.c.l.b16 %v1201
      %v1298 = vunpack.c.l.b16 %v1202
      %v1299 = vunpack.c.l.b16 %v1203
      %v1300 = vunpack.c.l.b16 %v1204
      %v1301 = vunpack.c.l.b16 %v1205
      %v1302 = vunpack.c.l.b16 %v1206
      %v1303 = vunpack.c.l.b16 %v1207
      %v1304 = vunpack.c.l.b16 %v1208
      %v1305 = vunpack.c.l.b16 %v1209
      %v1306 = vunpack.c.l.b16 %v1210
      %v1307 = vunpack.c.l.b16 %v1211
      %v1308 = vunpack.c.l.b16 %v1212
      %v1309 = vpack.c.b16 %v1294, %v1293
      %v1310 = vpack.c.b16 %v1296, %v1295
      %v1311 = vpack.c.b16 %v1298, %v1297
      %v1312 = vpack.c.b16 %v1300, %v1299
      %v1313 = vpack.c.b16 %v1302, %v1301
      %v1314 = vpack.c.b16 %v1304, %v1303
      %v1315 = vpack.c.b16 %v1306, %v1305
      %v1316 = vpack.c.b16 %v1308, %v1307
      %1325 = vmatprep.subr.bf16.mxu0 0
      %1326 = vmatpush1.bf16.msra.mxu0 %v1309
      %1327 = vmatprep.subr.bf16.mxu0 0
      %1328 = vmatpush1.bf16.msra.mxu0 %v1310
      %1329 = vmatprep.subr.bf16.mxu0 0
      %1330 = vmatpush1.bf16.msra.mxu0 %v1311
      %1331 = vmatprep.subr.bf16.mxu0 0
      %1332 = vmatpush1.bf16.msra.mxu0 %v1312
      %1333 = vmatprep.subr.bf16.mxu0 0
      %1334 = vmatpush1.bf16.msra.mxu0 %v1313
      %1335 = vmatprep.subr.bf16.mxu0 0
      %1336 = vmatpush1.bf16.msra.mxu0 %v1314
      %1337 = vmatprep.subr.bf16.mxu0 0
      %1338 = vmatpush1.bf16.msra.mxu0 %v1315
      %1339 = vmatprep.subr.bf16.mxu0 0
      %1340 = vmatpush1.bf16.msra.mxu0 %v1316
      %1341 = vmatprep.subr.bf16.mxu0 0
      %1342 = vmatpush1.bf16.msra.mxu0 0
      %1343 = vmatprep.subr.bf16.mxu0 0
      %1344 = vmatpush1.bf16.msra.mxu0 0
      %1345 = vmatprep.subr.bf16.mxu0 0
      %1346 = vmatpush1.bf16.msra.mxu0 0
      %1347 = vmatprep.subr.bf16.mxu0 0
      %1348 = vmatpush1.bf16.msra.mxu0 0
      %1349 = vmatprep.subr.bf16.mxu0 0
      %1350 = vmatpush1.bf16.msra.mxu0 0
      %1351 = vmatprep.subr.bf16.mxu0 0
      %1352 = vmatpush1.bf16.msra.mxu0 0
      %1353 = vmatprep.subr.bf16.mxu0 0
      %1354 = vmatpush1.bf16.msra.mxu0 0
      %1355 = vmatprep.subr.bf16.mxu0 0
      %1356 = vmatpush1.bf16.msra.mxu0 0
      %1357 = vmatprep.mubr.bf16.mxu0 0
      %1358 = vmatmul.mubr.bf16.gmra.mrb[0].mxu0 %v1245
      %v1359 = vpop.f32.mrb[0].mxu0
      %v1360 = vadd.f32 0.0, %v1359
      %v1361 = vpop.f32.mrb[0].mxu0
      %v1362 = vpop.f32.mrb[0].mxu0
      %v1363 = vadd.f32 0.0, %v1362
      %v1364 = vpop.f32.mrb[0].mxu0
      %1365 = vmatprep.mubr.bf16.mxu0 0
      %1366 = vmatmul.mubr.bf16.gmra.mrb[0].mxu0 %v1246
      %v1367 = vpop.f32.mrb[0].mxu0
      %v1368 = vadd.f32 0.0, %v1367
      %v1369 = vpop.f32.mrb[0].mxu0
      %v1370 = vpop.f32.mrb[0].mxu0
      %v1371 = vadd.f32 0.0, %v1370
      %v1372 = vpop.f32.mrb[0].mxu0
      %1373 = vmatprep.mubr.bf16.mxu0 0
      %1374 = vmatmul.mubr.bf16.gmra.mrb[0].mxu0 %v1247
      %v1375 = vpop.f32.mrb[0].mxu0
      %v1376 = vadd.f32 0.0, %v1375
      %v1377 = vpop.f32.mrb[0].mxu0
      %v1378 = vpop.f32.mrb[0].mxu0
      %v1379 = vadd.f32 0.0, %v1378
      %v1380 = vpop.f32.mrb[0].mxu0
      %1381 = vmatprep.mubr.bf16.mxu0 0
      %1382 = vmatmul.mubr.bf16.gmra.mrb[0].mxu0 %v1248
      %v1383 = vpop.f32.mrb[0].mxu0
      %v1384 = vadd.f32 0.0, %v1383
      %v1385 = vpop.f32.mrb[0].mxu0
      %v1386 = vpop.f32.mrb[0].mxu0
      %v1387 = vadd.f32 0.0, %v1386
      %v1388 = vpop.f32.mrb[0].mxu0
      %1389 = vmatprep.mubr.bf16.mxu0 0
      %1390 = vmatmul.mubr.bf16.gmra.mrb[0].mxu0 %v1249
      %v1391 = vpop.f32.mrb[0].mxu0
      %v1392 = vadd.f32 0.0, %v1391
      %v1393 = vpop.f32.mrb[0].mxu0
      %v1394 = vpop.f32.mrb[0].mxu0
      %v1395 = vadd.f32 0.0, %v1394
      %v1396 = vpop.f32.mrb[0].mxu0
      %1397 = vmatprep.mubr.bf16.mxu0 0
      %1398 = vmatmul.mubr.bf16.gmra.mrb[0].mxu0 %v1250
      %v1399 = vpop.f32.mrb[0].mxu0
      %v1400 = vadd.f32 0.0, %v1399
      %v1401 = vpop.f32.mrb[0].mxu0
      %v1402 = vpop.f32.mrb[0].mxu0
      %v1403 = vadd.f32 0.0, %v1402
      %v1404 = vpop.f32.mrb[0].mxu0
      %1405 = vmatprep.mubr.bf16.mxu0 0
      %1406 = vmatmul.mubr.bf16.gmra.mrb[0].mxu0 %v1251
      %v1407 = vpop.f32.mrb[0].mxu0
      %v1408 = vadd.f32 0.0, %v1407
      %v1409 = vpop.f32.mrb[0].mxu0
      %v1410 = vpop.f32.mrb[0].mxu0
      %v1411 = vadd.f32 0.0, %v1410
      %v1412 = vpop.f32.mrb[0].mxu0
      %1413 = vmatprep.mubr.bf16.mxu0 0
      %1414 = vmatmul.mubr.bf16.gmra.mrb[0].mxu0 %v1252
      %v1415 = vpop.f32.mrb[0].mxu0
      %v1416 = vadd.f32 0.0, %v1415
      %v1417 = vpop.f32.mrb[0].mxu0
      %v1418 = vpop.f32.mrb[0].mxu0
      %v1419 = vadd.f32 0.0, %v1418
      %v1420 = vpop.f32.mrb[0].mxu0
      %1421 = vmatprep.mubr.bf16.mxu0 0
      %1422 = vmatmul.mubr.bf16.gmra.mrb[0].mxu0 %v1253
      %v1423 = vpop.f32.mrb[0].mxu0
      %v1424 = vadd.f32 0.0, %v1423
      %v1425 = vpop.f32.mrb[0].mxu0
      %v1426 = vpop.f32.mrb[0].mxu0
      %v1427 = vadd.f32 0.0, %v1426
      %v1428 = vpop.f32.mrb[0].mxu0
      %1429 = vmatprep.mubr.bf16.mxu0 0
      %1430 = vmatmul.mubr.bf16.gmra.mrb[0].mxu0 %v1254
      %v1431 = vpop.f32.mrb[0].mxu0
      %v1432 = vadd.f32 0.0, %v1431
      %v1433 = vpop.f32.mrb[0].mxu0
      %v1434 = vpop.f32.mrb[0].mxu0
      %v1435 = vadd.f32 0.0, %v1434
      %v1436 = vpop.f32.mrb[0].mxu0
      %1437 = vmatprep.mubr.bf16.mxu0 0
      %1438 = vmatmul.mubr.bf16.gmra.mrb[0].mxu0 %v1255
      %v1439 = vpop.f32.mrb[0].mxu0
      %v1440 = vadd.f32 0.0, %v1439
      %v1441 = vpop.f32.mrb[0].mxu0
      %v1442 = vpop.f32.mrb[0].mxu0
      %v1443 = vadd.f32 0.0, %v1442
      %v1444 = vpop.f32.mrb[0].mxu0
      %1445 = vmatprep.mubr.bf16.mxu0 0
      %1446 = vmatmul.mubr.bf16.gmra.mrb[0].mxu0 %v1256
      %v1447 = vpop.f32.mrb[0].mxu0
      %v1448 = vadd.f32 0.0, %v1447
      %v1449 = vpop.f32.mrb[0].mxu0
      %v1450 = vpop.f32.mrb[0].mxu0
      %v1451 = vadd.f32 0.0, %v1450
      %v1452 = vpop.f32.mrb[0].mxu0
      %1453 = vmatprep.mubr.bf16.mxu0 0
      %1454 = vmatmul.mubr.bf16.gmra.mrb[0].mxu0 %v1257
      %v1455 = vpop.f32.mrb[0].mxu0
      %v1456 = vadd.f32 0.0, %v1455
      %v1457 = vpop.f32.mrb[0].mxu0
      %v1458 = vpop.f32.mrb[0].mxu0
      %v1459 = vadd.f32 0.0, %v1458
      %v1460 = vpop.f32.mrb[0].mxu0
      %1461 = vmatprep.mubr.bf16.mxu0 0
      %1462 = vmatmul.mubr.bf16.gmra.mrb[0].mxu0 %v1258
      %v1463 = vpop.f32.mrb[0].mxu0
      %v1464 = vadd.f32 0.0, %v1463
      %v1465 = vpop.f32.mrb[0].mxu0
      %v1466 = vpop.f32.mrb[0].mxu0
      %v1467 = vadd.f32 0.0, %v1466
      %v1468 = vpop.f32.mrb[0].mxu0
      %1469 = vmatprep.mubr.bf16.mxu0 0
      %1470 = vmatmul.mubr.bf16.gmra.mrb[0].mxu0 %v1259
      %v1471 = vpop.f32.mrb[0].mxu0
      %v1472 = vadd.f32 0.0, %v1471
      %v1473 = vpop.f32.mrb[0].mxu0
      %v1474 = vpop.f32.mrb[0].mxu0
      %v1475 = vadd.f32 0.0, %v1474
      %v1476 = vpop.f32.mrb[0].mxu0
      %1477 = vmatprep.mubr.bf16.mxu0 0
      %1478 = vmatmul.mubr.bf16.gmra.mrb[0].mxu0 %v1260
      %v1479 = vpop.f32.mrb[0].mxu0
      %v1480 = vadd.f32 0.0, %v1479
      %v1481 = vpop.f32.mrb[0].mxu0
      %v1482 = vpop.f32.mrb[0].mxu0
      %v1483 = vadd.f32 0.0, %v1482
      %v1484 = vpop.f32.mrb[0].mxu0
      %1485 = vdwg.mxu0
      %v1486 = vadd.f32 %v809, %v1360
      %v1487 = vadd.f32 %v810, %v1363
      %v1488 = vadd.f32 %v811, %v1368
      %v1489 = vadd.f32 %v812, %v1371
      %v1490 = vadd.f32 %v813, %v1376
      %v1491 = vadd.f32 %v814, %v1379
      %v1492 = vadd.f32 %v815, %v1384
      %v1493 = vadd.f32 %v816, %v1387
      %v1494 = vadd.f32 %v817, %v1392
      %v1495 = vadd.f32 %v818, %v1395
      %v1496 = vadd.f32 %v819, %v1400
      %v1497 = vadd.f32 %v820, %v1403
      %v1498 = vadd.f32 %v821, %v1408
      %v1499 = vadd.f32 %v822, %v1411
      %v1500 = vadd.f32 %v823, %v1416
      %v1501 = vadd.f32 %v824, %v1419
      %v1502 = vadd.f32 %v825, %v1424
      %v1503 = vadd.f32 %v826, %v1427
      %v1504 = vadd.f32 %v827, %v1432
      %v1505 = vadd.f32 %v828, %v1435
      %v1506 = vadd.f32 %v829, %v1440
      %v1507 = vadd.f32 %v830, %v1443
      %v1508 = vadd.f32 %v831, %v1448
      %v1509 = vadd.f32 %v832, %v1451
      %v1510 = vadd.f32 %v833, %v1456
      %v1511 = vadd.f32 %v834, %v1459
      %v1512 = vadd.f32 %v835, %v1464
      %v1513 = vadd.f32 %v836, %v1467
      %v1514 = vadd.f32 %v837, %v1472
      %v1515 = vadd.f32 %v838, %v1475
      %v1516 = vadd.f32 %v839, %v1480
      %v1517 = vadd.f32 %v840, %v1483
      %1518 = vst [vmem:[#allocation2] sm:$0xff] %v1486
      %1519 = vst [vmem:[#allocation2 + $0x8] sm:$0xff] %v1487
      %1520 = vst [vmem:[#allocation2 + $0x10] sm:$0xff] %v1488
      %1521 = vst [vmem:[#allocation2 + $0x18] sm:$0xff] %v1489
      %1522 = vst [vmem:[#allocation2 + $0x20] sm:$0xff] %v1490
      %1523 = vst [vmem:[#allocation2 + $0x28] sm:$0xff] %v1491
      %1524 = vst [vmem:[#allocation2 + $0x30] sm:$0xff] %v1492
      %1525 = vst [vmem:[#allocation2 + $0x38] sm:$0xff] %v1493
      %1526 = vst [vmem:[#allocation2 + $0x40] sm:$0xff] %v1494
      %1527 = vst [vmem:[#allocation2 + $0x48] sm:$0xff] %v1495
      %1528 = vst [vmem:[#allocation2 + $0x50] sm:$0xff] %v1496
      %1529 = vst [vmem:[#allocation2 + $0x58] sm:$0xff] %v1497
      %1530 = vst [vmem:[#allocation2 + $0x60] sm:$0xff] %v1498
      %1531 = vst [vmem:[#allocation2 + $0x68] sm:$0xff] %v1499
      %1532 = vst [vmem:[#allocation2 + $0x70] sm:$0xff] %v1500
      %1533 = vst [vmem:[#allocation2 + $0x78] sm:$0xff] %v1501
      %1534 = vst [vmem:[#allocation2 + $0x80] sm:$0xff] %v1502
      %1535 = vst [vmem:[#allocation2 + $0x88] sm:$0xff] %v1503
      %1536 = vst [vmem:[#allocation2 + $0x90] sm:$0xff] %v1504
      %1537 = vst [vmem:[#allocation2 + $0x98] sm:$0xff] %v1505
      %1538 = vst [vmem:[#allocation2 + $0xa0] sm:$0xff] %v1506
      %1539 = vst [vmem:[#allocation2 + $0xa8] sm:$0xff] %v1507
      %1540 = vst [vmem:[#allocation2 + $0xb0] sm:$0xff] %v1508
      %1541 = vst [vmem:[#allocation2 + $0xb8] sm:$0xff] %v1509
      %1542 = vst [vmem:[#allocation2 + $0xc0] sm:$0xff] %v1510
      %1543 = vst [vmem:[#allocation2 + $0xc8] sm:$0xff] %v1511
      %1544 = vst [vmem:[#allocation2 + $0xd0] sm:$0xff] %v1512
      %1545 = vst [vmem:[#allocation2 + $0xd8] sm:$0xff] %v1513
      %1546 = vst [vmem:[#allocation2 + $0xe0] sm:$0xff] %v1514
      %1547 = vst [vmem:[#allocation2 + $0xe8] sm:$0xff] %v1515
      %1548 = vst [vmem:[#allocation2 + $0xf0] sm:$0xff] %v1516
      %1549 = vst [vmem:[#allocation2 + $0xf8] sm:$0xff] %v1517
      %v1550 = vld [vmem:[%s319] sm:$0xe]
      %v1551 = vld [vmem:[%s319 + $0x4] sm:$0xf]
      %v1552 = vld [vmem:[%s319 + $0x8] sm:$0xf]
      %v1553 = vld [vmem:[%s319 + $0xc] sm:$0xf]
      %v1554 = vld [vmem:[%s319 + $0x10] sm:$0x1]
      %v1555 = vld [vmem:[%s319 + $0x14] sm:$0xe]
      %v1556 = vld [vmem:[%s319 + $0x18] sm:$0xf]
      %v1557 = vld [vmem:[%s319 + $0x1c] sm:$0xf]
      %v1558 = vld [vmem:[%s319 + $0x20] sm:$0xf]
      %v1559 = vld [vmem:[%s319 + $0x24] sm:$0x1]
      %v1560 = vld [vmem:[%s319 + $0x28] sm:$0xe]
      %v1561 = vld [vmem:[%s319 + $0x2c] sm:$0xf]
      %v1562 = vld [vmem:[%s319 + $0x30] sm:$0xf]
      %v1563 = vld [vmem:[%s319 + $0x34] sm:$0xf]
      %v1564 = vld [vmem:[%s319 + $0x38] sm:$0x1]
      %v1565 = vld [vmem:[%s319 + $0x3c] sm:$0xe]
      %v1566 = vld [vmem:[%s319 + $0x40] sm:$0xf]
      %v1567 = vld [vmem:[%s319 + $0x44] sm:$0xf]
      %v1568 = vld [vmem:[%s319 + $0x48] sm:$0xf]
      %v1569 = vld [vmem:[%s319 + $0x4c] sm:$0x1]
      %v1570 = vld [vmem:[%s319 + $0x50] sm:$0xe]
      %v1571 = vld [vmem:[%s319 + $0x54] sm:$0xf]
      %v1572 = vld [vmem:[%s319 + $0x58] sm:$0xf]
      %v1573 = vld [vmem:[%s319 + $0x5c] sm:$0xf]
      %v1574 = vld [vmem:[%s319 + $0x60] sm:$0x1]
      %v1575 = vld [vmem:[%s319 + $0x64] sm:$0xe]
      %v1576 = vld [vmem:[%s319 + $0x68] sm:$0xf]
      %v1577 = vld [vmem:[%s319 + $0x6c] sm:$0xf]
      %v1578 = vld [vmem:[%s319 + $0x70] sm:$0xf]
      %v1579 = vld [vmem:[%s319 + $0x74] sm:$0x1]
      %v1580 = vld [vmem:[%s319 + $0x78] sm:$0xe]
      %v1581 = vld [vmem:[%s319 + $0x7c] sm:$0xf]
      %v1582 = vld [vmem:[%s319 + $0x80] sm:$0xf]
      %v1583 = vld [vmem:[%s319 + $0x84] sm:$0xf]
      %v1584 = vld [vmem:[%s319 + $0x88] sm:$0x1]
      %v1585 = vld [vmem:[%s319 + $0x8c] sm:$0xe]
      %v1586 = vld [vmem:[%s319 + $0x90] sm:$0xf]
      %v1587 = vld [vmem:[%s319 + $0x94] sm:$0xf]
      %v1588 = vld [vmem:[%s319 + $0x98] sm:$0xf]
      %v1589 = vld [vmem:[%s319 + $0x9c] sm:$0x1]
      %v1590 = vld [vmem:[#allocation2] sm:$0xff]
      %v1591 = vld [vmem:[#allocation2 + $0x8] sm:$0xff]
      %v1592 = vld [vmem:[#allocation2 + $0x10] sm:$0xff]
      %v1593 = vld [vmem:[#allocation2 + $0x18] sm:$0xff]
      %v1594 = vld [vmem:[#allocation2 + $0x20] sm:$0xff]
      %v1595 = vld [vmem:[#allocation2 + $0x28] sm:$0xff]
      %v1596 = vld [vmem:[#allocation2 + $0x30] sm:$0xff]
      %v1597 = vld [vmem:[#allocation2 + $0x38] sm:$0xff]
      %v1598 = vld [vmem:[#allocation2 + $0x40] sm:$0xff]
      %v1599 = vld [vmem:[#allocation2 + $0x48] sm:$0xff]
      %v1600 = vld [vmem:[#allocation2 + $0x50] sm:$0xff]
      %v1601 = vld [vmem:[#allocation2 + $0x58] sm:$0xff]
      %v1602 = vld [vmem:[#allocation2 + $0x60] sm:$0xff]
      %v1603 = vld [vmem:[#allocation2 + $0x68] sm:$0xff]
      %v1604 = vld [vmem:[#allocation2 + $0x70] sm:$0xff]
      %v1605 = vld [vmem:[#allocation2 + $0x78] sm:$0xff]
      %v1606 = vld [vmem:[#allocation2 + $0x80] sm:$0xff]
      %v1607 = vld [vmem:[#allocation2 + $0x88] sm:$0xff]
      %v1608 = vld [vmem:[#allocation2 + $0x90] sm:$0xff]
      %v1609 = vld [vmem:[#allocation2 + $0x98] sm:$0xff]
      %v1610 = vld [vmem:[#allocation2 + $0xa0] sm:$0xff]
      %v1611 = vld [vmem:[#allocation2 + $0xa8] sm:$0xff]
      %v1612 = vld [vmem:[#allocation2 + $0xb0] sm:$0xff]
      %v1613 = vld [vmem:[#allocation2 + $0xb8] sm:$0xff]
      %v1614 = vld [vmem:[#allocation2 + $0xc0] sm:$0xff]
      %v1615 = vld [vmem:[#allocation2 + $0xc8] sm:$0xff]
      %v1616 = vld [vmem:[#allocation2 + $0xd0] sm:$0xff]
      %v1617 = vld [vmem:[#allocation2 + $0xd8] sm:$0xff]
      %v1618 = vld [vmem:[#allocation2 + $0xe0] sm:$0xff]
      %v1619 = vld [vmem:[#allocation2 + $0xe8] sm:$0xff]
      %v1620 = vld [vmem:[#allocation2 + $0xf0] sm:$0xff]
      %v1621 = vld [vmem:[#allocation2 + $0xf8] sm:$0xff]
      %vm1662 = vcmask 1042432
      %vm1663 = vcmask 1046532
      %vm1664 = vmor %vm1662, %vm1663
      %v1665 = vrot.slane %v1550, 5
      %v1666 = vrot.slane %v1665, 4
      %v1667 = vrot.slane %v1551, 5
      %v1668 = vsel %vm1664, %v1666, %v1667
      %v1669 = vrot.slane %v1667, 4
      %v1670 = vrot.slane %v1552, 5
      %v1671 = vsel %vm1664, %v1669, %v1670
      %v1672 = vrot.slane %v1670, 4
      %v1673 = vrot.slane %v1553, 5
      %v1674 = vsel %vm1664, %v1672, %v1673
      %v1675 = vrot.slane %v1673, 4
      %v1676 = vrot.slane %v1554, 5
      %v1677 = vsel %vm1664, %v1675, %v1676
      %v1678 = vrot.slane %v1555, 5
      %v1679 = vrot.slane %v1678, 4
      %v1680 = vrot.slane %v1556, 5
      %v1681 = vsel %vm1664, %v1679, %v1680
      %v1682 = vrot.slane %v1680, 4
      %v1683 = vrot.slane %v1557, 5
      %v1684 = vsel %vm1664, %v1682, %v1683
      %v1685 = vrot.slane %v1683, 4
      %v1686 = vrot.slane %v1558, 5
      %v1687 = vsel %vm1664, %v1685, %v1686
      %v1688 = vrot.slane %v1686, 4
      %v1689 = vrot.slane %v1559, 5
      %v1690 = vsel %vm1664, %v1688, %v1689
      %v1691 = vrot.slane %v1560, 5
      %v1692 = vrot.slane %v1691, 4
      %v1693 = vrot.slane %v1561, 5
      %v1694 = vsel %vm1664, %v1692, %v1693
      %v1695 = vrot.slane %v1693, 4
      %v1696 = vrot.slane %v1562, 5
      %v1697 = vsel %vm1664, %v1695, %v1696
      %v1698 = vrot.slane %v1696, 4
      %v1699 = vrot.slane %v1563, 5
      %v1700 = vsel %vm1664, %v1698, %v1699
      %v1701 = vrot.slane %v1699, 4
      %v1702 = vrot.slane %v1564, 5
      %v1703 = vsel %vm1664, %v1701, %v1702
      %v1704 = vrot.slane %v1565, 5
      %v1705 = vrot.slane %v1704, 4
      %v1706 = vrot.slane %v1566, 5
      %v1707 = vsel %vm1664, %v1705, %v1706
      %v1708 = vrot.slane %v1706, 4
      %v1709 = vrot.slane %v1567, 5
      %v1710 = vsel %vm1664, %v1708, %v1709
      %v1711 = vrot.slane %v1709, 4
      %v1712 = vrot.slane %v1568, 5
      %v1713 = vsel %vm1664, %v1711, %v1712
      %v1714 = vrot.slane %v1712, 4
      %v1715 = vrot.slane %v1569, 5
      %v1716 = vsel %vm1664, %v1714, %v1715
      %v1717 = vrot.slane %v1570, 5
      %v1718 = vrot.slane %v1717, 4
      %v1719 = vrot.slane %v1571, 5
      %v1720 = vsel %vm1664, %v1718, %v1719
      %v1721 = vrot.slane %v1719, 4
      %v1722 = vrot.slane %v1572, 5
      %v1723 = vsel %vm1664, %v1721, %v1722
      %v1724 = vrot.slane %v1722, 4
      %v1725 = vrot.slane %v1573, 5
      %v1726 = vsel %vm1664, %v1724, %v1725
      %v1727 = vrot.slane %v1725, 4
      %v1728 = vrot.slane %v1574, 5
      %v1729 = vsel %vm1664, %v1727, %v1728
      %v1730 = vrot.slane %v1575, 5
      %v1731 = vrot.slane %v1730, 4
      %v1732 = vrot.slane %v1576, 5
      %v1733 = vsel %vm1664, %v1731, %v1732
      %v1734 = vrot.slane %v1732, 4
      %v1735 = vrot.slane %v1577, 5
      %v1736 = vsel %vm1664, %v1734, %v1735
      %v1737 = vrot.slane %v1735, 4
      %v1738 = vrot.slane %v1578, 5
      %v1739 = vsel %vm1664, %v1737, %v1738
      %v1740 = vrot.slane %v1738, 4
      %v1741 = vrot.slane %v1579, 5
      %v1742 = vsel %vm1664, %v1740, %v1741
      %v1743 = vrot.slane %v1580, 5
      %v1744 = vrot.slane %v1743, 4
      %v1745 = vrot.slane %v1581, 5
      %v1746 = vsel %vm1664, %v1744, %v1745
      %v1747 = vrot.slane %v1745, 4
      %v1748 = vrot.slane %v1582, 5
      %v1749 = vsel %vm1664, %v1747, %v1748
      %v1750 = vrot.slane %v1748, 4
      %v1751 = vrot.slane %v1583, 5
      %v1752 = vsel %vm1664, %v1750, %v1751
      %v1753 = vrot.slane %v1751, 4
      %v1754 = vrot.slane %v1584, 5
      %v1755 = vsel %vm1664, %v1753, %v1754
      %v1756 = vrot.slane %v1585, 5
      %v1757 = vrot.slane %v1756, 4
      %v1758 = vrot.slane %v1586, 5
      %v1759 = vsel %vm1664, %v1757, %v1758
      %v1760 = vrot.slane %v1758, 4
      %v1761 = vrot.slane %v1587, 5
      %v1762 = vsel %vm1664, %v1760, %v1761
      %v1763 = vrot.slane %v1761, 4
      %v1764 = vrot.slane %v1588, 5
      %v1765 = vsel %vm1664, %v1763, %v1764
      %v1766 = vrot.slane %v1764, 4
      %v1767 = vrot.slane %v1589, 5
      %v1768 = vsel %vm1664, %v1766, %v1767
      %s1769 = scalar_lea.vmem %s262, 128
      %v1770 = vld [vmem:[%s1769] sm:$0xf]
      %v1771 = vld [vmem:[%s1769 + $0x4] sm:$0xf]
      %v1772 = vld [vmem:[%s1769 + $0x8] sm:$0xf]
      %v1773 = vld [vmem:[%s1769 + $0xc] sm:$0xf]
      %v1774 = vld [vmem:[%s1769 + $0x10] sm:$0xf]
      %v1775 = vld [vmem:[%s1769 + $0x14] sm:$0xf]
      %v1776 = vld [vmem:[%s1769 + $0x18] sm:$0xf]
      %v1777 = vld [vmem:[%s1769 + $0x1c] sm:$0xf]
      %v1778 = vld [vmem:[%s1769 + $0x20] sm:$0xf]
      %v1779 = vld [vmem:[%s1769 + $0x24] sm:$0xf]
      %v1780 = vld [vmem:[%s1769 + $0x28] sm:$0xf]
      %v1781 = vld [vmem:[%s1769 + $0x2c] sm:$0xf]
      %v1782 = vld [vmem:[%s1769 + $0x30] sm:$0xf]
      %v1783 = vld [vmem:[%s1769 + $0x34] sm:$0xf]
      %v1784 = vld [vmem:[%s1769 + $0x38] sm:$0xf]
      %v1785 = vld [vmem:[%s1769 + $0x3c] sm:$0xf]
      %v1786 = vunpack.c.l.b16 %v1668
      %v1787 = vunpack.c.l.b16 %v1671
      %v1788 = vunpack.c.l.b16 %v1674
      %v1789 = vunpack.c.l.b16 %v1677
      %v1790 = vunpack.c.l.b16 %v1681
      %v1791 = vunpack.c.l.b16 %v1684
      %v1792 = vunpack.c.l.b16 %v1687
      %v1793 = vunpack.c.l.b16 %v1690
      %v1794 = vunpack.c.l.b16 %v1694
      %v1795 = vunpack.c.l.b16 %v1697
      %v1796 = vunpack.c.l.b16 %v1700
      %v1797 = vunpack.c.l.b16 %v1703
      %v1798 = vunpack.c.l.b16 %v1707
      %v1799 = vunpack.c.l.b16 %v1710
      %v1800 = vunpack.c.l.b16 %v1713
      %v1801 = vunpack.c.l.b16 %v1716
      %v1802 = vunpack.c.l.b16 %v1720
      %v1803 = vunpack.c.l.b16 %v1723
      %v1804 = vunpack.c.l.b16 %v1726
      %v1805 = vunpack.c.l.b16 %v1729
      %v1806 = vunpack.c.l.b16 %v1733
      %v1807 = vunpack.c.l.b16 %v1736
      %v1808 = vunpack.c.l.b16 %v1739
      %v1809 = vunpack.c.l.b16 %v1742
      %v1810 = vunpack.c.l.b16 %v1746
      %v1811 = vunpack.c.l.b16 %v1749
      %v1812 = vunpack.c.l.b16 %v1752
      %v1813 = vunpack.c.l.b16 %v1755
      %v1814 = vunpack.c.l.b16 %v1759
      %v1815 = vunpack.c.l.b16 %v1762
      %v1816 = vunpack.c.l.b16 %v1765
      %v1817 = vunpack.c.l.b16 %v1768
      %v1818 = vpack.c.b16 %v1787, %v1786
      %v1819 = vpack.c.b16 %v1789, %v1788
      %v1820 = vpack.c.b16 %v1791, %v1790
      %v1821 = vpack.c.b16 %v1793, %v1792
      %v1822 = vpack.c.b16 %v1795, %v1794
      %v1823 = vpack.c.b16 %v1797, %v1796
      %v1824 = vpack.c.b16 %v1799, %v1798
      %v1825 = vpack.c.b16 %v1801, %v1800
      %v1826 = vpack.c.b16 %v1803, %v1802
      %v1827 = vpack.c.b16 %v1805, %v1804
      %v1828 = vpack.c.b16 %v1807, %v1806
      %v1829 = vpack.c.b16 %v1809, %v1808
      %v1830 = vpack.c.b16 %v1811, %v1810
      %v1831 = vpack.c.b16 %v1813, %v1812
      %v1832 = vpack.c.b16 %v1815, %v1814
      %v1833 = vpack.c.b16 %v1817, %v1816
      %v1866 = vunpack.c.l.b16 %v1770
      %v1867 = vunpack.c.l.b16 %v1771
      %v1868 = vunpack.c.l.b16 %v1772
      %v1869 = vunpack.c.l.b16 %v1773
      %v1870 = vunpack.c.l.b16 %v1774
      %v1871 = vunpack.c.l.b16 %v1775
      %v1872 = vunpack.c.l.b16 %v1776
      %v1873 = vunpack.c.l.b16 %v1777
      %v1874 = vunpack.c.l.b16 %v1778
      %v1875 = vunpack.c.l.b16 %v1779
      %v1876 = vunpack.c.l.b16 %v1780
      %v1877 = vunpack.c.l.b16 %v1781
      %v1878 = vunpack.c.l.b16 %v1782
      %v1879 = vunpack.c.l.b16 %v1783
      %v1880 = vunpack.c.l.b16 %v1784
      %v1881 = vunpack.c.l.b16 %v1785
      %v1882 = vpack.c.b16 %v1867, %v1866
      %v1883 = vpack.c.b16 %v1869, %v1868
      %v1884 = vpack.c.b16 %v1871, %v1870
      %v1885 = vpack.c.b16 %v1873, %v1872
      %v1886 = vpack.c.b16 %v1875, %v1874
      %v1887 = vpack.c.b16 %v1877, %v1876
      %v1888 = vpack.c.b16 %v1879, %v1878
      %v1889 = vpack.c.b16 %v1881, %v1880
      %1898 = vmatprep.subr.bf16.mxu0 0
      %1899 = vmatpush1.bf16.msra.mxu0 %v1882
      %1900 = vmatprep.subr.bf16.mxu0 0
      %1901 = vmatpush1.bf16.msra.mxu0 %v1883
      %1902 = vmatprep.subr.bf16.mxu0 0
      %1903 = vmatpush1.bf16.msra.mxu0 %v1884
      %1904 = vmatprep.subr.bf16.mxu0 0
      %1905 = vmatpush1.bf16.msra.mxu0 %v1885
      %1906 = vmatprep.subr.bf16.mxu0 0
      %1907 = vmatpush1.bf16.msra.mxu0 %v1886
      %1908 = vmatprep.subr.bf16.mxu0 0
      %1909 = vmatpush1.bf16.msra.mxu0 %v1887
      %1910 = vmatprep.subr.bf16.mxu0 0
      %1911 = vmatpush1.bf16.msra.mxu0 %v1888
      %1912 = vmatprep.subr.bf16.mxu0 0
      %1913 = vmatpush1.bf16.msra.mxu0 %v1889
      %1914 = vmatprep.subr.bf16.mxu0 0
      %1915 = vmatpush1.bf16.msra.mxu0 0
      %1916 = vmatprep.subr.bf16.mxu0 0
      %1917 = vmatpush1.bf16.msra.mxu0 0
      %1918 = vmatprep.subr.bf16.mxu0 0
      %1919 = vmatpush1.bf16.msra.mxu0 0
      %1920 = vmatprep.subr.bf16.mxu0 0
      %1921 = vmatpush1.bf16.msra.mxu0 0
      %1922 = vmatprep.subr.bf16.mxu0 0
      %1923 = vmatpush1.bf16.msra.mxu0 0
      %1924 = vmatprep.subr.bf16.mxu0 0
      %1925 = vmatpush1.bf16.msra.mxu0 0
      %1926 = vmatprep.subr.bf16.mxu0 0
      %1927 = vmatpush1.bf16.msra.mxu0 0
      %1928 = vmatprep.subr.bf16.mxu0 0
      %1929 = vmatpush1.bf16.msra.mxu0 0
      %1930 = vmatprep.mubr.bf16.mxu0 0
      %1931 = vmatmul.mubr.bf16.gmra.mrb[0].mxu0 %v1818
      %v1932 = vpop.f32.mrb[0].mxu0
      %v1933 = vadd.f32 0.0, %v1932
      %v1934 = vpop.f32.mrb[0].mxu0
      %v1935 = vpop.f32.mrb[0].mxu0
      %v1936 = vadd.f32 0.0, %v1935
      %v1937 = vpop.f32.mrb[0].mxu0
      %1938 = vmatprep.mubr.bf16.mxu0 0
      %1939 = vmatmul.mubr.bf16.gmra.mrb[0].mxu0 %v1819
      %v1940 = vpop.f32.mrb[0].mxu0
      %v1941 = vadd.f32 0.0, %v1940
      %v1942 = vpop.f32.mrb[0].mxu0
      %v1943 = vpop.f32.mrb[0].mxu0
      %v1944 = vadd.f32 0.0, %v1943
      %v1945 = vpop.f32.mrb[0].mxu0
      %1946 = vmatprep.mubr.bf16.mxu0 0
      %1947 = vmatmul.mubr.bf16.gmra.mrb[0].mxu0 %v1820
      %v1948 = vpop.f32.mrb[0].mxu0
      %v1949 = vadd.f32 0.0, %v1948
      %v1950 = vpop.f32.mrb[0].mxu0
      %v1951 = vpop.f32.mrb[0].mxu0
      %v1952 = vadd.f32 0.0, %v1951
      %v1953 = vpop.f32.mrb[0].mxu0
      %1954 = vmatprep.mubr.bf16.mxu0 0
      %1955 = vmatmul.mubr.bf16.gmra.mrb[0].mxu0 %v1821
      %v1956 = vpop.f32.mrb[0].mxu0
      %v1957 = vadd.f32 0.0, %v1956
      %v1958 = vpop.f32.mrb[0].mxu0
      %v1959 = vpop.f32.mrb[0].mxu0
      %v1960 = vadd.f32 0.0, %v1959
      %v1961 = vpop.f32.mrb[0].mxu0
      %1962 = vmatprep.mubr.bf16.mxu0 0
      %1963 = vmatmul.mubr.bf16.gmra.mrb[0].mxu0 %v1822
      %v1964 = vpop.f32.mrb[0].mxu0
      %v1965 = vadd.f32 0.0, %v1964
      %v1966 = vpop.f32.mrb[0].mxu0
      %v1967 = vpop.f32.mrb[0].mxu0
      %v1968 = vadd.f32 0.0, %v1967
      %v1969 = vpop.f32.mrb[0].mxu0
      %1970 = vmatprep.mubr.bf16.mxu0 0
      %1971 = vmatmul.mubr.bf16.gmra.mrb[0].mxu0 %v1823
      %v1972 = vpop.f32.mrb[0].mxu0
      %v1973 = vadd.f32 0.0, %v1972
      %v1974 = vpop.f32.mrb[0].mxu0
      %v1975 = vpop.f32.mrb[0].mxu0
      %v1976 = vadd.f32 0.0, %v1975
      %v1977 = vpop.f32.mrb[0].mxu0
      %1978 = vmatprep.mubr.bf16.mxu0 0
      %1979 = vmatmul.mubr.bf16.gmra.mrb[0].mxu0 %v1824
      %v1980 = vpop.f32.mrb[0].mxu0
      %v1981 = vadd.f32 0.0, %v1980
      %v1982 = vpop.f32.mrb[0].mxu0
      %v1983 = vpop.f32.mrb[0].mxu0
      %v1984 = vadd.f32 0.0, %v1983
      %v1985 = vpop.f32.mrb[0].mxu0
      %1986 = vmatprep.mubr.bf16.mxu0 0
      %1987 = vmatmul.mubr.bf16.gmra.mrb[0].mxu0 %v1825
      %v1988 = vpop.f32.mrb[0].mxu0
      %v1989 = vadd.f32 0.0, %v1988
      %v1990 = vpop.f32.mrb[0].mxu0
      %v1991 = vpop.f32.mrb[0].mxu0
      %v1992 = vadd.f32 0.0, %v1991
      %v1993 = vpop.f32.mrb[0].mxu0
      %1994 = vmatprep.mubr.bf16.mxu0 0
      %1995 = vmatmul.mubr.bf16.gmra.mrb[0].mxu0 %v1826
      %v1996 = vpop.f32.mrb[0].mxu0
      %v1997 = vadd.f32 0.0, %v1996
      %v1998 = vpop.f32.mrb[0].mxu0
      %v1999 = vpop.f32.mrb[0].mxu0
      %v2000 = vadd.f32 0.0, %v1999
      %v2001 = vpop.f32.mrb[0].mxu0
      %2002 = vmatprep.mubr.bf16.mxu0 0
      %2003 = vmatmul.mubr.bf16.gmra.mrb[0].mxu0 %v1827
      %v2004 = vpop.f32.mrb[0].mxu0
      %v2005 = vadd.f32 0.0, %v2004
      %v2006 = vpop.f32.mrb[0].mxu0
      %v2007 = vpop.f32.mrb[0].mxu0
      %v2008 = vadd.f32 0.0, %v2007
      %v2009 = vpop.f32.mrb[0].mxu0
      %2010 = vmatprep.mubr.bf16.mxu0 0
      %2011 = vmatmul.mubr.bf16.gmra.mrb[0].mxu0 %v1828
      %v2012 = vpop.f32.mrb[0].mxu0
      %v2013 = vadd.f32 0.0, %v2012
      %v2014 = vpop.f32.mrb[0].mxu0
      %v2015 = vpop.f32.mrb[0].mxu0
      %v2016 = vadd.f32 0.0, %v2015
      %v2017 = vpop.f32.mrb[0].mxu0
      %2018 = vmatprep.mubr.bf16.mxu0 0
      %2019 = vmatmul.mubr.bf16.gmra.mrb[0].mxu0 %v1829
      %v2020 = vpop.f32.mrb[0].mxu0
      %v2021 = vadd.f32 0.0, %v2020
      %v2022 = vpop.f32.mrb[0].mxu0
      %v2023 = vpop.f32.mrb[0].mxu0
      %v2024 = vadd.f32 0.0, %v2023
      %v2025 = vpop.f32.mrb[0].mxu0
      %2026 = vmatprep.mubr.bf16.mxu0 0
      %2027 = vmatmul.mubr.bf16.gmra.mrb[0].mxu0 %v1830
      %v2028 = vpop.f32.mrb[0].mxu0
      %v2029 = vadd.f32 0.0, %v2028
      %v2030 = vpop.f32.mrb[0].mxu0
      %v2031 = vpop.f32.mrb[0].mxu0
      %v2032 = vadd.f32 0.0, %v2031
      %v2033 = vpop.f32.mrb[0].mxu0
      %2034 = vmatprep.mubr.bf16.mxu0 0
      %2035 = vmatmul.mubr.bf16.gmra.mrb[0].mxu0 %v1831
      %v2036 = vpop.f32.mrb[0].mxu0
      %v2037 = vadd.f32 0.0, %v2036
      %v2038 = vpop.f32.mrb[0].mxu0
      %v2039 = vpop.f32.mrb[0].mxu0
      %v2040 = vadd.f32 0.0, %v2039
      %v2041 = vpop.f32.mrb[0].mxu0
      %2042 = vmatprep.mubr.bf16.mxu0 0
      %2043 = vmatmul.mubr.bf16.gmra.mrb[0].mxu0 %v1832
      %v2044 = vpop.f32.mrb[0].mxu0
      %v2045 = vadd.f32 0.0, %v2044
      %v2046 = vpop.f32.mrb[0].mxu0
      %v2047 = vpop.f32.mrb[0].mxu0
      %v2048 = vadd.f32 0.0, %v2047
      %v2049 = vpop.f32.mrb[0].mxu0
      %2050 = vmatprep.mubr.bf16.mxu0 0
      %2051 = vmatmul.mubr.bf16.gmra.mrb[0].mxu0 %v1833
      %v2052 = vpop.f32.mrb[0].mxu0
      %v2053 = vadd.f32 0.0, %v2052
      %v2054 = vpop.f32.mrb[0].mxu0
      %v2055 = vpop.f32.mrb[0].mxu0
      %v2056 = vadd.f32 0.0, %v2055
      %v2057 = vpop.f32.mrb[0].mxu0
      %2058 = vdwg.mxu0
      %v2059 = vadd.f32 %v1590, %v1933
      %v2060 = vadd.f32 %v1591, %v1936
      %v2061 = vadd.f32 %v1592, %v1941
      %v2062 = vadd.f32 %v1593, %v1944
      %v2063 = vadd.f32 %v1594, %v1949
      %v2064 = vadd.f32 %v1595, %v1952
      %v2065 = vadd.f32 %v1596, %v1957
      %v2066 = vadd.f32 %v1597, %v1960
      %v2067 = vadd.f32 %v1598, %v1965
      %v2068 = vadd.f32 %v1599, %v1968
      %v2069 = vadd.f32 %v1600, %v1973
      %v2070 = vadd.f32 %v1601, %v1976
      %v2071 = vadd.f32 %v1602, %v1981
      %v2072 = vadd.f32 %v1603, %v1984
      %v2073 = vadd.f32 %v1604, %v1989
      %v2074 = vadd.f32 %v1605, %v1992
      %v2075 = vadd.f32 %v1606, %v1997
      %v2076 = vadd.f32 %v1607, %v2000
      %v2077 = vadd.f32 %v1608, %v2005
      %v2078 = vadd.f32 %v1609, %v2008
      %v2079 = vadd.f32 %v1610, %v2013
      %v2080 = vadd.f32 %v1611, %v2016
      %v2081 = vadd.f32 %v1612, %v2021
      %v2082 = vadd.f32 %v1613, %v2024
      %v2083 = vadd.f32 %v1614, %v2029
      %v2084 = vadd.f32 %v1615, %v2032
      %v2085 = vadd.f32 %v1616, %v2037
      %v2086 = vadd.f32 %v1617, %v2040
      %v2087 = vadd.f32 %v1618, %v2045
      %v2088 = vadd.f32 %v1619, %v2048
      %v2089 = vadd.f32 %v1620, %v2053
      %v2090 = vadd.f32 %v1621, %v2056
      %2091 = vst [vmem:[#allocation2] sm:$0xff] %v2059
      %2092 = vst [vmem:[#allocation2 + $0x8] sm:$0xff] %v2060
      %2093 = vst [vmem:[#allocation2 + $0x10] sm:$0xff] %v2061
      %2094 = vst [vmem:[#allocation2 + $0x18] sm:$0xff] %v2062
      %2095 = vst [vmem:[#allocation2 + $0x20] sm:$0xff] %v2063
      %2096 = vst [vmem:[#allocation2 + $0x28] sm:$0xff] %v2064
      %2097 = vst [vmem:[#allocation2 + $0x30] sm:$0xff] %v2065
      %2098 = vst [vmem:[#allocation2 + $0x38] sm:$0xff] %v2066
      %2099 = vst [vmem:[#allocation2 + $0x40] sm:$0xff] %v2067
      %2100 = vst [vmem:[#allocation2 + $0x48] sm:$0xff] %v2068
      %2101 = vst [vmem:[#allocation2 + $0x50] sm:$0xff] %v2069
      %2102 = vst [vmem:[#allocation2 + $0x58] sm:$0xff] %v2070
      %2103 = vst [vmem:[#allocation2 + $0x60] sm:$0xff] %v2071
      %2104 = vst [vmem:[#allocation2 + $0x68] sm:$0xff] %v2072
      %2105 = vst [vmem:[#allocation2 + $0x70] sm:$0xff] %v2073
      %2106 = vst [vmem:[#allocation2 + $0x78] sm:$0xff] %v2074
      %2107 = vst [vmem:[#allocation2 + $0x80] sm:$0xff] %v2075
      %2108 = vst [vmem:[#allocation2 + $0x88] sm:$0xff] %v2076
      %2109 = vst [vmem:[#allocation2 + $0x90] sm:$0xff] %v2077
      %2110 = vst [vmem:[#allocation2 + $0x98] sm:$0xff] %v2078
      %2111 = vst [vmem:[#allocation2 + $0xa0] sm:$0xff] %v2079
      %2112 = vst [vmem:[#allocation2 + $0xa8] sm:$0xff] %v2080
      %2113 = vst [vmem:[#allocation2 + $0xb0] sm:$0xff] %v2081
      %2114 = vst [vmem:[#allocation2 + $0xb8] sm:$0xff] %v2082
      %2115 = vst [vmem:[#allocation2 + $0xc0] sm:$0xff] %v2083
      %2116 = vst [vmem:[#allocation2 + $0xc8] sm:$0xff] %v2084
      %2117 = vst [vmem:[#allocation2 + $0xd0] sm:$0xff] %v2085
      %2118 = vst [vmem:[#allocation2 + $0xd8] sm:$0xff] %v2086
      %2119 = vst [vmem:[#allocation2 + $0xe0] sm:$0xff] %v2087
      %2120 = vst [vmem:[#allocation2 + $0xe8] sm:$0xff] %v2088
      %2121 = vst [vmem:[#allocation2 + $0xf0] sm:$0xff] %v2089
      %2122 = vst [vmem:[#allocation2 + $0xf8] sm:$0xff] %v2090
      %s2123 = sadd.s32 %s284, 1
      %s2124 = smul.u32 %s2123, 5
      %s2125 = smul.addr %s2124, 4
      %s2126 = scalar_lea.vmem %s258, %s2125
      %v2127 = vld [vmem:[%s2126] sm:$0xf]
      %v2128 = vld [vmem:[%s2126 + $0x4] sm:$0xf]
      %v2129 = vld [vmem:[%s2126 + $0x8] sm:$0xf]
      %v2130 = vld [vmem:[%s2126 + $0xc] sm:$0xf]
      %v2131 = vld [vmem:[%s2126 + $0x14] sm:$0xf]
      %v2132 = vld [vmem:[%s2126 + $0x18] sm:$0xf]
      %v2133 = vld [vmem:[%s2126 + $0x1c] sm:$0xf]
      %v2134 = vld [vmem:[%s2126 + $0x20] sm:$0xf]
      %v2135 = vld [vmem:[%s2126 + $0x28] sm:$0xf]
      %v2136 = vld [vmem:[%s2126 + $0x2c] sm:$0xf]
      %v2137 = vld [vmem:[%s2126 + $0x30] sm:$0xf]
      %v2138 = vld [vmem:[%s2126 + $0x34] sm:$0xf]
      %v2139 = vld [vmem:[%s2126 + $0x3c] sm:$0xf]
      %v2140 = vld [vmem:[%s2126 + $0x40] sm:$0xf]
      %v2141 = vld [vmem:[%s2126 + $0x44] sm:$0xf]
      %v2142 = vld [vmem:[%s2126 + $0x48] sm:$0xf]
      %v2143 = vld [vmem:[%s2126 + $0x50] sm:$0xf]
      %v2144 = vld [vmem:[%s2126 + $0x54] sm:$0xf]
      %v2145 = vld [vmem:[%s2126 + $0x58] sm:$0xf]
      %v2146 = vld [vmem:[%s2126 + $0x5c] sm:$0xf]
      %v2147 = vld [vmem:[%s2126 + $0x64] sm:$0xf]
      %v2148 = vld [vmem:[%s2126 + $0x68] sm:$0xf]
      %v2149 = vld [vmem:[%s2126 + $0x6c] sm:$0xf]
      %v2150 = vld [vmem:[%s2126 + $0x70] sm:$0xf]
      %v2151 = vld [vmem:[%s2126 + $0x78] sm:$0xf]
      %v2152 = vld [vmem:[%s2126 + $0x7c] sm:$0xf]
      %v2153 = vld [vmem:[%s2126 + $0x80] sm:$0xf]
      %v2154 = vld [vmem:[%s2126 + $0x84] sm:$0xf]
      %v2155 = vld [vmem:[%s2126 + $0x8c] sm:$0xf]
      %v2156 = vld [vmem:[%s2126 + $0x90] sm:$0xf]
      %v2157 = vld [vmem:[%s2126 + $0x94] sm:$0xf]
      %v2158 = vld [vmem:[%s2126 + $0x98] sm:$0xf]
      %v2159 = vld [vmem:[#allocation2] sm:$0xff]
      %v2160 = vld [vmem:[#allocation2 + $0x8] sm:$0xff]
      %v2161 = vld [vmem:[#allocation2 + $0x10] sm:$0xff]
      %v2162 = vld [vmem:[#allocation2 + $0x18] sm:$0xff]
      %v2163 = vld [vmem:[#allocation2 + $0x20] sm:$0xff]
      %v2164 = vld [vmem:[#allocation2 + $0x28] sm:$0xff]
      %v2165 = vld [vmem:[#allocation2 + $0x30] sm:$0xff]
      %v2166 = vld [vmem:[#allocation2 + $0x38] sm:$0xff]
      %v2167 = vld [vmem:[#allocation2 + $0x40] sm:$0xff]
      %v2168 = vld [vmem:[#allocation2 + $0x48] sm:$0xff]
      %v2169 = vld [vmem:[#allocation2 + $0x50] sm:$0xff]
      %v2170 = vld [vmem:[#allocation2 + $0x58] sm:$0xff]
      %v2171 = vld [vmem:[#allocation2 + $0x60] sm:$0xff]
      %v2172 = vld [vmem:[#allocation2 + $0x68] sm:$0xff]
      %v2173 = vld [vmem:[#allocation2 + $0x70] sm:$0xff]
      %v2174 = vld [vmem:[#allocation2 + $0x78] sm:$0xff]
      %v2175 = vld [vmem:[#allocation2 + $0x80] sm:$0xff]
      %v2176 = vld [vmem:[#allocation2 + $0x88] sm:$0xff]
      %v2177 = vld [vmem:[#allocation2 + $0x90] sm:$0xff]
      %v2178 = vld [vmem:[#allocation2 + $0x98] sm:$0xff]
      %v2179 = vld [vmem:[#allocation2 + $0xa0] sm:$0xff]
      %v2180 = vld [vmem:[#allocation2 + $0xa8] sm:$0xff]
      %v2181 = vld [vmem:[#allocation2 + $0xb0] sm:$0xff]
      %v2182 = vld [vmem:[#allocation2 + $0xb8] sm:$0xff]
      %v2183 = vld [vmem:[#allocation2 + $0xc0] sm:$0xff]
      %v2184 = vld [vmem:[#allocation2 + $0xc8] sm:$0xff]
      %v2185 = vld [vmem:[#allocation2 + $0xd0] sm:$0xff]
      %v2186 = vld [vmem:[#allocation2 + $0xd8] sm:$0xff]
      %v2187 = vld [vmem:[#allocation2 + $0xe0] sm:$0xff]
      %v2188 = vld [vmem:[#allocation2 + $0xe8] sm:$0xff]
      %v2189 = vld [vmem:[#allocation2 + $0xf0] sm:$0xff]
      %v2190 = vld [vmem:[#allocation2 + $0xf8] sm:$0xff]
      %s2191 = scalar_lea.vmem %s262, 192
      %v2192 = vld [vmem:[%s2191] sm:$0xf]
      %v2193 = vld [vmem:[%s2191 + $0x4] sm:$0xf]
      %v2194 = vld [vmem:[%s2191 + $0x8] sm:$0xf]
      %v2195 = vld [vmem:[%s2191 + $0xc] sm:$0xf]
      %v2196 = vld [vmem:[%s2191 + $0x10] sm:$0xf]
      %v2197 = vld [vmem:[%s2191 + $0x14] sm:$0xf]
      %v2198 = vld [vmem:[%s2191 + $0x18] sm:$0xf]
      %v2199 = vld [vmem:[%s2191 + $0x1c] sm:$0xf]
      %v2200 = vld [vmem:[%s2191 + $0x20] sm:$0xf]
      %v2201 = vld [vmem:[%s2191 + $0x24] sm:$0xf]
      %v2202 = vld [vmem:[%s2191 + $0x28] sm:$0xf]
      %v2203 = vld [vmem:[%s2191 + $0x2c] sm:$0xf]
      %v2204 = vld [vmem:[%s2191 + $0x30] sm:$0xf]
      %v2205 = vld [vmem:[%s2191 + $0x34] sm:$0xf]
      %v2206 = vld [vmem:[%s2191 + $0x38] sm:$0xf]
      %v2207 = vld [vmem:[%s2191 + $0x3c] sm:$0xf]
      %v2240 = vunpack.c.l.b16 %v2127
      %v2241 = vunpack.c.l.b16 %v2128
      %v2242 = vunpack.c.l.b16 %v2129
      %v2243 = vunpack.c.l.b16 %v2130
      %v2244 = vunpack.c.l.b16 %v2131
      %v2245 = vunpack.c.l.b16 %v2132
      %v2246 = vunpack.c.l.b16 %v2133
      %v2247 = vunpack.c.l.b16 %v2134
      %v2248 = vunpack.c.l.b16 %v2135
      %v2249 = vunpack.c.l.b16 %v2136
      %v2250 = vunpack.c.l.b16 %v2137
      %v2251 = vunpack.c.l.b16 %v2138
      %v2252 = vunpack.c.l.b16 %v2139
      %v2253 = vunpack.c.l.b16 %v2140
      %v2254 = vunpack.c.l.b16 %v2141
      %v2255 = vunpack.c.l.b16 %v2142
      %v2256 = vunpack.c.l.b16 %v2143
      %v2257 = vunpack.c.l.b16 %v2144
      %v2258 = vunpack.c.l.b16 %v2145
      %v2259 = vunpack.c.l.b16 %v2146
      %v2260 = vunpack.c.l.b16 %v2147
      %v2261 = vunpack.c.l.b16 %v2148
      %v2262 = vunpack.c.l.b16 %v2149
      %v2263 = vunpack.c.l.b16 %v2150
      %v2264 = vunpack.c.l.b16 %v2151
      %v2265 = vunpack.c.l.b16 %v2152
      %v2266 = vunpack.c.l.b16 %v2153
      %v2267 = vunpack.c.l.b16 %v2154
      %v2268 = vunpack.c.l.b16 %v2155
      %v2269 = vunpack.c.l.b16 %v2156
      %v2270 = vunpack.c.l.b16 %v2157
      %v2271 = vunpack.c.l.b16 %v2158
      %v2272 = vpack.c.b16 %v2241, %v2240
      %v2273 = vpack.c.b16 %v2243, %v2242
      %v2274 = vpack.c.b16 %v2245, %v2244
      %v2275 = vpack.c.b16 %v2247, %v2246
      %v2276 = vpack.c.b16 %v2249, %v2248
      %v2277 = vpack.c.b16 %v2251, %v2250
      %v2278 = vpack.c.b16 %v2253, %v2252
      %v2279 = vpack.c.b16 %v2255, %v2254
      %v2280 = vpack.c.b16 %v2257, %v2256
      %v2281 = vpack.c.b16 %v2259, %v2258
      %v2282 = vpack.c.b16 %v2261, %v2260
      %v2283 = vpack.c.b16 %v2263, %v2262
      %v2284 = vpack.c.b16 %v2265, %v2264
      %v2285 = vpack.c.b16 %v2267, %v2266
      %v2286 = vpack.c.b16 %v2269, %v2268
      %v2287 = vpack.c.b16 %v2271, %v2270
      %v2320 = vunpack.c.l.b16 %v2192
      %v2321 = vunpack.c.l.b16 %v2193
      %v2322 = vunpack.c.l.b16 %v2194
      %v2323 = vunpack.c.l.b16 %v2195
      %v2324 = vunpack.c.l.b16 %v2196
      %v2325 = vunpack.c.l.b16 %v2197
      %v2326 = vunpack.c.l.b16 %v2198
      %v2327 = vunpack.c.l.b16 %v2199
      %v2328 = vunpack.c.l.b16 %v2200
      %v2329 = vunpack.c.l.b16 %v2201
      %v2330 = vunpack.c.l.b16 %v2202
      %v2331 = vunpack.c.l.b16 %v2203
      %v2332 = vunpack.c.l.b16 %v2204
      %v2333 = vunpack.c.l.b16 %v2205
      %v2334 = vunpack.c.l.b16 %v2206
      %v2335 = vunpack.c.l.b16 %v2207
      %v2336 = vpack.c.b16 %v2321, %v2320
      %v2337 = vpack.c.b16 %v2323, %v2322
      %v2338 = vpack.c.b16 %v2325, %v2324
      %v2339 = vpack.c.b16 %v2327, %v2326
      %v2340 = vpack.c.b16 %v2329, %v2328
      %v2341 = vpack.c.b16 %v2331, %v2330
      %v2342 = vpack.c.b16 %v2333, %v2332
      %v2343 = vpack.c.b16 %v2335, %v2334
      %2352 = vmatprep.subr.bf16.mxu0 0
      %2353 = vmatpush1.bf16.msra.mxu0 %v2336
      %2354 = vmatprep.subr.bf16.mxu0 0
      %2355 = vmatpush1.bf16.msra.mxu0 %v2337
      %2356 = vmatprep.subr.bf16.mxu0 0
      %2357 = vmatpush1.bf16.msra.mxu0 %v2338
      %2358 = vmatprep.subr.bf16.mxu0 0
      %2359 = vmatpush1.bf16.msra.mxu0 %v2339
      %2360 = vmatprep.subr.bf16.mxu0 0
      %2361 = vmatpush1.bf16.msra.mxu0 %v2340
      %2362 = vmatprep.subr.bf16.mxu0 0
      %2363 = vmatpush1.bf16.msra.mxu0 %v2341
      %2364 = vmatprep.subr.bf16.mxu0 0
      %2365 = vmatpush1.bf16.msra.mxu0 %v2342
      %2366 = vmatprep.subr.bf16.mxu0 0
      %2367 = vmatpush1.bf16.msra.mxu0 %v2343
      %2368 = vmatprep.subr.bf16.mxu0 0
      %2369 = vmatpush1.bf16.msra.mxu0 0
      %2370 = vmatprep.subr.bf16.mxu0 0
      %2371 = vmatpush1.bf16.msra.mxu0 0
      %2372 = vmatprep.subr.bf16.mxu0 0
      %2373 = vmatpush1.bf16.msra.mxu0 0
      %2374 = vmatprep.subr.bf16.mxu0 0
      %2375 = vmatpush1.bf16.msra.mxu0 0
      %2376 = vmatprep.subr.bf16.mxu0 0
      %2377 = vmatpush1.bf16.msra.mxu0 0
      %2378 = vmatprep.subr.bf16.mxu0 0
      %2379 = vmatpush1.bf16.msra.mxu0 0
      %2380 = vmatprep.subr.bf16.mxu0 0
      %2381 = vmatpush1.bf16.msra.mxu0 0
      %2382 = vmatprep.subr.bf16.mxu0 0
      %2383 = vmatpush1.bf16.msra.mxu0 0
      %2384 = vmatprep.mubr.bf16.mxu0 0
      %2385 = vmatmul.mubr.bf16.gmra.mrb[0].mxu0 %v2272
      %v2386 = vpop.f32.mrb[0].mxu0
      %v2387 = vadd.f32 0.0, %v2386
      %v2388 = vpop.f32.mrb[0].mxu0
      %v2389 = vpop.f32.mrb[0].mxu0
      %v2390 = vadd.f32 0.0, %v2389
      %v2391 = vpop.f32.mrb[0].mxu0
      %2392 = vmatprep.mubr.bf16.mxu0 0
      %2393 = vmatmul.mubr.bf16.gmra.mrb[0].mxu0 %v2273
      %v2394 = vpop.f32.mrb[0].mxu0
      %v2395 = vadd.f32 0.0, %v2394
      %v2396 = vpop.f32.mrb[0].mxu0
      %v2397 = vpop.f32.mrb[0].mxu0
      %v2398 = vadd.f32 0.0, %v2397
      %v2399 = vpop.f32.mrb[0].mxu0
      %2400 = vmatprep.mubr.bf16.mxu0 0
      %2401 = vmatmul.mubr.bf16.gmra.mrb[0].mxu0 %v2274
      %v2402 = vpop.f32.mrb[0].mxu0
      %v2403 = vadd.f32 0.0, %v2402
      %v2404 = vpop.f32.mrb[0].mxu0
      %v2405 = vpop.f32.mrb[0].mxu0
      %v2406 = vadd.f32 0.0, %v2405
      %v2407 = vpop.f32.mrb[0].mxu0
      %2408 = vmatprep.mubr.bf16.mxu0 0
      %2409 = vmatmul.mubr.bf16.gmra.mrb[0].mxu0 %v2275
      %v2410 = vpop.f32.mrb[0].mxu0
      %v2411 = vadd.f32 0.0, %v2410
      %v2412 = vpop.f32.mrb[0].mxu0
      %v2413 = vpop.f32.mrb[0].mxu0
      %v2414 = vadd.f32 0.0, %v2413
      %v2415 = vpop.f32.mrb[0].mxu0
      %2416 = vmatprep.mubr.bf16.mxu0 0
      %2417 = vmatmul.mubr.bf16.gmra.mrb[0].mxu0 %v2276
      %v2418 = vpop.f32.mrb[0].mxu0
      %v2419 = vadd.f32 0.0, %v2418
      %v2420 = vpop.f32.mrb[0].mxu0
      %v2421 = vpop.f32.mrb[0].mxu0
      %v2422 = vadd.f32 0.0, %v2421
      %v2423 = vpop.f32.mrb[0].mxu0
      %2424 = vmatprep.mubr.bf16.mxu0 0
      %2425 = vmatmul.mubr.bf16.gmra.mrb[0].mxu0 %v2277
      %v2426 = vpop.f32.mrb[0].mxu0
      %v2427 = vadd.f32 0.0, %v2426
      %v2428 = vpop.f32.mrb[0].mxu0
      %v2429 = vpop.f32.mrb[0].mxu0
      %v2430 = vadd.f32 0.0, %v2429
      %v2431 = vpop.f32.mrb[0].mxu0
      %2432 = vmatprep.mubr.bf16.mxu0 0
      %2433 = vmatmul.mubr.bf16.gmra.mrb[0].mxu0 %v2278
      %v2434 = vpop.f32.mrb[0].mxu0
      %v2435 = vadd.f32 0.0, %v2434
      %v2436 = vpop.f32.mrb[0].mxu0
      %v2437 = vpop.f32.mrb[0].mxu0
      %v2438 = vadd.f32 0.0, %v2437
      %v2439 = vpop.f32.mrb[0].mxu0
      %2440 = vmatprep.mubr.bf16.mxu0 0
      %2441 = vmatmul.mubr.bf16.gmra.mrb[0].mxu0 %v2279
      %v2442 = vpop.f32.mrb[0].mxu0
      %v2443 = vadd.f32 0.0, %v2442
      %v2444 = vpop.f32.mrb[0].mxu0
      %v2445 = vpop.f32.mrb[0].mxu0
      %v2446 = vadd.f32 0.0, %v2445
      %v2447 = vpop.f32.mrb[0].mxu0
      %2448 = vmatprep.mubr.bf16.mxu0 0
      %2449 = vmatmul.mubr.bf16.gmra.mrb[0].mxu0 %v2280
      %v2450 = vpop.f32.mrb[0].mxu0
      %v2451 = vadd.f32 0.0, %v2450
      %v2452 = vpop.f32.mrb[0].mxu0
      %v2453 = vpop.f32.mrb[0].mxu0
      %v2454 = vadd.f32 0.0, %v2453
      %v2455 = vpop.f32.mrb[0].mxu0
      %2456 = vmatprep.mubr.bf16.mxu0 0
      %2457 = vmatmul.mubr.bf16.gmra.mrb[0].mxu0 %v2281
      %v2458 = vpop.f32.mrb[0].mxu0
      %v2459 = vadd.f32 0.0, %v2458
      %v2460 = vpop.f32.mrb[0].mxu0
      %v2461 = vpop.f32.mrb[0].mxu0
      %v2462 = vadd.f32 0.0, %v2461
      %v2463 = vpop.f32.mrb[0].mxu0
      %2464 = vmatprep.mubr.bf16.mxu0 0
      %2465 = vmatmul.mubr.bf16.gmra.mrb[0].mxu0 %v2282
      %v2466 = vpop.f32.mrb[0].mxu0
      %v2467 = vadd.f32 0.0, %v2466
      %v2468 = vpop.f32.mrb[0].mxu0
      %v2469 = vpop.f32.mrb[0].mxu0
      %v2470 = vadd.f32 0.0, %v2469
      %v2471 = vpop.f32.mrb[0].mxu0
      %2472 = vmatprep.mubr.bf16.mxu0 0
      %2473 = vmatmul.mubr.bf16.gmra.mrb[0].mxu0 %v2283
      %v2474 = vpop.f32.mrb[0].mxu0
      %v2475 = vadd.f32 0.0, %v2474
      %v2476 = vpop.f32.mrb[0].mxu0
      %v2477 = vpop.f32.mrb[0].mxu0
      %v2478 = vadd.f32 0.0, %v2477
      %v2479 = vpop.f32.mrb[0].mxu0
      %2480 = vmatprep.mubr.bf16.mxu0 0
      %2481 = vmatmul.mubr.bf16.gmra.mrb[0].mxu0 %v2284
      %v2482 = vpop.f32.mrb[0].mxu0
      %v2483 = vadd.f32 0.0, %v2482
      %v2484 = vpop.f32.mrb[0].mxu0
      %v2485 = vpop.f32.mrb[0].mxu0
      %v2486 = vadd.f32 0.0, %v2485
      %v2487 = vpop.f32.mrb[0].mxu0
      %2488 = vmatprep.mubr.bf16.mxu0 0
      %2489 = vmatmul.mubr.bf16.gmra.mrb[0].mxu0 %v2285
      %v2490 = vpop.f32.mrb[0].mxu0
      %v2491 = vadd.f32 0.0, %v2490
      %v2492 = vpop.f32.mrb[0].mxu0
      %v2493 = vpop.f32.mrb[0].mxu0
      %v2494 = vadd.f32 0.0, %v2493
      %v2495 = vpop.f32.mrb[0].mxu0
      %2496 = vmatprep.mubr.bf16.mxu0 0
      %2497 = vmatmul.mubr.bf16.gmra.mrb[0].mxu0 %v2286
      %v2498 = vpop.f32.mrb[0].mxu0
      %v2499 = vadd.f32 0.0, %v2498
      %v2500 = vpop.f32.mrb[0].mxu0
      %v2501 = vpop.f32.mrb[0].mxu0
      %v2502 = vadd.f32 0.0, %v2501
      %v2503 = vpop.f32.mrb[0].mxu0
      %2504 = vmatprep.mubr.bf16.mxu0 0
      %2505 = vmatmul.mubr.bf16.gmra.mrb[0].mxu0 %v2287
      %v2506 = vpop.f32.mrb[0].mxu0
      %v2507 = vadd.f32 0.0, %v2506
      %v2508 = vpop.f32.mrb[0].mxu0
      %v2509 = vpop.f32.mrb[0].mxu0
      %v2510 = vadd.f32 0.0, %v2509
      %v2511 = vpop.f32.mrb[0].mxu0
      %2512 = vdwg.mxu0
      %v2513 = vadd.f32 %v2159, %v2387
      %v2514 = vadd.f32 %v2160, %v2390
      %v2515 = vadd.f32 %v2161, %v2395
      %v2516 = vadd.f32 %v2162, %v2398
      %v2517 = vadd.f32 %v2163, %v2403
      %v2518 = vadd.f32 %v2164, %v2406
      %v2519 = vadd.f32 %v2165, %v2411
      %v2520 = vadd.f32 %v2166, %v2414
      %v2521 = vadd.f32 %v2167, %v2419
      %v2522 = vadd.f32 %v2168, %v2422
      %v2523 = vadd.f32 %v2169, %v2427
      %v2524 = vadd.f32 %v2170, %v2430
      %v2525 = vadd.f32 %v2171, %v2435
      %v2526 = vadd.f32 %v2172, %v2438
      %v2527 = vadd.f32 %v2173, %v2443
      %v2528 = vadd.f32 %v2174, %v2446
      %v2529 = vadd.f32 %v2175, %v2451
      %v2530 = vadd.f32 %v2176, %v2454
      %v2531 = vadd.f32 %v2177, %v2459
      %v2532 = vadd.f32 %v2178, %v2462
      %v2533 = vadd.f32 %v2179, %v2467
      %v2534 = vadd.f32 %v2180, %v2470
      %v2535 = vadd.f32 %v2181, %v2475
      %v2536 = vadd.f32 %v2182, %v2478
      %v2537 = vadd.f32 %v2183, %v2483
      %v2538 = vadd.f32 %v2184, %v2486
      %v2539 = vadd.f32 %v2185, %v2491
      %v2540 = vadd.f32 %v2186, %v2494
      %v2541 = vadd.f32 %v2187, %v2499
      %v2542 = vadd.f32 %v2188, %v2502
      %v2543 = vadd.f32 %v2189, %v2507
      %v2544 = vadd.f32 %v2190, %v2510
      %2545 = vst [vmem:[#allocation2] sm:$0xff] %v2513
      %2546 = vst [vmem:[#allocation2 + $0x8] sm:$0xff] %v2514
      %2547 = vst [vmem:[#allocation2 + $0x10] sm:$0xff] %v2515
      %2548 = vst [vmem:[#allocation2 + $0x18] sm:$0xff] %v2516
      %2549 = vst [vmem:[#allocation2 + $0x20] sm:$0xff] %v2517
      %2550 = vst [vmem:[#allocation2 + $0x28] sm:$0xff] %v2518
      %2551 = vst [vmem:[#allocation2 + $0x30] sm:$0xff] %v2519
      %2552 = vst [vmem:[#allocation2 + $0x38] sm:$0xff] %v2520
      %2553 = vst [vmem:[#allocation2 + $0x40] sm:$0xff] %v2521
      %2554 = vst [vmem:[#allocation2 + $0x48] sm:$0xff] %v2522
      %2555 = vst [vmem:[#allocation2 + $0x50] sm:$0xff] %v2523
      %2556 = vst [vmem:[#allocation2 + $0x58] sm:$0xff] %v2524
      %2557 = vst [vmem:[#allocation2 + $0x60] sm:$0xff] %v2525
      %2558 = vst [vmem:[#allocation2 + $0x68] sm:$0xff] %v2526
      %2559 = vst [vmem:[#allocation2 + $0x70] sm:$0xff] %v2527
      %2560 = vst [vmem:[#allocation2 + $0x78] sm:$0xff] %v2528
      %2561 = vst [vmem:[#allocation2 + $0x80] sm:$0xff] %v2529
      %2562 = vst [vmem:[#allocation2 + $0x88] sm:$0xff] %v2530
      %2563 = vst [vmem:[#allocation2 + $0x90] sm:$0xff] %v2531
      %2564 = vst [vmem:[#allocation2 + $0x98] sm:$0xff] %v2532
      %2565 = vst [vmem:[#allocation2 + $0xa0] sm:$0xff] %v2533
      %2566 = vst [vmem:[#allocation2 + $0xa8] sm:$0xff] %v2534
      %2567 = vst [vmem:[#allocation2 + $0xb0] sm:$0xff] %v2535
      %2568 = vst [vmem:[#allocation2 + $0xb8] sm:$0xff] %v2536
      %2569 = vst [vmem:[#allocation2 + $0xc0] sm:$0xff] %v2537
      %2570 = vst [vmem:[#allocation2 + $0xc8] sm:$0xff] %v2538
      %2571 = vst [vmem:[#allocation2 + $0xd0] sm:$0xff] %v2539
      %2572 = vst [vmem:[#allocation2 + $0xd8] sm:$0xff] %v2540
      %2573 = vst [vmem:[#allocation2 + $0xe0] sm:$0xff] %v2541
      %2574 = vst [vmem:[#allocation2 + $0xe8] sm:$0xff] %v2542
      %2575 = vst [vmem:[#allocation2 + $0xf0] sm:$0xff] %v2543
      %2576 = vst [vmem:[#allocation2 + $0xf8] sm:$0xff] %v2544
      %v2577 = vld [vmem:[%s2126] sm:$0xf]
      %v2578 = vld [vmem:[%s2126 + $0x4] sm:$0xf]
      %v2579 = vld [vmem:[%s2126 + $0x8] sm:$0xf]
      %v2580 = vld [vmem:[%s2126 + $0xc] sm:$0xf]
      %v2581 = vld [vmem:[%s2126 + $0x10] sm:$0x1]
      %v2582 = vld [vmem:[%s2126 + $0x14] sm:$0xf]
      %v2583 = vld [vmem:[%s2126 + $0x18] sm:$0xf]
      %v2584 = vld [vmem:[%s2126 + $0x1c] sm:$0xf]
      %v2585 = vld [vmem:[%s2126 + $0x20] sm:$0xf]
      %v2586 = vld [vmem:[%s2126 + $0x24] sm:$0x1]
      %v2587 = vld [vmem:[%s2126 + $0x28] sm:$0xf]
      %v2588 = vld [vmem:[%s2126 + $0x2c] sm:$0xf]
      %v2589 = vld [vmem:[%s2126 + $0x30] sm:$0xf]
      %v2590 = vld [vmem:[%s2126 + $0x34] sm:$0xf]
      %v2591 = vld [vmem:[%s2126 + $0x38] sm:$0x1]
      %v2592 = vld [vmem:[%s2126 + $0x3c] sm:$0xf]
      %v2593 = vld [vmem:[%s2126 + $0x40] sm:$0xf]
      %v2594 = vld [vmem:[%s2126 + $0x44] sm:$0xf]
      %v2595 = vld [vmem:[%s2126 + $0x48] sm:$0xf]
      %v2596 = vld [vmem:[%s2126 + $0x4c] sm:$0x1]
      %v2597 = vld [vmem:[%s2126 + $0x50] sm:$0xf]
      %v2598 = vld [vmem:[%s2126 + $0x54] sm:$0xf]
      %v2599 = vld [vmem:[%s2126 + $0x58] sm:$0xf]
      %v2600 = vld [vmem:[%s2126 + $0x5c] sm:$0xf]
      %v2601 = vld [vmem:[%s2126 + $0x60] sm:$0x1]
      %v2602 = vld [vmem:[%s2126 + $0x64] sm:$0xf]
      %v2603 = vld [vmem:[%s2126 + $0x68] sm:$0xf]
      %v2604 = vld [vmem:[%s2126 + $0x6c] sm:$0xf]
      %v2605 = vld [vmem:[%s2126 + $0x70] sm:$0xf]
      %v2606 = vld [vmem:[%s2126 + $0x74] sm:$0x1]
      %v2607 = vld [vmem:[%s2126 + $0x78] sm:$0xf]
      %v2608 = vld [vmem:[%s2126 + $0x7c] sm:$0xf]
      %v2609 = vld [vmem:[%s2126 + $0x80] sm:$0xf]
      %v2610 = vld [vmem:[%s2126 + $0x84] sm:$0xf]
      %v2611 = vld [vmem:[%s2126 + $0x88] sm:$0x1]
      %v2612 = vld [vmem:[%s2126 + $0x8c] sm:$0xf]
      %v2613 = vld [vmem:[%s2126 + $0x90] sm:$0xf]
      %v2614 = vld [vmem:[%s2126 + $0x94] sm:$0xf]
      %v2615 = vld [vmem:[%s2126 + $0x98] sm:$0xf]
      %v2616 = vld [vmem:[%s2126 + $0x9c] sm:$0x1]
      %v2617 = vld [vmem:[#allocation2] sm:$0xff]
      %v2618 = vld [vmem:[#allocation2 + $0x8] sm:$0xff]
      %v2619 = vld [vmem:[#allocation2 + $0x10] sm:$0xff]
      %v2620 = vld [vmem:[#allocation2 + $0x18] sm:$0xff]
      %v2621 = vld [vmem:[#allocation2 + $0x20] sm:$0xff]
      %v2622 = vld [vmem:[#allocation2 + $0x28] sm:$0xff]
      %v2623 = vld [vmem:[#allocation2 + $0x30] sm:$0xff]
      %v2624 = vld [vmem:[#allocation2 + $0x38] sm:$0xff]
      %v2625 = vld [vmem:[#allocation2 + $0x40] sm:$0xff]
      %v2626 = vld [vmem:[#allocation2 + $0x48] sm:$0xff]
      %v2627 = vld [vmem:[#allocation2 + $0x50] sm:$0xff]
      %v2628 = vld [vmem:[#allocation2 + $0x58] sm:$0xff]
      %v2629 = vld [vmem:[#allocation2 + $0x60] sm:$0xff]
      %v2630 = vld [vmem:[#allocation2 + $0x68] sm:$0xff]
      %v2631 = vld [vmem:[#allocation2 + $0x70] sm:$0xff]
      %v2632 = vld [vmem:[#allocation2 + $0x78] sm:$0xff]
      %v2633 = vld [vmem:[#allocation2 + $0x80] sm:$0xff]
      %v2634 = vld [vmem:[#allocation2 + $0x88] sm:$0xff]
      %v2635 = vld [vmem:[#allocation2 + $0x90] sm:$0xff]
      %v2636 = vld [vmem:[#allocation2 + $0x98] sm:$0xff]
      %v2637 = vld [vmem:[#allocation2 + $0xa0] sm:$0xff]
      %v2638 = vld [vmem:[#allocation2 + $0xa8] sm:$0xff]
      %v2639 = vld [vmem:[#allocation2 + $0xb0] sm:$0xff]
      %v2640 = vld [vmem:[#allocation2 + $0xb8] sm:$0xff]
      %v2641 = vld [vmem:[#allocation2 + $0xc0] sm:$0xff]
      %v2642 = vld [vmem:[#allocation2 + $0xc8] sm:$0xff]
      %v2643 = vld [vmem:[#allocation2 + $0xd0] sm:$0xff]
      %v2644 = vld [vmem:[#allocation2 + $0xd8] sm:$0xff]
      %v2645 = vld [vmem:[#allocation2 + $0xe0] sm:$0xff]
      %v2646 = vld [vmem:[#allocation2 + $0xe8] sm:$0xff]
      %v2647 = vld [vmem:[#allocation2 + $0xf0] sm:$0xff]
      %v2648 = vld [vmem:[#allocation2 + $0xf8] sm:$0xff]
      %v2650 = vshrl.u32 %v2577, 16
      %v2652 = vrot.slane %v2650, 4
      %v2653 = vshll.u32 %v2577, 16
      %v2655 = vrot.slane %v2653, 5
      %v2656 = vor.u32 %v2652, %v2655
      %v2657 = vrot.slane %v2656, 4
      %v2659 = vshll.u32 %v2578, 16
      %v2661 = vrot.slane %v2659, 5
      %v2662 = vsel %vm843, %v2657, %v2661
      %v2663 = vshrl.u32 %v2578, 16
      %v2665 = vrot.slane %v2663, 4
      %v2666 = vor.u32 %v2665, %v2661
      %v2667 = vrot.slane %v2666, 4
      %v2669 = vshll.u32 %v2579, 16
      %v2671 = vrot.slane %v2669, 5
      %v2672 = vsel %vm843, %v2667, %v2671
      %v2673 = vshrl.u32 %v2579, 16
      %v2675 = vrot.slane %v2673, 4
      %v2676 = vor.u32 %v2675, %v2671
      %v2677 = vrot.slane %v2676, 4
      %v2679 = vshll.u32 %v2580, 16
      %v2681 = vrot.slane %v2679, 5
      %v2682 = vsel %vm843, %v2677, %v2681
      %v2683 = vshrl.u32 %v2580, 16
      %v2685 = vrot.slane %v2683, 4
      %v2686 = vor.u32 %v2685, %v2681
      %v2687 = vrot.slane %v2686, 4
      %v2689 = vshll.u32 %v2581, 16
      %v2691 = vrot.slane %v2689, 5
      %v2692 = vsel %vm843, %v2687, %v2691
      %v2694 = vshrl.u32 %v2582, 16
      %v2696 = vrot.slane %v2694, 4
      %v2697 = vshll.u32 %v2582, 16
      %v2699 = vrot.slane %v2697, 5
      %v2700 = vor.u32 %v2696, %v2699
      %v2701 = vrot.slane %v2700, 4
      %v2703 = vshll.u32 %v2583, 16
      %v2705 = vrot.slane %v2703, 5
      %v2706 = vsel %vm843, %v2701, %v2705
      %v2707 = vshrl.u32 %v2583, 16
      %v2709 = vrot.slane %v2707, 4
      %v2710 = vor.u32 %v2709, %v2705
      %v2711 = vrot.slane %v2710, 4
      %v2713 = vshll.u32 %v2584, 16
      %v2715 = vrot.slane %v2713, 5
      %v2716 = vsel %vm843, %v2711, %v2715
      %v2717 = vshrl.u32 %v2584, 16
      %v2719 = vrot.slane %v2717, 4
      %v2720 = vor.u32 %v2719, %v2715
      %v2721 = vrot.slane %v2720, 4
      %v2723 = vshll.u32 %v2585, 16
      %v2725 = vrot.slane %v2723, 5
      %v2726 = vsel %vm843, %v2721, %v2725
      %v2727 = vshrl.u32 %v2585, 16
      %v2729 = vrot.slane %v2727, 4
      %v2730 = vor.u32 %v2729, %v2725
      %v2731 = vrot.slane %v2730, 4
      %v2733 = vshll.u32 %v2586, 16
      %v2735 = vrot.slane %v2733, 5
      %v2736 = vsel %vm843, %v2731, %v2735
      %v2738 = vshrl.u32 %v2587, 16
      %v2740 = vrot.slane %v2738, 4
      %v2741 = vshll.u32 %v2587, 16
      %v2743 = vrot.slane %v2741, 5
      %v2744 = vor.u32 %v2740, %v2743
      %v2745 = vrot.slane %v2744, 4
      %v2747 = vshll.u32 %v2588, 16
      %v2749 = vrot.slane %v2747, 5
      %v2750 = vsel %vm843, %v2745, %v2749
      %v2751 = vshrl.u32 %v2588, 16
      %v2753 = vrot.slane %v2751, 4
      %v2754 = vor.u32 %v2753, %v2749
      %v2755 = vrot.slane %v2754, 4
      %v2757 = vshll.u32 %v2589, 16
      %v2759 = vrot.slane %v2757, 5
      %v2760 = vsel %vm843, %v2755, %v2759
      %v2761 = vshrl.u32 %v2589, 16
      %v2763 = vrot.slane %v2761, 4
      %v2764 = vor.u32 %v2763, %v2759
      %v2765 = vrot.slane %v2764, 4
      %v2767 = vshll.u32 %v2590, 16
      %v2769 = vrot.slane %v2767, 5
      %v2770 = vsel %vm843, %v2765, %v2769
      %v2771 = vshrl.u32 %v2590, 16
      %v2773 = vrot.slane %v2771, 4
      %v2774 = vor.u32 %v2773, %v2769
      %v2775 = vrot.slane %v2774, 4
      %v2777 = vshll.u32 %v2591, 16
      %v2779 = vrot.slane %v2777, 5
      %v2780 = vsel %vm843, %v2775, %v2779
      %v2782 = vshrl.u32 %v2592, 16
      %v2784 = vrot.slane %v2782, 4
      %v2785 = vshll.u32 %v2592, 16
      %v2787 = vrot.slane %v2785, 5
      %v2788 = vor.u32 %v2784, %v2787
      %v2789 = vrot.slane %v2788, 4
      %v2791 = vshll.u32 %v2593, 16
      %v2793 = vrot.slane %v2791, 5
      %v2794 = vsel %vm843, %v2789, %v2793
      %v2795 = vshrl.u32 %v2593, 16
      %v2797 = vrot.slane %v2795, 4
      %v2798 = vor.u32 %v2797, %v2793
      %v2799 = vrot.slane %v2798, 4
      %v2801 = vshll.u32 %v2594, 16
      %v2803 = vrot.slane %v2801, 5
      %v2804 = vsel %vm843, %v2799, %v2803
      %v2805 = vshrl.u32 %v2594, 16
      %v2807 = vrot.slane %v2805, 4
      %v2808 = vor.u32 %v2807, %v2803
      %v2809 = vrot.slane %v2808, 4
      %v2811 = vshll.u32 %v2595, 16
      %v2813 = vrot.slane %v2811, 5
      %v2814 = vsel %vm843, %v2809, %v2813
      %v2815 = vshrl.u32 %v2595, 16
      %v2817 = vrot.slane %v2815, 4
      %v2818 = vor.u32 %v2817, %v2813
      %v2819 = vrot.slane %v2818, 4
      %v2821 = vshll.u32 %v2596, 16
      %v2823 = vrot.slane %v2821, 5
      %v2824 = vsel %vm843, %v2819, %v2823
      %v2826 = vshrl.u32 %v2597, 16
      %v2828 = vrot.slane %v2826, 4
      %v2829 = vshll.u32 %v2597, 16
      %v2831 = vrot.slane %v2829, 5
      %v2832 = vor.u32 %v2828, %v2831
      %v2833 = vrot.slane %v2832, 4
      %v2835 = vshll.u32 %v2598, 16
      %v2837 = vrot.slane %v2835, 5
      %v2838 = vsel %vm843, %v2833, %v2837
      %v2839 = vshrl.u32 %v2598, 16
      %v2841 = vrot.slane %v2839, 4
      %v2842 = vor.u32 %v2841, %v2837
      %v2843 = vrot.slane %v2842, 4
      %v2845 = vshll.u32 %v2599, 16
      %v2847 = vrot.slane %v2845, 5
      %v2848 = vsel %vm843, %v2843, %v2847
      %v2849 = vshrl.u32 %v2599, 16
      %v2851 = vrot.slane %v2849, 4
      %v2852 = vor.u32 %v2851, %v2847
      %v2853 = vrot.slane %v2852, 4
      %v2855 = vshll.u32 %v2600, 16
      %v2857 = vrot.slane %v2855, 5
      %v2858 = vsel %vm843, %v2853, %v2857
      %v2859 = vshrl.u32 %v2600, 16
      %v2861 = vrot.slane %v2859, 4
      %v2862 = vor.u32 %v2861, %v2857
      %v2863 = vrot.slane %v2862, 4
      %v2865 = vshll.u32 %v2601, 16
      %v2867 = vrot.slane %v2865, 5
      %v2868 = vsel %vm843, %v2863, %v2867
      %v2870 = vshrl.u32 %v2602, 16
      %v2872 = vrot.slane %v2870, 4
      %v2873 = vshll.u32 %v2602, 16
      %v2875 = vrot.slane %v2873, 5
      %v2876 = vor.u32 %v2872, %v2875
      %v2877 = vrot.slane %v2876, 4
      %v2879 = vshll.u32 %v2603, 16
      %v2881 = vrot.slane %v2879, 5
      %v2882 = vsel %vm843, %v2877, %v2881
      %v2883 = vshrl.u32 %v2603, 16
      %v2885 = vrot.slane %v2883, 4
      %v2886 = vor.u32 %v2885, %v2881
      %v2887 = vrot.slane %v2886, 4
      %v2889 = vshll.u32 %v2604, 16
      %v2891 = vrot.slane %v2889, 5
      %v2892 = vsel %vm843, %v2887, %v2891
      %v2893 = vshrl.u32 %v2604, 16
      %v2895 = vrot.slane %v2893, 4
      %v2896 = vor.u32 %v2895, %v2891
      %v2897 = vrot.slane %v2896, 4
      %v2899 = vshll.u32 %v2605, 16
      %v2901 = vrot.slane %v2899, 5
      %v2902 = vsel %vm843, %v2897, %v2901
      %v2903 = vshrl.u32 %v2605, 16
      %v2905 = vrot.slane %v2903, 4
      %v2906 = vor.u32 %v2905, %v2901
      %v2907 = vrot.slane %v2906, 4
      %v2909 = vshll.u32 %v2606, 16
      %v2911 = vrot.slane %v2909, 5
      %v2912 = vsel %vm843, %v2907, %v2911
      %v2914 = vshrl.u32 %v2607, 16
      %v2916 = vrot.slane %v2914, 4
      %v2917 = vshll.u32 %v2607, 16
      %v2919 = vrot.slane %v2917, 5
      %v2920 = vor.u32 %v2916, %v2919
      %v2921 = vrot.slane %v2920, 4
      %v2923 = vshll.u32 %v2608, 16
      %v2925 = vrot.slane %v2923, 5
      %v2926 = vsel %vm843, %v2921, %v2925
      %v2927 = vshrl.u32 %v2608, 16
      %v2929 = vrot.slane %v2927, 4
      %v2930 = vor.u32 %v2929, %v2925
      %v2931 = vrot.slane %v2930, 4
      %v2933 = vshll.u32 %v2609, 16
      %v2935 = vrot.slane %v2933, 5
      %v2936 = vsel %vm843, %v2931, %v2935
      %v2937 = vshrl.u32 %v2609, 16
      %v2939 = vrot.slane %v2937, 4
      %v2940 = vor.u32 %v2939, %v2935
      %v2941 = vrot.slane %v2940, 4
      %v2943 = vshll.u32 %v2610, 16
      %v2945 = vrot.slane %v2943, 5
      %v2946 = vsel %vm843, %v2941, %v2945
      %v2947 = vshrl.u32 %v2610, 16
      %v2949 = vrot.slane %v2947, 4
      %v2950 = vor.u32 %v2949, %v2945
      %v2951 = vrot.slane %v2950, 4
      %v2953 = vshll.u32 %v2611, 16
      %v2955 = vrot.slane %v2953, 5
      %v2956 = vsel %vm843, %v2951, %v2955
      %v2958 = vshrl.u32 %v2612, 16
      %v2960 = vrot.slane %v2958, 4
      %v2961 = vshll.u32 %v2612, 16
      %v2963 = vrot.slane %v2961, 5
      %v2964 = vor.u32 %v2960, %v2963
      %v2965 = vrot.slane %v2964, 4
      %v2967 = vshll.u32 %v2613, 16
      %v2969 = vrot.slane %v2967, 5
      %v2970 = vsel %vm843, %v2965, %v2969
      %v2971 = vshrl.u32 %v2613, 16
      %v2973 = vrot.slane %v2971, 4
      %v2974 = vor.u32 %v2973, %v2969
      %v2975 = vrot.slane %v2974, 4
      %v2977 = vshll.u32 %v2614, 16
      %v2979 = vrot.slane %v2977, 5
      %v2980 = vsel %vm843, %v2975, %v2979
      %v2981 = vshrl.u32 %v2614, 16
      %v2983 = vrot.slane %v2981, 4
      %v2984 = vor.u32 %v2983, %v2979
      %v2985 = vrot.slane %v2984, 4
      %v2987 = vshll.u32 %v2615, 16
      %v2989 = vrot.slane %v2987, 5
      %v2990 = vsel %vm843, %v2985, %v2989
      %v2991 = vshrl.u32 %v2615, 16
      %v2993 = vrot.slane %v2991, 4
      %v2994 = vor.u32 %v2993, %v2989
      %v2995 = vrot.slane %v2994, 4
      %v2997 = vshll.u32 %v2616, 16
      %v2999 = vrot.slane %v2997, 5
      %v3000 = vsel %vm843, %v2995, %v2999
      %s3001 = scalar_lea.vmem %s262, 256
      %v3002 = vld [vmem:[%s3001] sm:$0xf]
      %v3003 = vld [vmem:[%s3001 + $0x4] sm:$0xf]
      %v3004 = vld [vmem:[%s3001 + $0x8] sm:$0xf]
      %v3005 = vld [vmem:[%s3001 + $0xc] sm:$0xf]
      %v3006 = vld [vmem:[%s3001 + $0x10] sm:$0xf]
      %v3007 = vld [vmem:[%s3001 + $0x14] sm:$0xf]
      %v3008 = vld [vmem:[%s3001 + $0x18] sm:$0xf]
      %v3009 = vld [vmem:[%s3001 + $0x1c] sm:$0xf]
      %v3010 = vld [vmem:[%s3001 + $0x20] sm:$0xf]
      %v3011 = vld [vmem:[%s3001 + $0x24] sm:$0xf]
      %v3012 = vld [vmem:[%s3001 + $0x28] sm:$0xf]
      %v3013 = vld [vmem:[%s3001 + $0x2c] sm:$0xf]
      %v3014 = vld [vmem:[%s3001 + $0x30] sm:$0xf]
      %v3015 = vld [vmem:[%s3001 + $0x34] sm:$0xf]
      %v3016 = vld [vmem:[%s3001 + $0x38] sm:$0xf]
      %v3017 = vld [vmem:[%s3001 + $0x3c] sm:$0xf]
      %v3018 = vunpack.c.l.b16 %v2662
      %v3019 = vunpack.c.l.b16 %v2672
      %v3020 = vunpack.c.l.b16 %v2682
      %v3021 = vunpack.c.l.b16 %v2692
      %v3022 = vunpack.c.l.b16 %v2706
      %v3023 = vunpack.c.l.b16 %v2716
      %v3024 = vunpack.c.l.b16 %v2726
      %v3025 = vunpack.c.l.b16 %v2736
      %v3026 = vunpack.c.l.b16 %v2750
      %v3027 = vunpack.c.l.b16 %v2760
      %v3028 = vunpack.c.l.b16 %v2770
      %v3029 = vunpack.c.l.b16 %v2780
      %v3030 = vunpack.c.l.b16 %v2794
      %v3031 = vunpack.c.l.b16 %v2804
      %v3032 = vunpack.c.l.b16 %v2814
      %v3033 = vunpack.c.l.b16 %v2824
      %v3034 = vunpack.c.l.b16 %v2838
      %v3035 = vunpack.c.l.b16 %v2848
      %v3036 = vunpack.c.l.b16 %v2858
      %v3037 = vunpack.c.l.b16 %v2868
      %v3038 = vunpack.c.l.b16 %v2882
      %v3039 = vunpack.c.l.b16 %v2892
      %v3040 = vunpack.c.l.b16 %v2902
      %v3041 = vunpack.c.l.b16 %v2912
      %v3042 = vunpack.c.l.b16 %v2926
      %v3043 = vunpack.c.l.b16 %v2936
      %v3044 = vunpack.c.l.b16 %v2946
      %v3045 = vunpack.c.l.b16 %v2956
      %v3046 = vunpack.c.l.b16 %v2970
      %v3047 = vunpack.c.l.b16 %v2980
      %v3048 = vunpack.c.l.b16 %v2990
      %v3049 = vunpack.c.l.b16 %v3000
      %v3050 = vpack.c.b16 %v3019, %v3018
      %v3051 = vpack.c.b16 %v3021, %v3020
      %v3052 = vpack.c.b16 %v3023, %v3022
      %v3053 = vpack.c.b16 %v3025, %v3024
      %v3054 = vpack.c.b16 %v3027, %v3026
      %v3055 = vpack.c.b16 %v3029, %v3028
      %v3056 = vpack.c.b16 %v3031, %v3030
      %v3057 = vpack.c.b16 %v3033, %v3032
      %v3058 = vpack.c.b16 %v3035, %v3034
      %v3059 = vpack.c.b16 %v3037, %v3036
      %v3060 = vpack.c.b16 %v3039, %v3038
      %v3061 = vpack.c.b16 %v3041, %v3040
      %v3062 = vpack.c.b16 %v3043, %v3042
      %v3063 = vpack.c.b16 %v3045, %v3044
      %v3064 = vpack.c.b16 %v3047, %v3046
      %v3065 = vpack.c.b16 %v3049, %v3048
      %v3098 = vunpack.c.l.b16 %v3002
      %v3099 = vunpack.c.l.b16 %v3003
      %v3100 = vunpack.c.l.b16 %v3004
      %v3101 = vunpack.c.l.b16 %v3005
      %v3102 = vunpack.c.l.b16 %v3006
      %v3103 = vunpack.c.l.b16 %v3007
      %v3104 = vunpack.c.l.b16 %v3008
      %v3105 = vunpack.c.l.b16 %v3009
      %v3106 = vunpack.c.l.b16 %v3010
      %v3107 = vunpack.c.l.b16 %v3011
      %v3108 = vunpack.c.l.b16 %v3012
      %v3109 = vunpack.c.l.b16 %v3013
      %v3110 = vunpack.c.l.b16 %v3014
      %v3111 = vunpack.c.l.b16 %v3015
      %v3112 = vunpack.c.l.b16 %v3016
      %v3113 = vunpack.c.l.b16 %v3017
      %v3114 = vpack.c.b16 %v3099, %v3098
      %v3115 = vpack.c.b16 %v3101, %v3100
      %v3116 = vpack.c.b16 %v3103, %v3102
      %v3117 = vpack.c.b16 %v3105, %v3104
      %v3118 = vpack.c.b16 %v3107, %v3106
      %v3119 = vpack.c.b16 %v3109, %v3108
      %v3120 = vpack.c.b16 %v3111, %v3110
      %v3121 = vpack.c.b16 %v3113, %v3112
      %3130 = vmatprep.subr.bf16.mxu0 0
      %3131 = vmatpush1.bf16.msra.mxu0 %v3114
      %3132 = vmatprep.subr.bf16.mxu0 0
      %3133 = vmatpush1.bf16.msra.mxu0 %v3115
      %3134 = vmatprep.subr.bf16.mxu0 0
      %3135 = vmatpush1.bf16.msra.mxu0 %v3116
      %3136 = vmatprep.subr.bf16.mxu0 0
      %3137 = vmatpush1.bf16.msra.mxu0 %v3117
      %3138 = vmatprep.subr.bf16.mxu0 0
      %3139 = vmatpush1.bf16.msra.mxu0 %v3118
      %3140 = vmatprep.subr.bf16.mxu0 0
      %3141 = vmatpush1.bf16.msra.mxu0 %v3119
      %3142 = vmatprep.subr.bf16.mxu0 0
      %3143 = vmatpush1.bf16.msra.mxu0 %v3120
      %3144 = vmatprep.subr.bf16.mxu0 0
      %3145 = vmatpush1.bf16.msra.mxu0 %v3121
      %3146 = vmatprep.subr.bf16.mxu0 0
      %3147 = vmatpush1.bf16.msra.mxu0 0
      %3148 = vmatprep.subr.bf16.mxu0 0
      %3149 = vmatpush1.bf16.msra.mxu0 0
      %3150 = vmatprep.subr.bf16.mxu0 0
      %3151 = vmatpush1.bf16.msra.mxu0 0
      %3152 = vmatprep.subr.bf16.mxu0 0
      %3153 = vmatpush1.bf16.msra.mxu0 0
      %3154 = vmatprep.subr.bf16.mxu0 0
      %3155 = vmatpush1.bf16.msra.mxu0 0
      %3156 = vmatprep.subr.bf16.mxu0 0
      %3157 = vmatpush1.bf16.msra.mxu0 0
      %3158 = vmatprep.subr.bf16.mxu0 0
      %3159 = vmatpush1.bf16.msra.mxu0 0
      %3160 = vmatprep.subr.bf16.mxu0 0
      %3161 = vmatpush1.bf16.msra.mxu0 0
      %3162 = vmatprep.mubr.bf16.mxu0 0
      %3163 = vmatmul.mubr.bf16.gmra.mrb[0].mxu0 %v3050
      %v3164 = vpop.f32.mrb[0].mxu0
      %v3165 = vadd.f32 0.0, %v3164
      %v3166 = vpop.f32.mrb[0].mxu0
      %v3167 = vpop.f32.mrb[0].mxu0
      %v3168 = vadd.f32 0.0, %v3167
      %v3169 = vpop.f32.mrb[0].mxu0
      %3170 = vmatprep.mubr.bf16.mxu0 0
      %3171 = vmatmul.mubr.bf16.gmra.mrb[0].mxu0 %v3051
      %v3172 = vpop.f32.mrb[0].mxu0
      %v3173 = vadd.f32 0.0, %v3172
      %v3174 = vpop.f32.mrb[0].mxu0
      %v3175 = vpop.f32.mrb[0].mxu0
      %v3176 = vadd.f32 0.0, %v3175
      %v3177 = vpop.f32.mrb[0].mxu0
      %3178 = vmatprep.mubr.bf16.mxu0 0
      %3179 = vmatmul.mubr.bf16.gmra.mrb[0].mxu0 %v3052
      %v3180 = vpop.f32.mrb[0].mxu0
      %v3181 = vadd.f32 0.0, %v3180
      %v3182 = vpop.f32.mrb[0].mxu0
      %v3183 = vpop.f32.mrb[0].mxu0
      %v3184 = vadd.f32 0.0, %v3183
      %v3185 = vpop.f32.mrb[0].mxu0
      %3186 = vmatprep.mubr.bf16.mxu0 0
      %3187 = vmatmul.mubr.bf16.gmra.mrb[0].mxu0 %v3053
      %v3188 = vpop.f32.mrb[0].mxu0
      %v3189 = vadd.f32 0.0, %v3188
      %v3190 = vpop.f32.mrb[0].mxu0
      %v3191 = vpop.f32.mrb[0].mxu0
      %v3192 = vadd.f32 0.0, %v3191
      %v3193 = vpop.f32.mrb[0].mxu0
      %3194 = vmatprep.mubr.bf16.mxu0 0
      %3195 = vmatmul.mubr.bf16.gmra.mrb[0].mxu0 %v3054
      %v3196 = vpop.f32.mrb[0].mxu0
      %v3197 = vadd.f32 0.0, %v3196
      %v3198 = vpop.f32.mrb[0].mxu0
      %v3199 = vpop.f32.mrb[0].mxu0
      %v3200 = vadd.f32 0.0, %v3199
      %v3201 = vpop.f32.mrb[0].mxu0
      %3202 = vmatprep.mubr.bf16.mxu0 0
      %3203 = vmatmul.mubr.bf16.gmra.mrb[0].mxu0 %v3055
      %v3204 = vpop.f32.mrb[0].mxu0
      %v3205 = vadd.f32 0.0, %v3204
      %v3206 = vpop.f32.mrb[0].mxu0
      %v3207 = vpop.f32.mrb[0].mxu0
      %v3208 = vadd.f32 0.0, %v3207
      %v3209 = vpop.f32.mrb[0].mxu0
      %3210 = vmatprep.mubr.bf16.mxu0 0
      %3211 = vmatmul.mubr.bf16.gmra.mrb[0].mxu0 %v3056
      %v3212 = vpop.f32.mrb[0].mxu0
      %v3213 = vadd.f32 0.0, %v3212
      %v3214 = vpop.f32.mrb[0].mxu0
      %v3215 = vpop.f32.mrb[0].mxu0
      %v3216 = vadd.f32 0.0, %v3215
      %v3217 = vpop.f32.mrb[0].mxu0
      %3218 = vmatprep.mubr.bf16.mxu0 0
      %3219 = vmatmul.mubr.bf16.gmra.mrb[0].mxu0 %v3057
      %v3220 = vpop.f32.mrb[0].mxu0
      %v3221 = vadd.f32 0.0, %v3220
      %v3222 = vpop.f32.mrb[0].mxu0
      %v3223 = vpop.f32.mrb[0].mxu0
      %v3224 = vadd.f32 0.0, %v3223
      %v3225 = vpop.f32.mrb[0].mxu0
      %3226 = vmatprep.mubr.bf16.mxu0 0
      %3227 = vmatmul.mubr.bf16.gmra.mrb[0].mxu0 %v3058
      %v3228 = vpop.f32.mrb[0].mxu0
      %v3229 = vadd.f32 0.0, %v3228
      %v3230 = vpop.f32.mrb[0].mxu0
      %v3231 = vpop.f32.mrb[0].mxu0
      %v3232 = vadd.f32 0.0, %v3231
      %v3233 = vpop.f32.mrb[0].mxu0
      %3234 = vmatprep.mubr.bf16.mxu0 0
      %3235 = vmatmul.mubr.bf16.gmra.mrb[0].mxu0 %v3059
      %v3236 = vpop.f32.mrb[0].mxu0
      %v3237 = vadd.f32 0.0, %v3236
      %v3238 = vpop.f32.mrb[0].mxu0
      %v3239 = vpop.f32.mrb[0].mxu0
      %v3240 = vadd.f32 0.0, %v3239
      %v3241 = vpop.f32.mrb[0].mxu0
      %3242 = vmatprep.mubr.bf16.mxu0 0
      %3243 = vmatmul.mubr.bf16.gmra.mrb[0].mxu0 %v3060
      %v3244 = vpop.f32.mrb[0].mxu0
      %v3245 = vadd.f32 0.0, %v3244
      %v3246 = vpop.f32.mrb[0].mxu0
      %v3247 = vpop.f32.mrb[0].mxu0
      %v3248 = vadd.f32 0.0, %v3247
      %v3249 = vpop.f32.mrb[0].mxu0
      %3250 = vmatprep.mubr.bf16.mxu0 0
      %3251 = vmatmul.mubr.bf16.gmra.mrb[0].mxu0 %v3061
      %v3252 = vpop.f32.mrb[0].mxu0
      %v3253 = vadd.f32 0.0, %v3252
      %v3254 = vpop.f32.mrb[0].mxu0
      %v3255 = vpop.f32.mrb[0].mxu0
      %v3256 = vadd.f32 0.0, %v3255
      %v3257 = vpop.f32.mrb[0].mxu0
      %3258 = vmatprep.mubr.bf16.mxu0 0
      %3259 = vmatmul.mubr.bf16.gmra.mrb[0].mxu0 %v3062
      %v3260 = vpop.f32.mrb[0].mxu0
      %v3261 = vadd.f32 0.0, %v3260
      %v3262 = vpop.f32.mrb[0].mxu0
      %v3263 = vpop.f32.mrb[0].mxu0
      %v3264 = vadd.f32 0.0, %v3263
      %v3265 = vpop.f32.mrb[0].mxu0
      %3266 = vmatprep.mubr.bf16.mxu0 0
      %3267 = vmatmul.mubr.bf16.gmra.mrb[0].mxu0 %v3063
      %v3268 = vpop.f32.mrb[0].mxu0
      %v3269 = vadd.f32 0.0, %v3268
      %v3270 = vpop.f32.mrb[0].mxu0
      %v3271 = vpop.f32.mrb[0].mxu0
      %v3272 = vadd.f32 0.0, %v3271
      %v3273 = vpop.f32.mrb[0].mxu0
      %3274 = vmatprep.mubr.bf16.mxu0 0
      %3275 = vmatmul.mubr.bf16.gmra.mrb[0].mxu0 %v3064
      %v3276 = vpop.f32.mrb[0].mxu0
      %v3277 = vadd.f32 0.0, %v3276
      %v3278 = vpop.f32.mrb[0].mxu0
      %v3279 = vpop.f32.mrb[0].mxu0
      %v3280 = vadd.f32 0.0, %v3279
      %v3281 = vpop.f32.mrb[0].mxu0
      %3282 = vmatprep.mubr.bf16.mxu0 0
      %3283 = vmatmul.mubr.bf16.gmra.mrb[0].mxu0 %v3065
      %v3284 = vpop.f32.mrb[0].mxu0
      %v3285 = vadd.f32 0.0, %v3284
      %v3286 = vpop.f32.mrb[0].mxu0
      %v3287 = vpop.f32.mrb[0].mxu0
      %v3288 = vadd.f32 0.0, %v3287
      %v3289 = vpop.f32.mrb[0].mxu0
      %3290 = vdwg.mxu0
      %v3291 = vadd.f32 %v2617, %v3165
      %v3292 = vadd.f32 %v2618, %v3168
      %v3293 = vadd.f32 %v2619, %v3173
      %v3294 = vadd.f32 %v2620, %v3176
      %v3295 = vadd.f32 %v2621, %v3181
      %v3296 = vadd.f32 %v2622, %v3184
      %v3297 = vadd.f32 %v2623, %v3189
      %v3298 = vadd.f32 %v2624, %v3192
      %v3299 = vadd.f32 %v2625, %v3197
      %v3300 = vadd.f32 %v2626, %v3200
      %v3301 = vadd.f32 %v2627, %v3205
      %v3302 = vadd.f32 %v2628, %v3208
      %v3303 = vadd.f32 %v2629, %v3213
      %v3304 = vadd.f32 %v2630, %v3216
      %v3305 = vadd.f32 %v2631, %v3221
      %v3306 = vadd.f32 %v2632, %v3224
      %v3307 = vadd.f32 %v2633, %v3229
      %v3308 = vadd.f32 %v2634, %v3232
      %v3309 = vadd.f32 %v2635, %v3237
      %v3310 = vadd.f32 %v2636, %v3240
      %v3311 = vadd.f32 %v2637, %v3245
      %v3312 = vadd.f32 %v2638, %v3248
      %v3313 = vadd.f32 %v2639, %v3253
      %v3314 = vadd.f32 %v2640, %v3256
      %v3315 = vadd.f32 %v2641, %v3261
      %v3316 = vadd.f32 %v2642, %v3264
      %v3317 = vadd.f32 %v2643, %v3269
      %v3318 = vadd.f32 %v2644, %v3272
      %v3319 = vadd.f32 %v2645, %v3277
      %v3320 = vadd.f32 %v2646, %v3280
      %v3321 = vadd.f32 %v2647, %v3285
      %v3322 = vadd.f32 %v2648, %v3288
      %3323 = vst [vmem:[#allocation2] sm:$0xff] %v3291
      %3324 = vst [vmem:[#allocation2 + $0x8] sm:$0xff] %v3292
      %3325 = vst [vmem:[#allocation2 + $0x10] sm:$0xff] %v3293
      %3326 = vst [vmem:[#allocation2 + $0x18] sm:$0xff] %v3294
      %3327 = vst [vmem:[#allocation2 + $0x20] sm:$0xff] %v3295
      %3328 = vst [vmem:[#allocation2 + $0x28] sm:$0xff] %v3296
      %3329 = vst [vmem:[#allocation2 + $0x30] sm:$0xff] %v3297
      %3330 = vst [vmem:[#allocation2 + $0x38] sm:$0xff] %v3298
      %3331 = vst [vmem:[#allocation2 + $0x40] sm:$0xff] %v3299
      %3332 = vst [vmem:[#allocation2 + $0x48] sm:$0xff] %v3300
      %3333 = vst [vmem:[#allocation2 + $0x50] sm:$0xff] %v3301
      %3334 = vst [vmem:[#allocation2 + $0x58] sm:$0xff] %v3302
      %3335 = vst [vmem:[#allocation2 + $0x60] sm:$0xff] %v3303
      %3336 = vst [vmem:[#allocation2 + $0x68] sm:$0xff] %v3304
      %3337 = vst [vmem:[#allocation2 + $0x70] sm:$0xff] %v3305
      %3338 = vst [vmem:[#allocation2 + $0x78] sm:$0xff] %v3306
      %3339 = vst [vmem:[#allocation2 + $0x80] sm:$0xff] %v3307
      %3340 = vst [vmem:[#allocation2 + $0x88] sm:$0xff] %v3308
      %3341 = vst [vmem:[#allocation2 + $0x90] sm:$0xff] %v3309
      %3342 = vst [vmem:[#allocation2 + $0x98] sm:$0xff] %v3310
      %3343 = vst [vmem:[#allocation2 + $0xa0] sm:$0xff] %v3311
      %3344 = vst [vmem:[#allocation2 + $0xa8] sm:$0xff] %v3312
      %3345 = vst [vmem:[#allocation2 + $0xb0] sm:$0xff] %v3313
      %3346 = vst [vmem:[#allocation2 + $0xb8] sm:$0xff] %v3314
      %3347 = vst [vmem:[#allocation2 + $0xc0] sm:$0xff] %v3315
      %3348 = vst [vmem:[#allocation2 + $0xc8] sm:$0xff] %v3316
      %3349 = vst [vmem:[#allocation2 + $0xd0] sm:$0xff] %v3317
      %3350 = vst [vmem:[#allocation2 + $0xd8] sm:$0xff] %v3318
      %3351 = vst [vmem:[#allocation2 + $0xe0] sm:$0xff] %v3319
      %3352 = vst [vmem:[#allocation2 + $0xe8] sm:$0xff] %v3320
      %3353 = vst [vmem:[#allocation2 + $0xf0] sm:$0xff] %v3321
      %3354 = vst [vmem:[#allocation2 + $0xf8] sm:$0xff] %v3322
      %v3355 = vld [vmem:[%s2126] sm:$0xe]
      %v3356 = vld [vmem:[%s2126 + $0x4] sm:$0xf]
      %v3357 = vld [vmem:[%s2126 + $0x8] sm:$0xf]
      %v3358 = vld [vmem:[%s2126 + $0xc] sm:$0xf]
      %v3359 = vld [vmem:[%s2126 + $0x10] sm:$0x1]
      %v3360 = vld [vmem:[%s2126 + $0x14] sm:$0xe]
      %v3361 = vld [vmem:[%s2126 + $0x18] sm:$0xf]
      %v3362 = vld [vmem:[%s2126 + $0x1c] sm:$0xf]
      %v3363 = vld [vmem:[%s2126 + $0x20] sm:$0xf]
      %v3364 = vld [vmem:[%s2126 + $0x24] sm:$0x1]
      %v3365 = vld [vmem:[%s2126 + $0x28] sm:$0xe]
      %v3366 = vld [vmem:[%s2126 + $0x2c] sm:$0xf]
      %v3367 = vld [vmem:[%s2126 + $0x30] sm:$0xf]
      %v3368 = vld [vmem:[%s2126 + $0x34] sm:$0xf]
      %v3369 = vld [vmem:[%s2126 + $0x38] sm:$0x1]
      %v3370 = vld [vmem:[%s2126 + $0x3c] sm:$0xe]
      %v3371 = vld [vmem:[%s2126 + $0x40] sm:$0xf]
      %v3372 = vld [vmem:[%s2126 + $0x44] sm:$0xf]
      %v3373 = vld [vmem:[%s2126 + $0x48] sm:$0xf]
      %v3374 = vld [vmem:[%s2126 + $0x4c] sm:$0x1]
      %v3375 = vld [vmem:[%s2126 + $0x50] sm:$0xe]
      %v3376 = vld [vmem:[%s2126 + $0x54] sm:$0xf]
      %v3377 = vld [vmem:[%s2126 + $0x58] sm:$0xf]
      %v3378 = vld [vmem:[%s2126 + $0x5c] sm:$0xf]
      %v3379 = vld [vmem:[%s2126 + $0x60] sm:$0x1]
      %v3380 = vld [vmem:[%s2126 + $0x64] sm:$0xe]
      %v3381 = vld [vmem:[%s2126 + $0x68] sm:$0xf]
      %v3382 = vld [vmem:[%s2126 + $0x6c] sm:$0xf]
      %v3383 = vld [vmem:[%s2126 + $0x70] sm:$0xf]
      %v3384 = vld [vmem:[%s2126 + $0x74] sm:$0x1]
      %v3385 = vld [vmem:[%s2126 + $0x78] sm:$0xe]
      %v3386 = vld [vmem:[%s2126 + $0x7c] sm:$0xf]
      %v3387 = vld [vmem:[%s2126 + $0x80] sm:$0xf]
      %v3388 = vld [vmem:[%s2126 + $0x84] sm:$0xf]
      %v3389 = vld [vmem:[%s2126 + $0x88] sm:$0x1]
      %v3390 = vld [vmem:[%s2126 + $0x8c] sm:$0xe]
      %v3391 = vld [vmem:[%s2126 + $0x90] sm:$0xf]
      %v3392 = vld [vmem:[%s2126 + $0x94] sm:$0xf]
      %v3393 = vld [vmem:[%s2126 + $0x98] sm:$0xf]
      %v3394 = vld [vmem:[%s2126 + $0x9c] sm:$0x1]
      %v3395 = vld [vmem:[#allocation2] sm:$0xff]
      %v3396 = vld [vmem:[#allocation2 + $0x8] sm:$0xff]
      %v3397 = vld [vmem:[#allocation2 + $0x10] sm:$0xff]
      %v3398 = vld [vmem:[#allocation2 + $0x18] sm:$0xff]
      %v3399 = vld [vmem:[#allocation2 + $0x20] sm:$0xff]
      %v3400 = vld [vmem:[#allocation2 + $0x28] sm:$0xff]
      %v3401 = vld [vmem:[#allocation2 + $0x30] sm:$0xff]
      %v3402 = vld [vmem:[#allocation2 + $0x38] sm:$0xff]
      %v3403 = vld [vmem:[#allocation2 + $0x40] sm:$0xff]
      %v3404 = vld [vmem:[#allocation2 + $0x48] sm:$0xff]
      %v3405 = vld [vmem:[#allocation2 + $0x50] sm:$0xff]
      %v3406 = vld [vmem:[#allocation2 + $0x58] sm:$0xff]
      %v3407 = vld [vmem:[#allocation2 + $0x60] sm:$0xff]
      %v3408 = vld [vmem:[#allocation2 + $0x68] sm:$0xff]
      %v3409 = vld [vmem:[#allocation2 + $0x70] sm:$0xff]
      %v3410 = vld [vmem:[#allocation2 + $0x78] sm:$0xff]
      %v3411 = vld [vmem:[#allocation2 + $0x80] sm:$0xff]
      %v3412 = vld [vmem:[#allocation2 + $0x88] sm:$0xff]
      %v3413 = vld [vmem:[#allocation2 + $0x90] sm:$0xff]
      %v3414 = vld [vmem:[#allocation2 + $0x98] sm:$0xff]
      %v3415 = vld [vmem:[#allocation2 + $0xa0] sm:$0xff]
      %v3416 = vld [vmem:[#allocation2 + $0xa8] sm:$0xff]
      %v3417 = vld [vmem:[#allocation2 + $0xb0] sm:$0xff]
      %v3418 = vld [vmem:[#allocation2 + $0xb8] sm:$0xff]
      %v3419 = vld [vmem:[#allocation2 + $0xc0] sm:$0xff]
      %v3420 = vld [vmem:[#allocation2 + $0xc8] sm:$0xff]
      %v3421 = vld [vmem:[#allocation2 + $0xd0] sm:$0xff]
      %v3422 = vld [vmem:[#allocation2 + $0xd8] sm:$0xff]
      %v3423 = vld [vmem:[#allocation2 + $0xe0] sm:$0xff]
      %v3424 = vld [vmem:[#allocation2 + $0xe8] sm:$0xff]
      %v3425 = vld [vmem:[#allocation2 + $0xf0] sm:$0xff]
      %v3426 = vld [vmem:[#allocation2 + $0xf8] sm:$0xff]
      %v3467 = vrot.slane %v3355, 5
      %v3468 = vrot.slane %v3467, 4
      %v3469 = vrot.slane %v3356, 5
      %v3470 = vsel %vm1664, %v3468, %v3469
      %v3471 = vrot.slane %v3469, 4
      %v3472 = vrot.slane %v3357, 5
      %v3473 = vsel %vm1664, %v3471, %v3472
      %v3474 = vrot.slane %v3472, 4
      %v3475 = vrot.slane %v3358, 5
      %v3476 = vsel %vm1664, %v3474, %v3475
      %v3477 = vrot.slane %v3475, 4
      %v3478 = vrot.slane %v3359, 5
      %v3479 = vsel %vm1664, %v3477, %v3478
      %v3480 = vrot.slane %v3360, 5
      %v3481 = vrot.slane %v3480, 4
      %v3482 = vrot.slane %v3361, 5
      %v3483 = vsel %vm1664, %v3481, %v3482
      %v3484 = vrot.slane %v3482, 4
      %v3485 = vrot.slane %v3362, 5
      %v3486 = vsel %vm1664, %v3484, %v3485
      %v3487 = vrot.slane %v3485, 4
      %v3488 = vrot.slane %v3363, 5
      %v3489 = vsel %vm1664, %v3487, %v3488
      %v3490 = vrot.slane %v3488, 4
      %v3491 = vrot.slane %v3364, 5
      %v3492 = vsel %vm1664, %v3490, %v3491
      %v3493 = vrot.slane %v3365, 5
      %v3494 = vrot.slane %v3493, 4
      %v3495 = vrot.slane %v3366, 5
      %v3496 = vsel %vm1664, %v3494, %v3495
      %v3497 = vrot.slane %v3495, 4
      %v3498 = vrot.slane %v3367, 5
      %v3499 = vsel %vm1664, %v3497, %v3498
      %v3500 = vrot.slane %v3498, 4
      %v3501 = vrot.slane %v3368, 5
      %v3502 = vsel %vm1664, %v3500, %v3501
      %v3503 = vrot.slane %v3501, 4
      %v3504 = vrot.slane %v3369, 5
      %v3505 = vsel %vm1664, %v3503, %v3504
      %v3506 = vrot.slane %v3370, 5
      %v3507 = vrot.slane %v3506, 4
      %v3508 = vrot.slane %v3371, 5
      %v3509 = vsel %vm1664, %v3507, %v3508
      %v3510 = vrot.slane %v3508, 4
      %v3511 = vrot.slane %v3372, 5
      %v3512 = vsel %vm1664, %v3510, %v3511
      %v3513 = vrot.slane %v3511, 4
      %v3514 = vrot.slane %v3373, 5
      %v3515 = vsel %vm1664, %v3513, %v3514
      %v3516 = vrot.slane %v3514, 4
      %v3517 = vrot.slane %v3374, 5
      %v3518 = vsel %vm1664, %v3516, %v3517
      %v3519 = vrot.slane %v3375, 5
      %v3520 = vrot.slane %v3519, 4
      %v3521 = vrot.slane %v3376, 5
      %v3522 = vsel %vm1664, %v3520, %v3521
      %v3523 = vrot.slane %v3521, 4
      %v3524 = vrot.slane %v3377, 5
      %v3525 = vsel %vm1664, %v3523, %v3524
      %v3526 = vrot.slane %v3524, 4
      %v3527 = vrot.slane %v3378, 5
      %v3528 = vsel %vm1664, %v3526, %v3527
      %v3529 = vrot.slane %v3527, 4
      %v3530 = vrot.slane %v3379, 5
      %v3531 = vsel %vm1664, %v3529, %v3530
      %v3532 = vrot.slane %v3380, 5
      %v3533 = vrot.slane %v3532, 4
      %v3534 = vrot.slane %v3381, 5
      %v3535 = vsel %vm1664, %v3533, %v3534
      %v3536 = vrot.slane %v3534, 4
      %v3537 = vrot.slane %v3382, 5
      %v3538 = vsel %vm1664, %v3536, %v3537
      %v3539 = vrot.slane %v3537, 4
      %v3540 = vrot.slane %v3383, 5
      %v3541 = vsel %vm1664, %v3539, %v3540
      %v3542 = vrot.slane %v3540, 4
      %v3543 = vrot.slane %v3384, 5
      %v3544 = vsel %vm1664, %v3542, %v3543
      %v3545 = vrot.slane %v3385, 5
      %v3546 = vrot.slane %v3545, 4
      %v3547 = vrot.slane %v3386, 5
      %v3548 = vsel %vm1664, %v3546, %v3547
      %v3549 = vrot.slane %v3547, 4
      %v3550 = vrot.slane %v3387, 5
      %v3551 = vsel %vm1664, %v3549, %v3550
      %v3552 = vrot.slane %v3550, 4
      %v3553 = vrot.slane %v3388, 5
      %v3554 = vsel %vm1664, %v3552, %v3553
      %v3555 = vrot.slane %v3553, 4
      %v3556 = vrot.slane %v3389, 5
      %v3557 = vsel %vm1664, %v3555, %v3556
      %v3558 = vrot.slane %v3390, 5
      %v3559 = vrot.slane %v3558, 4
      %v3560 = vrot.slane %v3391, 5
      %v3561 = vsel %vm1664, %v3559, %v3560
      %v3562 = vrot.slane %v3560, 4
      %v3563 = vrot.slane %v3392, 5
      %v3564 = vsel %vm1664, %v3562, %v3563
      %v3565 = vrot.slane %v3563, 4
      %v3566 = vrot.slane %v3393, 5
      %v3567 = vsel %vm1664, %v3565, %v3566
      %v3568 = vrot.slane %v3566, 4
      %v3569 = vrot.slane %v3394, 5
      %v3570 = vsel %vm1664, %v3568, %v3569
      %s3571 = scalar_lea.vmem %s262, 320
      %v3572 = vld [vmem:[%s3571] sm:$0xf]
      %v3573 = vld [vmem:[%s3571 + $0x4] sm:$0xf]
      %v3574 = vld [vmem:[%s3571 + $0x8] sm:$0xf]
      %v3575 = vld [vmem:[%s3571 + $0xc] sm:$0xf]
      %v3576 = vld [vmem:[%s3571 + $0x10] sm:$0xf]
      %v3577 = vld [vmem:[%s3571 + $0x14] sm:$0xf]
      %v3578 = vld [vmem:[%s3571 + $0x18] sm:$0xf]
      %v3579 = vld [vmem:[%s3571 + $0x1c] sm:$0xf]
      %v3580 = vld [vmem:[%s3571 + $0x20] sm:$0xf]
      %v3581 = vld [vmem:[%s3571 + $0x24] sm:$0xf]
      %v3582 = vld [vmem:[%s3571 + $0x28] sm:$0xf]
      %v3583 = vld [vmem:[%s3571 + $0x2c] sm:$0xf]
      %v3584 = vld [vmem:[%s3571 + $0x30] sm:$0xf]
      %v3585 = vld [vmem:[%s3571 + $0x34] sm:$0xf]
      %v3586 = vld [vmem:[%s3571 + $0x38] sm:$0xf]
      %v3587 = vld [vmem:[%s3571 + $0x3c] sm:$0xf]
      %v3588 = vunpack.c.l.b16 %v3470
      %v3589 = vunpack.c.l.b16 %v3473
      %v3590 = vunpack.c.l.b16 %v3476
      %v3591 = vunpack.c.l.b16 %v3479
      %v3592 = vunpack.c.l.b16 %v3483
      %v3593 = vunpack.c.l.b16 %v3486
      %v3594 = vunpack.c.l.b16 %v3489
      %v3595 = vunpack.c.l.b16 %v3492
      %v3596 = vunpack.c.l.b16 %v3496
      %v3597 = vunpack.c.l.b16 %v3499
      %v3598 = vunpack.c.l.b16 %v3502
      %v3599 = vunpack.c.l.b16 %v3505
      %v3600 = vunpack.c.l.b16 %v3509
      %v3601 = vunpack.c.l.b16 %v3512
      %v3602 = vunpack.c.l.b16 %v3515
      %v3603 = vunpack.c.l.b16 %v3518
      %v3604 = vunpack.c.l.b16 %v3522
      %v3605 = vunpack.c.l.b16 %v3525
      %v3606 = vunpack.c.l.b16 %v3528
      %v3607 = vunpack.c.l.b16 %v3531
      %v3608 = vunpack.c.l.b16 %v3535
      %v3609 = vunpack.c.l.b16 %v3538
      %v3610 = vunpack.c.l.b16 %v3541
      %v3611 = vunpack.c.l.b16 %v3544
      %v3612 = vunpack.c.l.b16 %v3548
      %v3613 = vunpack.c.l.b16 %v3551
      %v3614 = vunpack.c.l.b16 %v3554
      %v3615 = vunpack.c.l.b16 %v3557
      %v3616 = vunpack.c.l.b16 %v3561
      %v3617 = vunpack.c.l.b16 %v3564
      %v3618 = vunpack.c.l.b16 %v3567
      %v3619 = vunpack.c.l.b16 %v3570
      %v3620 = vpack.c.b16 %v3589, %v3588
      %v3621 = vpack.c.b16 %v3591, %v3590
      %v3622 = vpack.c.b16 %v3593, %v3592
      %v3623 = vpack.c.b16 %v3595, %v3594
      %v3624 = vpack.c.b16 %v3597, %v3596
      %v3625 = vpack.c.b16 %v3599, %v3598
      %v3626 = vpack.c.b16 %v3601, %v3600
      %v3627 = vpack.c.b16 %v3603, %v3602
      %v3628 = vpack.c.b16 %v3605, %v3604
      %v3629 = vpack.c.b16 %v3607, %v3606
      %v3630 = vpack.c.b16 %v3609, %v3608
      %v3631 = vpack.c.b16 %v3611, %v3610
      %v3632 = vpack.c.b16 %v3613, %v3612
      %v3633 = vpack.c.b16 %v3615, %v3614
      %v3634 = vpack.c.b16 %v3617, %v3616
      %v3635 = vpack.c.b16 %v3619, %v3618
      %v3668 = vunpack.c.l.b16 %v3572
      %v3669 = vunpack.c.l.b16 %v3573
      %v3670 = vunpack.c.l.b16 %v3574
      %v3671 = vunpack.c.l.b16 %v3575
      %v3672 = vunpack.c.l.b16 %v3576
      %v3673 = vunpack.c.l.b16 %v3577
      %v3674 = vunpack.c.l.b16 %v3578
      %v3675 = vunpack.c.l.b16 %v3579
      %v3676 = vunpack.c.l.b16 %v3580
      %v3677 = vunpack.c.l.b16 %v3581
      %v3678 = vunpack.c.l.b16 %v3582
      %v3679 = vunpack.c.l.b16 %v3583
      %v3680 = vunpack.c.l.b16 %v3584
      %v3681 = vunpack.c.l.b16 %v3585
      %v3682 = vunpack.c.l.b16 %v3586
      %v3683 = vunpack.c.l.b16 %v3587
      %v3684 = vpack.c.b16 %v3669, %v3668
      %v3685 = vpack.c.b16 %v3671, %v3670
      %v3686 = vpack.c.b16 %v3673, %v3672
      %v3687 = vpack.c.b16 %v3675, %v3674
      %v3688 = vpack.c.b16 %v3677, %v3676
      %v3689 = vpack.c.b16 %v3679, %v3678
      %v3690 = vpack.c.b16 %v3681, %v3680
      %v3691 = vpack.c.b16 %v3683, %v3682
      %3700 = vmatprep.subr.bf16.mxu0 0
      %3701 = vmatpush1.bf16.msra.mxu0 %v3684
      %3702 = vmatprep.subr.bf16.mxu0 0
      %3703 = vmatpush1.bf16.msra.mxu0 %v3685
      %3704 = vmatprep.subr.bf16.mxu0 0
      %3705 = vmatpush1.bf16.msra.mxu0 %v3686
      %3706 = vmatprep.subr.bf16.mxu0 0
      %3707 = vmatpush1.bf16.msra.mxu0 %v3687
      %3708 = vmatprep.subr.bf16.mxu0 0
      %3709 = vmatpush1.bf16.msra.mxu0 %v3688
      %3710 = vmatprep.subr.bf16.mxu0 0
      %3711 = vmatpush1.bf16.msra.mxu0 %v3689
      %3712 = vmatprep.subr.bf16.mxu0 0
      %3713 = vmatpush1.bf16.msra.mxu0 %v3690
      %3714 = vmatprep.subr.bf16.mxu0 0
      %3715 = vmatpush1.bf16.msra.mxu0 %v3691
      %3716 = vmatprep.subr.bf16.mxu0 0
      %3717 = vmatpush1.bf16.msra.mxu0 0
      %3718 = vmatprep.subr.bf16.mxu0 0
      %3719 = vmatpush1.bf16.msra.mxu0 0
      %3720 = vmatprep.subr.bf16.mxu0 0
      %3721 = vmatpush1.bf16.msra.mxu0 0
      %3722 = vmatprep.subr.bf16.mxu0 0
      %3723 = vmatpush1.bf16.msra.mxu0 0
      %3724 = vmatprep.subr.bf16.mxu0 0
      %3725 = vmatpush1.bf16.msra.mxu0 0
      %3726 = vmatprep.subr.bf16.mxu0 0
      %3727 = vmatpush1.bf16.msra.mxu0 0
      %3728 = vmatprep.subr.bf16.mxu0 0
      %3729 = vmatpush1.bf16.msra.mxu0 0
      %3730 = vmatprep.subr.bf16.mxu0 0
      %3731 = vmatpush1.bf16.msra.mxu0 0
      %3732 = vmatprep.mubr.bf16.mxu0 0
      %3733 = vmatmul.mubr.bf16.gmra.mrb[0].mxu0 %v3620
      %v3734 = vpop.f32.mrb[0].mxu0
      %v3735 = vadd.f32 0.0, %v3734
      %v3736 = vpop.f32.mrb[0].mxu0
      %v3737 = vpop.f32.mrb[0].mxu0
      %v3738 = vadd.f32 0.0, %v3737
      %v3739 = vpop.f32.mrb[0].mxu0
      %3740 = vmatprep.mubr.bf16.mxu0 0
      %3741 = vmatmul.mubr.bf16.gmra.mrb[0].mxu0 %v3621
      %v3742 = vpop.f32.mrb[0].mxu0
      %v3743 = vadd.f32 0.0, %v3742
      %v3744 = vpop.f32.mrb[0].mxu0
      %v3745 = vpop.f32.mrb[0].mxu0
      %v3746 = vadd.f32 0.0, %v3745
      %v3747 = vpop.f32.mrb[0].mxu0
      %3748 = vmatprep.mubr.bf16.mxu0 0
      %3749 = vmatmul.mubr.bf16.gmra.mrb[0].mxu0 %v3622
      %v3750 = vpop.f32.mrb[0].mxu0
      %v3751 = vadd.f32 0.0, %v3750
      %v3752 = vpop.f32.mrb[0].mxu0
      %v3753 = vpop.f32.mrb[0].mxu0
      %v3754 = vadd.f32 0.0, %v3753
      %v3755 = vpop.f32.mrb[0].mxu0
      %3756 = vmatprep.mubr.bf16.mxu0 0
      %3757 = vmatmul.mubr.bf16.gmra.mrb[0].mxu0 %v3623
      %v3758 = vpop.f32.mrb[0].mxu0
      %v3759 = vadd.f32 0.0, %v3758
      %v3760 = vpop.f32.mrb[0].mxu0
      %v3761 = vpop.f32.mrb[0].mxu0
      %v3762 = vadd.f32 0.0, %v3761
      %v3763 = vpop.f32.mrb[0].mxu0
      %3764 = vmatprep.mubr.bf16.mxu0 0
      %3765 = vmatmul.mubr.bf16.gmra.mrb[0].mxu0 %v3624
      %v3766 = vpop.f32.mrb[0].mxu0
      %v3767 = vadd.f32 0.0, %v3766
      %v3768 = vpop.f32.mrb[0].mxu0
      %v3769 = vpop.f32.mrb[0].mxu0
      %v3770 = vadd.f32 0.0, %v3769
      %v3771 = vpop.f32.mrb[0].mxu0
      %3772 = vmatprep.mubr.bf16.mxu0 0
      %3773 = vmatmul.mubr.bf16.gmra.mrb[0].mxu0 %v3625
      %v3774 = vpop.f32.mrb[0].mxu0
      %v3775 = vadd.f32 0.0, %v3774
      %v3776 = vpop.f32.mrb[0].mxu0
      %v3777 = vpop.f32.mrb[0].mxu0
      %v3778 = vadd.f32 0.0, %v3777
      %v3779 = vpop.f32.mrb[0].mxu0
      %3780 = vmatprep.mubr.bf16.mxu0 0
      %3781 = vmatmul.mubr.bf16.gmra.mrb[0].mxu0 %v3626
      %v3782 = vpop.f32.mrb[0].mxu0
      %v3783 = vadd.f32 0.0, %v3782
      %v3784 = vpop.f32.mrb[0].mxu0
      %v3785 = vpop.f32.mrb[0].mxu0
      %v3786 = vadd.f32 0.0, %v3785
      %v3787 = vpop.f32.mrb[0].mxu0
      %3788 = vmatprep.mubr.bf16.mxu0 0
      %3789 = vmatmul.mubr.bf16.gmra.mrb[0].mxu0 %v3627
      %v3790 = vpop.f32.mrb[0].mxu0
      %v3791 = vadd.f32 0.0, %v3790
      %v3792 = vpop.f32.mrb[0].mxu0
      %v3793 = vpop.f32.mrb[0].mxu0
      %v3794 = vadd.f32 0.0, %v3793
      %v3795 = vpop.f32.mrb[0].mxu0
      %3796 = vmatprep.mubr.bf16.mxu0 0
      %3797 = vmatmul.mubr.bf16.gmra.mrb[0].mxu0 %v3628
      %v3798 = vpop.f32.mrb[0].mxu0
      %v3799 = vadd.f32 0.0, %v3798
      %v3800 = vpop.f32.mrb[0].mxu0
      %v3801 = vpop.f32.mrb[0].mxu0
      %v3802 = vadd.f32 0.0, %v3801
      %v3803 = vpop.f32.mrb[0].mxu0
      %3804 = vmatprep.mubr.bf16.mxu0 0
      %3805 = vmatmul.mubr.bf16.gmra.mrb[0].mxu0 %v3629
      %v3806 = vpop.f32.mrb[0].mxu0
      %v3807 = vadd.f32 0.0, %v3806
      %v3808 = vpop.f32.mrb[0].mxu0
      %v3809 = vpop.f32.mrb[0].mxu0
      %v3810 = vadd.f32 0.0, %v3809
      %v3811 = vpop.f32.mrb[0].mxu0
      %3812 = vmatprep.mubr.bf16.mxu0 0
      %3813 = vmatmul.mubr.bf16.gmra.mrb[0].mxu0 %v3630
      %v3814 = vpop.f32.mrb[0].mxu0
      %v3815 = vadd.f32 0.0, %v3814
      %v3816 = vpop.f32.mrb[0].mxu0
      %v3817 = vpop.f32.mrb[0].mxu0
      %v3818 = vadd.f32 0.0, %v3817
      %v3819 = vpop.f32.mrb[0].mxu0
      %3820 = vmatprep.mubr.bf16.mxu0 0
      %3821 = vmatmul.mubr.bf16.gmra.mrb[0].mxu0 %v3631
      %v3822 = vpop.f32.mrb[0].mxu0
      %v3823 = vadd.f32 0.0, %v3822
      %v3824 = vpop.f32.mrb[0].mxu0
      %v3825 = vpop.f32.mrb[0].mxu0
      %v3826 = vadd.f32 0.0, %v3825
      %v3827 = vpop.f32.mrb[0].mxu0
      %3828 = vmatprep.mubr.bf16.mxu0 0
      %3829 = vmatmul.mubr.bf16.gmra.mrb[0].mxu0 %v3632
      %v3830 = vpop.f32.mrb[0].mxu0
      %v3831 = vadd.f32 0.0, %v3830
      %v3832 = vpop.f32.mrb[0].mxu0
      %v3833 = vpop.f32.mrb[0].mxu0
      %v3834 = vadd.f32 0.0, %v3833
      %v3835 = vpop.f32.mrb[0].mxu0
      %3836 = vmatprep.mubr.bf16.mxu0 0
      %3837 = vmatmul.mubr.bf16.gmra.mrb[0].mxu0 %v3633
      %v3838 = vpop.f32.mrb[0].mxu0
      %v3839 = vadd.f32 0.0, %v3838
      %v3840 = vpop.f32.mrb[0].mxu0
      %v3841 = vpop.f32.mrb[0].mxu0
      %v3842 = vadd.f32 0.0, %v3841
      %v3843 = vpop.f32.mrb[0].mxu0
      %3844 = vmatprep.mubr.bf16.mxu0 0
      %3845 = vmatmul.mubr.bf16.gmra.mrb[0].mxu0 %v3634
      %v3846 = vpop.f32.mrb[0].mxu0
      %v3847 = vadd.f32 0.0, %v3846
      %v3848 = vpop.f32.mrb[0].mxu0
      %v3849 = vpop.f32.mrb[0].mxu0
      %v3850 = vadd.f32 0.0, %v3849
      %v3851 = vpop.f32.mrb[0].mxu0
      %3852 = vmatprep.mubr.bf16.mxu0 0
      %3853 = vmatmul.mubr.bf16.gmra.mrb[0].mxu0 %v3635
      %v3854 = vpop.f32.mrb[0].mxu0
      %v3855 = vadd.f32 0.0, %v3854
      %v3856 = vpop.f32.mrb[0].mxu0
      %v3857 = vpop.f32.mrb[0].mxu0
      %v3858 = vadd.f32 0.0, %v3857
      %v3859 = vpop.f32.mrb[0].mxu0
      %3860 = vdwg.mxu0
      %v3861 = vadd.f32 %v3395, %v3735
      %v3862 = vadd.f32 %v3396, %v3738
      %v3863 = vadd.f32 %v3397, %v3743
      %v3864 = vadd.f32 %v3398, %v3746
      %v3865 = vadd.f32 %v3399, %v3751
      %v3866 = vadd.f32 %v3400, %v3754
      %v3867 = vadd.f32 %v3401, %v3759
      %v3868 = vadd.f32 %v3402, %v3762
      %v3869 = vadd.f32 %v3403, %v3767
      %v3870 = vadd.f32 %v3404, %v3770
      %v3871 = vadd.f32 %v3405, %v3775
      %v3872 = vadd.f32 %v3406, %v3778
      %v3873 = vadd.f32 %v3407, %v3783
      %v3874 = vadd.f32 %v3408, %v3786
      %v3875 = vadd.f32 %v3409, %v3791
      %v3876 = vadd.f32 %v3410, %v3794
      %v3877 = vadd.f32 %v3411, %v3799
      %v3878 = vadd.f32 %v3412, %v3802
      %v3879 = vadd.f32 %v3413, %v3807
      %v3880 = vadd.f32 %v3414, %v3810
      %v3881 = vadd.f32 %v3415, %v3815
      %v3882 = vadd.f32 %v3416, %v3818
      %v3883 = vadd.f32 %v3417, %v3823
      %v3884 = vadd.f32 %v3418, %v3826
      %v3885 = vadd.f32 %v3419, %v3831
      %v3886 = vadd.f32 %v3420, %v3834
      %v3887 = vadd.f32 %v3421, %v3839
      %v3888 = vadd.f32 %v3422, %v3842
      %v3889 = vadd.f32 %v3423, %v3847
      %v3890 = vadd.f32 %v3424, %v3850
      %v3891 = vadd.f32 %v3425, %v3855
      %v3892 = vadd.f32 %v3426, %v3858
      %3893 = vst [vmem:[#allocation2] sm:$0xff] %v3861
      %3894 = vst [vmem:[#allocation2 + $0x8] sm:$0xff] %v3862
      %3895 = vst [vmem:[#allocation2 + $0x10] sm:$0xff] %v3863
      %3896 = vst [vmem:[#allocation2 + $0x18] sm:$0xff] %v3864
      %3897 = vst [vmem:[#allocation2 + $0x20] sm:$0xff] %v3865
      %3898 = vst [vmem:[#allocation2 + $0x28] sm:$0xff] %v3866
      %3899 = vst [vmem:[#allocation2 + $0x30] sm:$0xff] %v3867
      %3900 = vst [vmem:[#allocation2 + $0x38] sm:$0xff] %v3868
      %3901 = vst [vmem:[#allocation2 + $0x40] sm:$0xff] %v3869
      %3902 = vst [vmem:[#allocation2 + $0x48] sm:$0xff] %v3870
      %3903 = vst [vmem:[#allocation2 + $0x50] sm:$0xff] %v3871
      %3904 = vst [vmem:[#allocation2 + $0x58] sm:$0xff] %v3872
      %3905 = vst [vmem:[#allocation2 + $0x60] sm:$0xff] %v3873
      %3906 = vst [vmem:[#allocation2 + $0x68] sm:$0xff] %v3874
      %3907 = vst [vmem:[#allocation2 + $0x70] sm:$0xff] %v3875
      %3908 = vst [vmem:[#allocation2 + $0x78] sm:$0xff] %v3876
      %3909 = vst [vmem:[#allocation2 + $0x80] sm:$0xff] %v3877
      %3910 = vst [vmem:[#allocation2 + $0x88] sm:$0xff] %v3878
      %3911 = vst [vmem:[#allocation2 + $0x90] sm:$0xff] %v3879
      %3912 = vst [vmem:[#allocation2 + $0x98] sm:$0xff] %v3880
      %3913 = vst [vmem:[#allocation2 + $0xa0] sm:$0xff] %v3881
      %3914 = vst [vmem:[#allocation2 + $0xa8] sm:$0xff] %v3882
      %3915 = vst [vmem:[#allocation2 + $0xb0] sm:$0xff] %v3883
      %3916 = vst [vmem:[#allocation2 + $0xb8] sm:$0xff] %v3884
      %3917 = vst [vmem:[#allocation2 + $0xc0] sm:$0xff] %v3885
      %3918 = vst [vmem:[#allocation2 + $0xc8] sm:$0xff] %v3886
      %3919 = vst [vmem:[#allocation2 + $0xd0] sm:$0xff] %v3887
      %3920 = vst [vmem:[#allocation2 + $0xd8] sm:$0xff] %v3888
      %3921 = vst [vmem:[#allocation2 + $0xe0] sm:$0xff] %v3889
      %3922 = vst [vmem:[#allocation2 + $0xe8] sm:$0xff] %v3890
      %3923 = vst [vmem:[#allocation2 + $0xf0] sm:$0xff] %v3891
      %3924 = vst [vmem:[#allocation2 + $0xf8] sm:$0xff] %v3892
      %s3925 = sadd.s32 %s284, 2
      %s3926 = smul.u32 %s3925, 5
      %s3927 = smul.addr %s3926, 4
      %s3928 = scalar_lea.vmem %s258, %s3927
      %v3929 = vld [vmem:[%s3928] sm:$0xf]
      %v3930 = vld [vmem:[%s3928 + $0x4] sm:$0xf]
      %v3931 = vld [vmem:[%s3928 + $0x8] sm:$0xf]
      %v3932 = vld [vmem:[%s3928 + $0xc] sm:$0xf]
      %v3933 = vld [vmem:[%s3928 + $0x14] sm:$0xf]
      %v3934 = vld [vmem:[%s3928 + $0x18] sm:$0xf]
      %v3935 = vld [vmem:[%s3928 + $0x1c] sm:$0xf]
      %v3936 = vld [vmem:[%s3928 + $0x20] sm:$0xf]
      %v3937 = vld [vmem:[%s3928 + $0x28] sm:$0xf]
      %v3938 = vld [vmem:[%s3928 + $0x2c] sm:$0xf]
      %v3939 = vld [vmem:[%s3928 + $0x30] sm:$0xf]
      %v3940 = vld [vmem:[%s3928 + $0x34] sm:$0xf]
      %v3941 = vld [vmem:[%s3928 + $0x3c] sm:$0xf]
      %v3942 = vld [vmem:[%s3928 + $0x40] sm:$0xf]
      %v3943 = vld [vmem:[%s3928 + $0x44] sm:$0xf]
      %v3944 = vld [vmem:[%s3928 + $0x48] sm:$0xf]
      %v3945 = vld [vmem:[%s3928 + $0x50] sm:$0xf]
      %v3946 = vld [vmem:[%s3928 + $0x54] sm:$0xf]
      %v3947 = vld [vmem:[%s3928 + $0x58] sm:$0xf]
      %v3948 = vld [vmem:[%s3928 + $0x5c] sm:$0xf]
      %v3949 = vld [vmem:[%s3928 + $0x64] sm:$0xf]
      %v3950 = vld [vmem:[%s3928 + $0x68] sm:$0xf]
      %v3951 = vld [vmem:[%s3928 + $0x6c] sm:$0xf]
      %v3952 = vld [vmem:[%s3928 + $0x70] sm:$0xf]
      %v3953 = vld [vmem:[%s3928 + $0x78] sm:$0xf]
      %v3954 = vld [vmem:[%s3928 + $0x7c] sm:$0xf]
      %v3955 = vld [vmem:[%s3928 + $0x80] sm:$0xf]
      %v3956 = vld [vmem:[%s3928 + $0x84] sm:$0xf]
      %v3957 = vld [vmem:[%s3928 + $0x8c] sm:$0xf]
      %v3958 = vld [vmem:[%s3928 + $0x90] sm:$0xf]
      %v3959 = vld [vmem:[%s3928 + $0x94] sm:$0xf]
      %v3960 = vld [vmem:[%s3928 + $0x98] sm:$0xf]
      %v3961 = vld [vmem:[#allocation2] sm:$0xff]
      %v3962 = vld [vmem:[#allocation2 + $0x8] sm:$0xff]
      %v3963 = vld [vmem:[#allocation2 + $0x10] sm:$0xff]
      %v3964 = vld [vmem:[#allocation2 + $0x18] sm:$0xff]
      %v3965 = vld [vmem:[#allocation2 + $0x20] sm:$0xff]
      %v3966 = vld [vmem:[#allocation2 + $0x28] sm:$0xff]
      %v3967 = vld [vmem:[#allocation2 + $0x30] sm:$0xff]
      %v3968 = vld [vmem:[#allocation2 + $0x38] sm:$0xff]
      %v3969 = vld [vmem:[#allocation2 + $0x40] sm:$0xff]
      %v3970 = vld [vmem:[#allocation2 + $0x48] sm:$0xff]
      %v3971 = vld [vmem:[#allocation2 + $0x50] sm:$0xff]
      %v3972 = vld [vmem:[#allocation2 + $0x58] sm:$0xff]
      %v3973 = vld [vmem:[#allocation2 + $0x60] sm:$0xff]
      %v3974 = vld [vmem:[#allocation2 + $0x68] sm:$0xff]
      %v3975 = vld [vmem:[#allocation2 + $0x70] sm:$0xff]
      %v3976 = vld [vmem:[#allocation2 + $0x78] sm:$0xff]
      %v3977 = vld [vmem:[#allocation2 + $0x80] sm:$0xff]
      %v3978 = vld [vmem:[#allocation2 + $0x88] sm:$0xff]
      %v3979 = vld [vmem:[#allocation2 + $0x90] sm:$0xff]
      %v3980 = vld [vmem:[#allocation2 + $0x98] sm:$0xff]
      %v3981 = vld [vmem:[#allocation2 + $0xa0] sm:$0xff]
      %v3982 = vld [vmem:[#allocation2 + $0xa8] sm:$0xff]
      %v3983 = vld [vmem:[#allocation2 + $0xb0] sm:$0xff]
      %v3984 = vld [vmem:[#allocation2 + $0xb8] sm:$0xff]
      %v3985 = vld [vmem:[#allocation2 + $0xc0] sm:$0xff]
      %v3986 = vld [vmem:[#allocation2 + $0xc8] sm:$0xff]
      %v3987 = vld [vmem:[#allocation2 + $0xd0] sm:$0xff]
      %v3988 = vld [vmem:[#allocation2 + $0xd8] sm:$0xff]
      %v3989 = vld [vmem:[#allocation2 + $0xe0] sm:$0xff]
      %v3990 = vld [vmem:[#allocation2 + $0xe8] sm:$0xff]
      %v3991 = vld [vmem:[#allocation2 + $0xf0] sm:$0xff]
      %v3992 = vld [vmem:[#allocation2 + $0xf8] sm:$0xff]
      %s3993 = scalar_lea.vmem %s262, 384
      %v3994 = vld [vmem:[%s3993] sm:$0xf]
      %v3995 = vld [vmem:[%s3993 + $0x4] sm:$0xf]
      %v3996 = vld [vmem:[%s3993 + $0x8] sm:$0xf]
      %v3997 = vld [vmem:[%s3993 + $0xc] sm:$0xf]
      %v3998 = vld [vmem:[%s3993 + $0x10] sm:$0xf]
      %v3999 = vld [vmem:[%s3993 + $0x14] sm:$0xf]
      %v4000 = vld [vmem:[%s3993 + $0x18] sm:$0xf]
      %v4001 = vld [vmem:[%s3993 + $0x1c] sm:$0xf]
      %v4002 = vld [vmem:[%s3993 + $0x20] sm:$0xf]
      %v4003 = vld [vmem:[%s3993 + $0x24] sm:$0xf]
      %v4004 = vld [vmem:[%s3993 + $0x28] sm:$0xf]
      %v4005 = vld [vmem:[%s3993 + $0x2c] sm:$0xf]
      %v4006 = vld [vmem:[%s3993 + $0x30] sm:$0xf]
      %v4007 = vld [vmem:[%s3993 + $0x34] sm:$0xf]
      %v4008 = vld [vmem:[%s3993 + $0x38] sm:$0xf]
      %v4009 = vld [vmem:[%s3993 + $0x3c] sm:$0xf]
      %v4042 = vunpack.c.l.b16 %v3929
      %v4043 = vunpack.c.l.b16 %v3930
      %v4044 = vunpack.c.l.b16 %v3931
      %v4045 = vunpack.c.l.b16 %v3932
      %v4046 = vunpack.c.l.b16 %v3933
      %v4047 = vunpack.c.l.b16 %v3934
      %v4048 = vunpack.c.l.b16 %v3935
      %v4049 = vunpack.c.l.b16 %v3936
      %v4050 = vunpack.c.l.b16 %v3937
      %v4051 = vunpack.c.l.b16 %v3938
      %v4052 = vunpack.c.l.b16 %v3939
      %v4053 = vunpack.c.l.b16 %v3940
      %v4054 = vunpack.c.l.b16 %v3941
      %v4055 = vunpack.c.l.b16 %v3942
      %v4056 = vunpack.c.l.b16 %v3943
      %v4057 = vunpack.c.l.b16 %v3944
      %v4058 = vunpack.c.l.b16 %v3945
      %v4059 = vunpack.c.l.b16 %v3946
      %v4060 = vunpack.c.l.b16 %v3947
      %v4061 = vunpack.c.l.b16 %v3948
      %v4062 = vunpack.c.l.b16 %v3949
      %v4063 = vunpack.c.l.b16 %v3950
      %v4064 = vunpack.c.l.b16 %v3951
      %v4065 = vunpack.c.l.b16 %v3952
      %v4066 = vunpack.c.l.b16 %v3953
      %v4067 = vunpack.c.l.b16 %v3954
      %v4068 = vunpack.c.l.b16 %v3955
      %v4069 = vunpack.c.l.b16 %v3956
      %v4070 = vunpack.c.l.b16 %v3957
      %v4071 = vunpack.c.l.b16 %v3958
      %v4072 = vunpack.c.l.b16 %v3959
      %v4073 = vunpack.c.l.b16 %v3960
      %v4074 = vpack.c.b16 %v4043, %v4042
      %v4075 = vpack.c.b16 %v4045, %v4044
      %v4076 = vpack.c.b16 %v4047, %v4046
      %v4077 = vpack.c.b16 %v4049, %v4048
      %v4078 = vpack.c.b16 %v4051, %v4050
      %v4079 = vpack.c.b16 %v4053, %v4052
      %v4080 = vpack.c.b16 %v4055, %v4054
      %v4081 = vpack.c.b16 %v4057, %v4056
      %v4082 = vpack.c.b16 %v4059, %v4058
      %v4083 = vpack.c.b16 %v4061, %v4060
      %v4084 = vpack.c.b16 %v4063, %v4062
      %v4085 = vpack.c.b16 %v4065, %v4064
      %v4086 = vpack.c.b16 %v4067, %v4066
      %v4087 = vpack.c.b16 %v4069, %v4068
      %v4088 = vpack.c.b16 %v4071, %v4070
      %v4089 = vpack.c.b16 %v4073, %v4072
      %v4122 = vunpack.c.l.b16 %v3994
      %v4123 = vunpack.c.l.b16 %v3995
      %v4124 = vunpack.c.l.b16 %v3996
      %v4125 = vunpack.c.l.b16 %v3997
      %v4126 = vunpack.c.l.b16 %v3998
      %v4127 = vunpack.c.l.b16 %v3999
      %v4128 = vunpack.c.l.b16 %v4000
      %v4129 = vunpack.c.l.b16 %v4001
      %v4130 = vunpack.c.l.b16 %v4002
      %v4131 = vunpack.c.l.b16 %v4003
      %v4132 = vunpack.c.l.b16 %v4004
      %v4133 = vunpack.c.l.b16 %v4005
      %v4134 = vunpack.c.l.b16 %v4006
      %v4135 = vunpack.c.l.b16 %v4007
      %v4136 = vunpack.c.l.b16 %v4008
      %v4137 = vunpack.c.l.b16 %v4009
      %v4138 = vpack.c.b16 %v4123, %v4122
      %v4139 = vpack.c.b16 %v4125, %v4124
      %v4140 = vpack.c.b16 %v4127, %v4126
      %v4141 = vpack.c.b16 %v4129, %v4128
      %v4142 = vpack.c.b16 %v4131, %v4130
      %v4143 = vpack.c.b16 %v4133, %v4132
      %v4144 = vpack.c.b16 %v4135, %v4134
      %v4145 = vpack.c.b16 %v4137, %v4136
      %4154 = vmatprep.subr.bf16.mxu0 0
      %4155 = vmatpush1.bf16.msra.mxu0 %v4138
      %4156 = vmatprep.subr.bf16.mxu0 0
      %4157 = vmatpush1.bf16.msra.mxu0 %v4139
      %4158 = vmatprep.subr.bf16.mxu0 0
      %4159 = vmatpush1.bf16.msra.mxu0 %v4140
      %4160 = vmatprep.subr.bf16.mxu0 0
      %4161 = vmatpush1.bf16.msra.mxu0 %v4141
      %4162 = vmatprep.subr.bf16.mxu0 0
      %4163 = vmatpush1.bf16.msra.mxu0 %v4142
      %4164 = vmatprep.subr.bf16.mxu0 0
      %4165 = vmatpush1.bf16.msra.mxu0 %v4143
      %4166 = vmatprep.subr.bf16.mxu0 0
      %4167 = vmatpush1.bf16.msra.mxu0 %v4144
      %4168 = vmatprep.subr.bf16.mxu0 0
      %4169 = vmatpush1.bf16.msra.mxu0 %v4145
      %4170 = vmatprep.subr.bf16.mxu0 0
      %4171 = vmatpush1.bf16.msra.mxu0 0
      %4172 = vmatprep.subr.bf16.mxu0 0
      %4173 = vmatpush1.bf16.msra.mxu0 0
      %4174 = vmatprep.subr.bf16.mxu0 0
      %4175 = vmatpush1.bf16.msra.mxu0 0
      %4176 = vmatprep.subr.bf16.mxu0 0
      %4177 = vmatpush1.bf16.msra.mxu0 0
      %4178 = vmatprep.subr.bf16.mxu0 0
      %4179 = vmatpush1.bf16.msra.mxu0 0
      %4180 = vmatprep.subr.bf16.mxu0 0
      %4181 = vmatpush1.bf16.msra.mxu0 0
      %4182 = vmatprep.subr.bf16.mxu0 0
      %4183 = vmatpush1.bf16.msra.mxu0 0
      %4184 = vmatprep.subr.bf16.mxu0 0
      %4185 = vmatpush1.bf16.msra.mxu0 0
      %4186 = vmatprep.mubr.bf16.mxu0 0
      %4187 = vmatmul.mubr.bf16.gmra.mrb[0].mxu0 %v4074
      %v4188 = vpop.f32.mrb[0].mxu0
      %v4189 = vadd.f32 0.0, %v4188
      %v4190 = vpop.f32.mrb[0].mxu0
      %v4191 = vpop.f32.mrb[0].mxu0
      %v4192 = vadd.f32 0.0, %v4191
      %v4193 = vpop.f32.mrb[0].mxu0
      %4194 = vmatprep.mubr.bf16.mxu0 0
      %4195 = vmatmul.mubr.bf16.gmra.mrb[0].mxu0 %v4075
      %v4196 = vpop.f32.mrb[0].mxu0
      %v4197 = vadd.f32 0.0, %v4196
      %v4198 = vpop.f32.mrb[0].mxu0
      %v4199 = vpop.f32.mrb[0].mxu0
      %v4200 = vadd.f32 0.0, %v4199
      %v4201 = vpop.f32.mrb[0].mxu0
      %4202 = vmatprep.mubr.bf16.mxu0 0
      %4203 = vmatmul.mubr.bf16.gmra.mrb[0].mxu0 %v4076
      %v4204 = vpop.f32.mrb[0].mxu0
      %v4205 = vadd.f32 0.0, %v4204
      %v4206 = vpop.f32.mrb[0].mxu0
      %v4207 = vpop.f32.mrb[0].mxu0
      %v4208 = vadd.f32 0.0, %v4207
      %v4209 = vpop.f32.mrb[0].mxu0
      %4210 = vmatprep.mubr.bf16.mxu0 0
      %4211 = vmatmul.mubr.bf16.gmra.mrb[0].mxu0 %v4077
      %v4212 = vpop.f32.mrb[0].mxu0
      %v4213 = vadd.f32 0.0, %v4212
      %v4214 = vpop.f32.mrb[0].mxu0
      %v4215 = vpop.f32.mrb[0].mxu0
      %v4216 = vadd.f32 0.0, %v4215
      %v4217 = vpop.f32.mrb[0].mxu0
      %4218 = vmatprep.mubr.bf16.mxu0 0
      %4219 = vmatmul.mubr.bf16.gmra.mrb[0].mxu0 %v4078
      %v4220 = vpop.f32.mrb[0].mxu0
      %v4221 = vadd.f32 0.0, %v4220
      %v4222 = vpop.f32.mrb[0].mxu0
      %v4223 = vpop.f32.mrb[0].mxu0
      %v4224 = vadd.f32 0.0, %v4223
      %v4225 = vpop.f32.mrb[0].mxu0
      %4226 = vmatprep.mubr.bf16.mxu0 0
      %4227 = vmatmul.mubr.bf16.gmra.mrb[0].mxu0 %v4079
      %v4228 = vpop.f32.mrb[0].mxu0
      %v4229 = vadd.f32 0.0, %v4228
      %v4230 = vpop.f32.mrb[0].mxu0
      %v4231 = vpop.f32.mrb[0].mxu0
      %v4232 = vadd.f32 0.0, %v4231
      %v4233 = vpop.f32.mrb[0].mxu0
      %4234 = vmatprep.mubr.bf16.mxu0 0
      %4235 = vmatmul.mubr.bf16.gmra.mrb[0].mxu0 %v4080
      %v4236 = vpop.f32.mrb[0].mxu0
      %v4237 = vadd.f32 0.0, %v4236
      %v4238 = vpop.f32.mrb[0].mxu0
      %v4239 = vpop.f32.mrb[0].mxu0
      %v4240 = vadd.f32 0.0, %v4239
      %v4241 = vpop.f32.mrb[0].mxu0
      %4242 = vmatprep.mubr.bf16.mxu0 0
      %4243 = vmatmul.mubr.bf16.gmra.mrb[0].mxu0 %v4081
      %v4244 = vpop.f32.mrb[0].mxu0
      %v4245 = vadd.f32 0.0, %v4244
      %v4246 = vpop.f32.mrb[0].mxu0
      %v4247 = vpop.f32.mrb[0].mxu0
      %v4248 = vadd.f32 0.0, %v4247
      %v4249 = vpop.f32.mrb[0].mxu0
      %4250 = vmatprep.mubr.bf16.mxu0 0
      %4251 = vmatmul.mubr.bf16.gmra.mrb[0].mxu0 %v4082
      %v4252 = vpop.f32.mrb[0].mxu0
      %v4253 = vadd.f32 0.0, %v4252
      %v4254 = vpop.f32.mrb[0].mxu0
      %v4255 = vpop.f32.mrb[0].mxu0
      %v4256 = vadd.f32 0.0, %v4255
      %v4257 = vpop.f32.mrb[0].mxu0
      %4258 = vmatprep.mubr.bf16.mxu0 0
      %4259 = vmatmul.mubr.bf16.gmra.mrb[0].mxu0 %v4083
      %v4260 = vpop.f32.mrb[0].mxu0
      %v4261 = vadd.f32 0.0, %v4260
      %v4262 = vpop.f32.mrb[0].mxu0
      %v4263 = vpop.f32.mrb[0].mxu0
      %v4264 = vadd.f32 0.0, %v4263
      %v4265 = vpop.f32.mrb[0].mxu0
      %4266 = vmatprep.mubr.bf16.mxu0 0
      %4267 = vmatmul.mubr.bf16.gmra.mrb[0].mxu0 %v4084
      %v4268 = vpop.f32.mrb[0].mxu0
      %v4269 = vadd.f32 0.0, %v4268
      %v4270 = vpop.f32.mrb[0].mxu0
      %v4271 = vpop.f32.mrb[0].mxu0
      %v4272 = vadd.f32 0.0, %v4271
      %v4273 = vpop.f32.mrb[0].mxu0
      %4274 = vmatprep.mubr.bf16.mxu0 0
      %4275 = vmatmul.mubr.bf16.gmra.mrb[0].mxu0 %v4085
      %v4276 = vpop.f32.mrb[0].mxu0
      %v4277 = vadd.f32 0.0, %v4276
      %v4278 = vpop.f32.mrb[0].mxu0
      %v4279 = vpop.f32.mrb[0].mxu0
      %v4280 = vadd.f32 0.0, %v4279
      %v4281 = vpop.f32.mrb[0].mxu0
      %4282 = vmatprep.mubr.bf16.mxu0 0
      %4283 = vmatmul.mubr.bf16.gmra.mrb[0].mxu0 %v4086
      %v4284 = vpop.f32.mrb[0].mxu0
      %v4285 = vadd.f32 0.0, %v4284
      %v4286 = vpop.f32.mrb[0].mxu0
      %v4287 = vpop.f32.mrb[0].mxu0
      %v4288 = vadd.f32 0.0, %v4287
      %v4289 = vpop.f32.mrb[0].mxu0
      %4290 = vmatprep.mubr.bf16.mxu0 0
      %4291 = vmatmul.mubr.bf16.gmra.mrb[0].mxu0 %v4087
      %v4292 = vpop.f32.mrb[0].mxu0
      %v4293 = vadd.f32 0.0, %v4292
      %v4294 = vpop.f32.mrb[0].mxu0
      %v4295 = vpop.f32.mrb[0].mxu0
      %v4296 = vadd.f32 0.0, %v4295
      %v4297 = vpop.f32.mrb[0].mxu0
      %4298 = vmatprep.mubr.bf16.mxu0 0
      %4299 = vmatmul.mubr.bf16.gmra.mrb[0].mxu0 %v4088
      %v4300 = vpop.f32.mrb[0].mxu0
      %v4301 = vadd.f32 0.0, %v4300
      %v4302 = vpop.f32.mrb[0].mxu0
      %v4303 = vpop.f32.mrb[0].mxu0
      %v4304 = vadd.f32 0.0, %v4303
      %v4305 = vpop.f32.mrb[0].mxu0
      %4306 = vmatprep.mubr.bf16.mxu0 0
      %4307 = vmatmul.mubr.bf16.gmra.mrb[0].mxu0 %v4089
      %v4308 = vpop.f32.mrb[0].mxu0
      %v4309 = vadd.f32 0.0, %v4308
      %v4310 = vpop.f32.mrb[0].mxu0
      %v4311 = vpop.f32.mrb[0].mxu0
      %v4312 = vadd.f32 0.0, %v4311
      %v4313 = vpop.f32.mrb[0].mxu0
      %4314 = vdwg.mxu0
      %v4315 = vadd.f32 %v3961, %v4189
      %v4316 = vadd.f32 %v3962, %v4192
      %v4317 = vadd.f32 %v3963, %v4197
      %v4318 = vadd.f32 %v3964, %v4200
      %v4319 = vadd.f32 %v3965, %v4205
      %v4320 = vadd.f32 %v3966, %v4208
      %v4321 = vadd.f32 %v3967, %v4213
      %v4322 = vadd.f32 %v3968, %v4216
      %v4323 = vadd.f32 %v3969, %v4221
      %v4324 = vadd.f32 %v3970, %v4224
      %v4325 = vadd.f32 %v3971, %v4229
      %v4326 = vadd.f32 %v3972, %v4232
      %v4327 = vadd.f32 %v3973, %v4237
      %v4328 = vadd.f32 %v3974, %v4240
      %v4329 = vadd.f32 %v3975, %v4245
      %v4330 = vadd.f32 %v3976, %v4248
      %v4331 = vadd.f32 %v3977, %v4253
      %v4332 = vadd.f32 %v3978, %v4256
      %v4333 = vadd.f32 %v3979, %v4261
      %v4334 = vadd.f32 %v3980, %v4264
      %v4335 = vadd.f32 %v3981, %v4269
      %v4336 = vadd.f32 %v3982, %v4272
      %v4337 = vadd.f32 %v3983, %v4277
      %v4338 = vadd.f32 %v3984, %v4280
      %v4339 = vadd.f32 %v3985, %v4285
      %v4340 = vadd.f32 %v3986, %v4288
      %v4341 = vadd.f32 %v3987, %v4293
      %v4342 = vadd.f32 %v3988, %v4296
      %v4343 = vadd.f32 %v3989, %v4301
      %v4344 = vadd.f32 %v3990, %v4304
      %v4345 = vadd.f32 %v3991, %v4309
      %v4346 = vadd.f32 %v3992, %v4312
      %4347 = vst [vmem:[#allocation2] sm:$0xff] %v4315
      %4348 = vst [vmem:[#allocation2 + $0x8] sm:$0xff] %v4316
      %4349 = vst [vmem:[#allocation2 + $0x10] sm:$0xff] %v4317
      %4350 = vst [vmem:[#allocation2 + $0x18] sm:$0xff] %v4318
      %4351 = vst [vmem:[#allocation2 + $0x20] sm:$0xff] %v4319
      %4352 = vst [vmem:[#allocation2 + $0x28] sm:$0xff] %v4320
      %4353 = vst [vmem:[#allocation2 + $0x30] sm:$0xff] %v4321
      %4354 = vst [vmem:[#allocation2 + $0x38] sm:$0xff] %v4322
      %4355 = vst [vmem:[#allocation2 + $0x40] sm:$0xff] %v4323
      %4356 = vst [vmem:[#allocation2 + $0x48] sm:$0xff] %v4324
      %4357 = vst [vmem:[#allocation2 + $0x50] sm:$0xff] %v4325
      %4358 = vst [vmem:[#allocation2 + $0x58] sm:$0xff] %v4326
      %4359 = vst [vmem:[#allocation2 + $0x60] sm:$0xff] %v4327
      %4360 = vst [vmem:[#allocation2 + $0x68] sm:$0xff] %v4328
      %4361 = vst [vmem:[#allocation2 + $0x70] sm:$0xff] %v4329
      %4362 = vst [vmem:[#allocation2 + $0x78] sm:$0xff] %v4330
      %4363 = vst [vmem:[#allocation2 + $0x80] sm:$0xff] %v4331
      %4364 = vst [vmem:[#allocation2 + $0x88] sm:$0xff] %v4332
      %4365 = vst [vmem:[#allocation2 + $0x90] sm:$0xff] %v4333
      %4366 = vst [vmem:[#allocation2 + $0x98] sm:$0xff] %v4334
      %4367 = vst [vmem:[#allocation2 + $0xa0] sm:$0xff] %v4335
      %4368 = vst [vmem:[#allocation2 + $0xa8] sm:$0xff] %v4336
      %4369 = vst [vmem:[#allocation2 + $0xb0] sm:$0xff] %v4337
      %4370 = vst [vmem:[#allocation2 + $0xb8] sm:$0xff] %v4338
      %4371 = vst [vmem:[#allocation2 + $0xc0] sm:$0xff] %v4339
      %4372 = vst [vmem:[#allocation2 + $0xc8] sm:$0xff] %v4340
      %4373 = vst [vmem:[#allocation2 + $0xd0] sm:$0xff] %v4341
      %4374 = vst [vmem:[#allocation2 + $0xd8] sm:$0xff] %v4342
      %4375 = vst [vmem:[#allocation2 + $0xe0] sm:$0xff] %v4343
      %4376 = vst [vmem:[#allocation2 + $0xe8] sm:$0xff] %v4344
      %4377 = vst [vmem:[#allocation2 + $0xf0] sm:$0xff] %v4345
      %4378 = vst [vmem:[#allocation2 + $0xf8] sm:$0xff] %v4346
      %v4379 = vld [vmem:[%s3928] sm:$0xf]
      %v4380 = vld [vmem:[%s3928 + $0x4] sm:$0xf]
      %v4381 = vld [vmem:[%s3928 + $0x8] sm:$0xf]
      %v4382 = vld [vmem:[%s3928 + $0xc] sm:$0xf]
      %v4383 = vld [vmem:[%s3928 + $0x10] sm:$0x1]
      %v4384 = vld [vmem:[%s3928 + $0x14] sm:$0xf]
      %v4385 = vld [vmem:[%s3928 + $0x18] sm:$0xf]
      %v4386 = vld [vmem:[%s3928 + $0x1c] sm:$0xf]
      %v4387 = vld [vmem:[%s3928 + $0x20] sm:$0xf]
      %v4388 = vld [vmem:[%s3928 + $0x24] sm:$0x1]
      %v4389 = vld [vmem:[%s3928 + $0x28] sm:$0xf]
      %v4390 = vld [vmem:[%s3928 + $0x2c] sm:$0xf]
      %v4391 = vld [vmem:[%s3928 + $0x30] sm:$0xf]
      %v4392 = vld [vmem:[%s3928 + $0x34] sm:$0xf]
      %v4393 = vld [vmem:[%s3928 + $0x38] sm:$0x1]
      %v4394 = vld [vmem:[%s3928 + $0x3c] sm:$0xf]
      %v4395 = vld [vmem:[%s3928 + $0x40] sm:$0xf]
      %v4396 = vld [vmem:[%s3928 + $0x44] sm:$0xf]
      %v4397 = vld [vmem:[%s3928 + $0x48] sm:$0xf]
      %v4398 = vld [vmem:[%s3928 + $0x4c] sm:$0x1]
      %v4399 = vld [vmem:[%s3928 + $0x50] sm:$0xf]
      %v4400 = vld [vmem:[%s3928 + $0x54] sm:$0xf]
      %v4401 = vld [vmem:[%s3928 + $0x58] sm:$0xf]
      %v4402 = vld [vmem:[%s3928 + $0x5c] sm:$0xf]
      %v4403 = vld [vmem:[%s3928 + $0x60] sm:$0x1]
      %v4404 = vld [vmem:[%s3928 + $0x64] sm:$0xf]
      %v4405 = vld [vmem:[%s3928 + $0x68] sm:$0xf]
      %v4406 = vld [vmem:[%s3928 + $0x6c] sm:$0xf]
      %v4407 = vld [vmem:[%s3928 + $0x70] sm:$0xf]
      %v4408 = vld [vmem:[%s3928 + $0x74] sm:$0x1]
      %v4409 = vld [vmem:[%s3928 + $0x78] sm:$0xf]
      %v4410 = vld [vmem:[%s3928 + $0x7c] sm:$0xf]
      %v4411 = vld [vmem:[%s3928 + $0x80] sm:$0xf]
      %v4412 = vld [vmem:[%s3928 + $0x84] sm:$0xf]
      %v4413 = vld [vmem:[%s3928 + $0x88] sm:$0x1]
      %v4414 = vld [vmem:[%s3928 + $0x8c] sm:$0xf]
      %v4415 = vld [vmem:[%s3928 + $0x90] sm:$0xf]
      %v4416 = vld [vmem:[%s3928 + $0x94] sm:$0xf]
      %v4417 = vld [vmem:[%s3928 + $0x98] sm:$0xf]
      %v4418 = vld [vmem:[%s3928 + $0x9c] sm:$0x1]
      %v4419 = vld [vmem:[#allocation2] sm:$0xff]
      %v4420 = vld [vmem:[#allocation2 + $0x8] sm:$0xff]
      %v4421 = vld [vmem:[#allocation2 + $0x10] sm:$0xff]
      %v4422 = vld [vmem:[#allocation2 + $0x18] sm:$0xff]
      %v4423 = vld [vmem:[#allocation2 + $0x20] sm:$0xff]
      %v4424 = vld [vmem:[#allocation2 + $0x28] sm:$0xff]
      %v4425 = vld [vmem:[#allocation2 + $0x30] sm:$0xff]
      %v4426 = vld [vmem:[#allocation2 + $0x38] sm:$0xff]
      %v4427 = vld [vmem:[#allocation2 + $0x40] sm:$0xff]
      %v4428 = vld [vmem:[#allocation2 + $0x48] sm:$0xff]
      %v4429 = vld [vmem:[#allocation2 + $0x50] sm:$0xff]
      %v4430 = vld [vmem:[#allocation2 + $0x58] sm:$0xff]
      %v4431 = vld [vmem:[#allocation2 + $0x60] sm:$0xff]
      %v4432 = vld [vmem:[#allocation2 + $0x68] sm:$0xff]
      %v4433 = vld [vmem:[#allocation2 + $0x70] sm:$0xff]
      %v4434 = vld [vmem:[#allocation2 + $0x78] sm:$0xff]
      %v4435 = vld [vmem:[#allocation2 + $0x80] sm:$0xff]
      %v4436 = vld [vmem:[#allocation2 + $0x88] sm:$0xff]
      %v4437 = vld [vmem:[#allocation2 + $0x90] sm:$0xff]
      %v4438 = vld [vmem:[#allocation2 + $0x98] sm:$0xff]
      %v4439 = vld [vmem:[#allocation2 + $0xa0] sm:$0xff]
      %v4440 = vld [vmem:[#allocation2 + $0xa8] sm:$0xff]
      %v4441 = vld [vmem:[#allocation2 + $0xb0] sm:$0xff]
      %v4442 = vld [vmem:[#allocation2 + $0xb8] sm:$0xff]
      %v4443 = vld [vmem:[#allocation2 + $0xc0] sm:$0xff]
      %v4444 = vld [vmem:[#allocation2 + $0xc8] sm:$0xff]
      %v4445 = vld [vmem:[#allocation2 + $0xd0] sm:$0xff]
      %v4446 = vld [vmem:[#allocation2 + $0xd8] sm:$0xff]
      %v4447 = vld [vmem:[#allocation2 + $0xe0] sm:$0xff]
      %v4448 = vld [vmem:[#allocation2 + $0xe8] sm:$0xff]
      %v4449 = vld [vmem:[#allocation2 + $0xf0] sm:$0xff]
      %v4450 = vld [vmem:[#allocation2 + $0xf8] sm:$0xff]
      %v4452 = vshrl.u32 %v4379, 16
      %v4454 = vrot.slane %v4452, 4
      %v4455 = vshll.u32 %v4379, 16
      %v4457 = vrot.slane %v4455, 5
      %v4458 = vor.u32 %v4454, %v4457
      %v4459 = vrot.slane %v4458, 4
      %v4461 = vshll.u32 %v4380, 16
      %v4463 = vrot.slane %v4461, 5
      %v4464 = vsel %vm843, %v4459, %v4463
      %v4465 = vshrl.u32 %v4380, 16
      %v4467 = vrot.slane %v4465, 4
      %v4468 = vor.u32 %v4467, %v4463
      %v4469 = vrot.slane %v4468, 4
      %v4471 = vshll.u32 %v4381, 16
      %v4473 = vrot.slane %v4471, 5
      %v4474 = vsel %vm843, %v4469, %v4473
      %v4475 = vshrl.u32 %v4381, 16
      %v4477 = vrot.slane %v4475, 4
      %v4478 = vor.u32 %v4477, %v4473
      %v4479 = vrot.slane %v4478, 4
      %v4481 = vshll.u32 %v4382, 16
      %v4483 = vrot.slane %v4481, 5
      %v4484 = vsel %vm843, %v4479, %v4483
      %v4485 = vshrl.u32 %v4382, 16
      %v4487 = vrot.slane %v4485, 4
      %v4488 = vor.u32 %v4487, %v4483
      %v4489 = vrot.slane %v4488, 4
      %v4491 = vshll.u32 %v4383, 16
      %v4493 = vrot.slane %v4491, 5
      %v4494 = vsel %vm843, %v4489, %v4493
      %v4496 = vshrl.u32 %v4384, 16
      %v4498 = vrot.slane %v4496, 4
      %v4499 = vshll.u32 %v4384, 16
      %v4501 = vrot.slane %v4499, 5
      %v4502 = vor.u32 %v4498, %v4501
      %v4503 = vrot.slane %v4502, 4
      %v4505 = vshll.u32 %v4385, 16
      %v4507 = vrot.slane %v4505, 5
      %v4508 = vsel %vm843, %v4503, %v4507
      %v4509 = vshrl.u32 %v4385, 16
      %v4511 = vrot.slane %v4509, 4
      %v4512 = vor.u32 %v4511, %v4507
      %v4513 = vrot.slane %v4512, 4
      %v4515 = vshll.u32 %v4386, 16
      %v4517 = vrot.slane %v4515, 5
      %v4518 = vsel %vm843, %v4513, %v4517
      %v4519 = vshrl.u32 %v4386, 16
      %v4521 = vrot.slane %v4519, 4
      %v4522 = vor.u32 %v4521, %v4517
      %v4523 = vrot.slane %v4522, 4
      %v4525 = vshll.u32 %v4387, 16
      %v4527 = vrot.slane %v4525, 5
      %v4528 = vsel %vm843, %v4523, %v4527
      %v4529 = vshrl.u32 %v4387, 16
      %v4531 = vrot.slane %v4529, 4
      %v4532 = vor.u32 %v4531, %v4527
      %v4533 = vrot.slane %v4532, 4
      %v4535 = vshll.u32 %v4388, 16
      %v4537 = vrot.slane %v4535, 5
      %v4538 = vsel %vm843, %v4533, %v4537
      %v4540 = vshrl.u32 %v4389, 16
      %v4542 = vrot.slane %v4540, 4
      %v4543 = vshll.u32 %v4389, 16
      %v4545 = vrot.slane %v4543, 5
      %v4546 = vor.u32 %v4542, %v4545
      %v4547 = vrot.slane %v4546, 4
      %v4549 = vshll.u32 %v4390, 16
      %v4551 = vrot.slane %v4549, 5
      %v4552 = vsel %vm843, %v4547, %v4551
      %v4553 = vshrl.u32 %v4390, 16
      %v4555 = vrot.slane %v4553, 4
      %v4556 = vor.u32 %v4555, %v4551
      %v4557 = vrot.slane %v4556, 4
      %v4559 = vshll.u32 %v4391, 16
      %v4561 = vrot.slane %v4559, 5
      %v4562 = vsel %vm843, %v4557, %v4561
      %v4563 = vshrl.u32 %v4391, 16
      %v4565 = vrot.slane %v4563, 4
      %v4566 = vor.u32 %v4565, %v4561
      %v4567 = vrot.slane %v4566, 4
      %v4569 = vshll.u32 %v4392, 16
      %v4571 = vrot.slane %v4569, 5
      %v4572 = vsel %vm843, %v4567, %v4571
      %v4573 = vshrl.u32 %v4392, 16
      %v4575 = vrot.slane %v4573, 4
      %v4576 = vor.u32 %v4575, %v4571
      %v4577 = vrot.slane %v4576, 4
      %v4579 = vshll.u32 %v4393, 16
      %v4581 = vrot.slane %v4579, 5
      %v4582 = vsel %vm843, %v4577, %v4581
      %v4584 = vshrl.u32 %v4394, 16
      %v4586 = vrot.slane %v4584, 4
      %v4587 = vshll.u32 %v4394, 16
      %v4589 = vrot.slane %v4587, 5
      %v4590 = vor.u32 %v4586, %v4589
      %v4591 = vrot.slane %v4590, 4
      %v4593 = vshll.u32 %v4395, 16
      %v4595 = vrot.slane %v4593, 5
      %v4596 = vsel %vm843, %v4591, %v4595
      %v4597 = vshrl.u32 %v4395, 16
      %v4599 = vrot.slane %v4597, 4
      %v4600 = vor.u32 %v4599, %v4595
      %v4601 = vrot.slane %v4600, 4
      %v4603 = vshll.u32 %v4396, 16
      %v4605 = vrot.slane %v4603, 5
      %v4606 = vsel %vm843, %v4601, %v4605
      %v4607 = vshrl.u32 %v4396, 16
      %v4609 = vrot.slane %v4607, 4
      %v4610 = vor.u32 %v4609, %v4605
      %v4611 = vrot.slane %v4610, 4
      %v4613 = vshll.u32 %v4397, 16
      %v4615 = vrot.slane %v4613, 5
      %v4616 = vsel %vm843, %v4611, %v4615
      %v4617 = vshrl.u32 %v4397, 16
      %v4619 = vrot.slane %v4617, 4
      %v4620 = vor.u32 %v4619, %v4615
      %v4621 = vrot.slane %v4620, 4
      %v4623 = vshll.u32 %v4398, 16
      %v4625 = vrot.slane %v4623, 5
      %v4626 = vsel %vm843, %v4621, %v4625
      %v4628 = vshrl.u32 %v4399, 16
      %v4630 = vrot.slane %v4628, 4
      %v4631 = vshll.u32 %v4399, 16
      %v4633 = vrot.slane %v4631, 5
      %v4634 = vor.u32 %v4630, %v4633
      %v4635 = vrot.slane %v4634, 4
      %v4637 = vshll.u32 %v4400, 16
      %v4639 = vrot.slane %v4637, 5
      %v4640 = vsel %vm843, %v4635, %v4639
      %v4641 = vshrl.u32 %v4400, 16
      %v4643 = vrot.slane %v4641, 4
      %v4644 = vor.u32 %v4643, %v4639
      %v4645 = vrot.slane %v4644, 4
      %v4647 = vshll.u32 %v4401, 16
      %v4649 = vrot.slane %v4647, 5
      %v4650 = vsel %vm843, %v4645, %v4649
      %v4651 = vshrl.u32 %v4401, 16
      %v4653 = vrot.slane %v4651, 4
      %v4654 = vor.u32 %v4653, %v4649
      %v4655 = vrot.slane %v4654, 4
      %v4657 = vshll.u32 %v4402, 16
      %v4659 = vrot.slane %v4657, 5
      %v4660 = vsel %vm843, %v4655, %v4659
      %v4661 = vshrl.u32 %v4402, 16
      %v4663 = vrot.slane %v4661, 4
      %v4664 = vor.u32 %v4663, %v4659
      %v4665 = vrot.slane %v4664, 4
      %v4667 = vshll.u32 %v4403, 16
      %v4669 = vrot.slane %v4667, 5
      %v4670 = vsel %vm843, %v4665, %v4669
      %v4672 = vshrl.u32 %v4404, 16
      %v4674 = vrot.slane %v4672, 4
      %v4675 = vshll.u32 %v4404, 16
      %v4677 = vrot.slane %v4675, 5
      %v4678 = vor.u32 %v4674, %v4677
      %v4679 = vrot.slane %v4678, 4
      %v4681 = vshll.u32 %v4405, 16
      %v4683 = vrot.slane %v4681, 5
      %v4684 = vsel %vm843, %v4679, %v4683
      %v4685 = vshrl.u32 %v4405, 16
      %v4687 = vrot.slane %v4685, 4
      %v4688 = vor.u32 %v4687, %v4683
      %v4689 = vrot.slane %v4688, 4
      %v4691 = vshll.u32 %v4406, 16
      %v4693 = vrot.slane %v4691, 5
      %v4694 = vsel %vm843, %v4689, %v4693
      %v4695 = vshrl.u32 %v4406, 16
      %v4697 = vrot.slane %v4695, 4
      %v4698 = vor.u32 %v4697, %v4693
      %v4699 = vrot.slane %v4698, 4
      %v4701 = vshll.u32 %v4407, 16
      %v4703 = vrot.slane %v4701, 5
      %v4704 = vsel %vm843, %v4699, %v4703
      %v4705 = vshrl.u32 %v4407, 16
      %v4707 = vrot.slane %v4705, 4
      %v4708 = vor.u32 %v4707, %v4703
      %v4709 = vrot.slane %v4708, 4
      %v4711 = vshll.u32 %v4408, 16
      %v4713 = vrot.slane %v4711, 5
      %v4714 = vsel %vm843, %v4709, %v4713
      %v4716 = vshrl.u32 %v4409, 16
      %v4718 = vrot.slane %v4716, 4
      %v4719 = vshll.u32 %v4409, 16
      %v4721 = vrot.slane %v4719, 5
      %v4722 = vor.u32 %v4718, %v4721
      %v4723 = vrot.slane %v4722, 4
      %v4725 = vshll.u32 %v4410, 16
      %v4727 = vrot.slane %v4725, 5
      %v4728 = vsel %vm843, %v4723, %v4727
      %v4729 = vshrl.u32 %v4410, 16
      %v4731 = vrot.slane %v4729, 4
      %v4732 = vor.u32 %v4731, %v4727
      %v4733 = vrot.slane %v4732, 4
      %v4735 = vshll.u32 %v4411, 16
      %v4737 = vrot.slane %v4735, 5
      %v4738 = vsel %vm843, %v4733, %v4737
      %v4739 = vshrl.u32 %v4411, 16
      %v4741 = vrot.slane %v4739, 4
      %v4742 = vor.u32 %v4741, %v4737
      %v4743 = vrot.slane %v4742, 4
      %v4745 = vshll.u32 %v4412, 16
      %v4747 = vrot.slane %v4745, 5
      %v4748 = vsel %vm843, %v4743, %v4747
      %v4749 = vshrl.u32 %v4412, 16
      %v4751 = vrot.slane %v4749, 4
      %v4752 = vor.u32 %v4751, %v4747
      %v4753 = vrot.slane %v4752, 4
      %v4755 = vshll.u32 %v4413, 16
      %v4757 = vrot.slane %v4755, 5
      %v4758 = vsel %vm843, %v4753, %v4757
      %v4760 = vshrl.u32 %v4414, 16
      %v4762 = vrot.slane %v4760, 4
      %v4763 = vshll.u32 %v4414, 16
      %v4765 = vrot.slane %v4763, 5
      %v4766 = vor.u32 %v4762, %v4765
      %v4767 = vrot.slane %v4766, 4
      %v4769 = vshll.u32 %v4415, 16
      %v4771 = vrot.slane %v4769, 5
      %v4772 = vsel %vm843, %v4767, %v4771
      %v4773 = vshrl.u32 %v4415, 16
      %v4775 = vrot.slane %v4773, 4
      %v4776 = vor.u32 %v4775, %v4771
      %v4777 = vrot.slane %v4776, 4
      %v4779 = vshll.u32 %v4416, 16
      %v4781 = vrot.slane %v4779, 5
      %v4782 = vsel %vm843, %v4777, %v4781
      %v4783 = vshrl.u32 %v4416, 16
      %v4785 = vrot.slane %v4783, 4
      %v4786 = vor.u32 %v4785, %v4781
      %v4787 = vrot.slane %v4786, 4
      %v4789 = vshll.u32 %v4417, 16
      %v4791 = vrot.slane %v4789, 5
      %v4792 = vsel %vm843, %v4787, %v4791
      %v4793 = vshrl.u32 %v4417, 16
      %v4795 = vrot.slane %v4793, 4
      %v4796 = vor.u32 %v4795, %v4791
      %v4797 = vrot.slane %v4796, 4
      %v4799 = vshll.u32 %v4418, 16
      %v4801 = vrot.slane %v4799, 5
      %v4802 = vsel %vm843, %v4797, %v4801
      %s4803 = scalar_lea.vmem %s262, 448
      %v4804 = vld [vmem:[%s4803] sm:$0xf]
      %v4805 = vld [vmem:[%s4803 + $0x4] sm:$0xf]
      %v4806 = vld [vmem:[%s4803 + $0x8] sm:$0xf]
      %v4807 = vld [vmem:[%s4803 + $0xc] sm:$0xf]
      %v4808 = vld [vmem:[%s4803 + $0x10] sm:$0xf]
      %v4809 = vld [vmem:[%s4803 + $0x14] sm:$0xf]
      %v4810 = vld [vmem:[%s4803 + $0x18] sm:$0xf]
      %v4811 = vld [vmem:[%s4803 + $0x1c] sm:$0xf]
      %v4812 = vld [vmem:[%s4803 + $0x20] sm:$0xf]
      %v4813 = vld [vmem:[%s4803 + $0x24] sm:$0xf]
      %v4814 = vld [vmem:[%s4803 + $0x28] sm:$0xf]
      %v4815 = vld [vmem:[%s4803 + $0x2c] sm:$0xf]
      %v4816 = vld [vmem:[%s4803 + $0x30] sm:$0xf]
      %v4817 = vld [vmem:[%s4803 + $0x34] sm:$0xf]
      %v4818 = vld [vmem:[%s4803 + $0x38] sm:$0xf]
      %v4819 = vld [vmem:[%s4803 + $0x3c] sm:$0xf]
      %v4820 = vunpack.c.l.b16 %v4464
      %v4821 = vunpack.c.l.b16 %v4474
      %v4822 = vunpack.c.l.b16 %v4484
      %v4823 = vunpack.c.l.b16 %v4494
      %v4824 = vunpack.c.l.b16 %v4508
      %v4825 = vunpack.c.l.b16 %v4518
      %v4826 = vunpack.c.l.b16 %v4528
      %v4827 = vunpack.c.l.b16 %v4538
      %v4828 = vunpack.c.l.b16 %v4552
      %v4829 = vunpack.c.l.b16 %v4562
      %v4830 = vunpack.c.l.b16 %v4572
      %v4831 = vunpack.c.l.b16 %v4582
      %v4832 = vunpack.c.l.b16 %v4596
      %v4833 = vunpack.c.l.b16 %v4606
      %v4834 = vunpack.c.l.b16 %v4616
      %v4835 = vunpack.c.l.b16 %v4626
      %v4836 = vunpack.c.l.b16 %v4640
      %v4837 = vunpack.c.l.b16 %v4650
      %v4838 = vunpack.c.l.b16 %v4660
      %v4839 = vunpack.c.l.b16 %v4670
      %v4840 = vunpack.c.l.b16 %v4684
      %v4841 = vunpack.c.l.b16 %v4694
      %v4842 = vunpack.c.l.b16 %v4704
      %v4843 = vunpack.c.l.b16 %v4714
      %v4844 = vunpack.c.l.b16 %v4728
      %v4845 = vunpack.c.l.b16 %v4738
      %v4846 = vunpack.c.l.b16 %v4748
      %v4847 = vunpack.c.l.b16 %v4758
      %v4848 = vunpack.c.l.b16 %v4772
      %v4849 = vunpack.c.l.b16 %v4782
      %v4850 = vunpack.c.l.b16 %v4792
      %v4851 = vunpack.c.l.b16 %v4802
      %v4852 = vpack.c.b16 %v4821, %v4820
      %v4853 = vpack.c.b16 %v4823, %v4822
      %v4854 = vpack.c.b16 %v4825, %v4824
      %v4855 = vpack.c.b16 %v4827, %v4826
      %v4856 = vpack.c.b16 %v4829, %v4828
      %v4857 = vpack.c.b16 %v4831, %v4830
      %v4858 = vpack.c.b16 %v4833, %v4832
      %v4859 = vpack.c.b16 %v4835, %v4834
      %v4860 = vpack.c.b16 %v4837, %v4836
      %v4861 = vpack.c.b16 %v4839, %v4838
      %v4862 = vpack.c.b16 %v4841, %v4840
      %v4863 = vpack.c.b16 %v4843, %v4842
      %v4864 = vpack.c.b16 %v4845, %v4844
      %v4865 = vpack.c.b16 %v4847, %v4846
      %v4866 = vpack.c.b16 %v4849, %v4848
      %v4867 = vpack.c.b16 %v4851, %v4850
      %v4900 = vunpack.c.l.b16 %v4804
      %v4901 = vunpack.c.l.b16 %v4805
      %v4902 = vunpack.c.l.b16 %v4806
      %v4903 = vunpack.c.l.b16 %v4807
      %v4904 = vunpack.c.l.b16 %v4808
      %v4905 = vunpack.c.l.b16 %v4809
      %v4906 = vunpack.c.l.b16 %v4810
      %v4907 = vunpack.c.l.b16 %v4811
      %v4908 = vunpack.c.l.b16 %v4812
      %v4909 = vunpack.c.l.b16 %v4813
      %v4910 = vunpack.c.l.b16 %v4814
      %v4911 = vunpack.c.l.b16 %v4815
      %v4912 = vunpack.c.l.b16 %v4816
      %v4913 = vunpack.c.l.b16 %v4817
      %v4914 = vunpack.c.l.b16 %v4818
      %v4915 = vunpack.c.l.b16 %v4819
      %v4916 = vpack.c.b16 %v4901, %v4900
      %v4917 = vpack.c.b16 %v4903, %v4902
      %v4918 = vpack.c.b16 %v4905, %v4904
      %v4919 = vpack.c.b16 %v4907, %v4906
      %v4920 = vpack.c.b16 %v4909, %v4908
      %v4921 = vpack.c.b16 %v4911, %v4910
      %v4922 = vpack.c.b16 %v4913, %v4912
      %v4923 = vpack.c.b16 %v4915, %v4914
      %4932 = vmatprep.subr.bf16.mxu0 0
      %4933 = vmatpush1.bf16.msra.mxu0 %v4916
      %4934 = vmatprep.subr.bf16.mxu0 0
      %4935 = vmatpush1.bf16.msra.mxu0 %v4917
      %4936 = vmatprep.subr.bf16.mxu0 0
      %4937 = vmatpush1.bf16.msra.mxu0 %v4918
      %4938 = vmatprep.subr.bf16.mxu0 0
      %4939 = vmatpush1.bf16.msra.mxu0 %v4919
      %4940 = vmatprep.subr.bf16.mxu0 0
      %4941 = vmatpush1.bf16.msra.mxu0 %v4920
      %4942 = vmatprep.subr.bf16.mxu0 0
      %4943 = vmatpush1.bf16.msra.mxu0 %v4921
      %4944 = vmatprep.subr.bf16.mxu0 0
      %4945 = vmatpush1.bf16.msra.mxu0 %v4922
      %4946 = vmatprep.subr.bf16.mxu0 0
      %4947 = vmatpush1.bf16.msra.mxu0 %v4923
      %4948 = vmatprep.subr.bf16.mxu0 0
      %4949 = vmatpush1.bf16.msra.mxu0 0
      %4950 = vmatprep.subr.bf16.mxu0 0
      %4951 = vmatpush1.bf16.msra.mxu0 0
      %4952 = vmatprep.subr.bf16.mxu0 0
      %4953 = vmatpush1.bf16.msra.mxu0 0
      %4954 = vmatprep.subr.bf16.mxu0 0
      %4955 = vmatpush1.bf16.msra.mxu0 0
      %4956 = vmatprep.subr.bf16.mxu0 0
      %4957 = vmatpush1.bf16.msra.mxu0 0
      %4958 = vmatprep.subr.bf16.mxu0 0
      %4959 = vmatpush1.bf16.msra.mxu0 0
      %4960 = vmatprep.subr.bf16.mxu0 0
      %4961 = vmatpush1.bf16.msra.mxu0 0
      %4962 = vmatprep.subr.bf16.mxu0 0
      %4963 = vmatpush1.bf16.msra.mxu0 0
      %4964 = vmatprep.mubr.bf16.mxu0 0
      %4965 = vmatmul.mubr.bf16.gmra.mrb[0].mxu0 %v4852
      %v4966 = vpop.f32.mrb[0].mxu0
      %v4967 = vadd.f32 0.0, %v4966
      %v4968 = vpop.f32.mrb[0].mxu0
      %v4969 = vpop.f32.mrb[0].mxu0
      %v4970 = vadd.f32 0.0, %v4969
      %v4971 = vpop.f32.mrb[0].mxu0
      %4972 = vmatprep.mubr.bf16.mxu0 0
      %4973 = vmatmul.mubr.bf16.gmra.mrb[0].mxu0 %v4853
      %v4974 = vpop.f32.mrb[0].mxu0
      %v4975 = vadd.f32 0.0, %v4974
      %v4976 = vpop.f32.mrb[0].mxu0
      %v4977 = vpop.f32.mrb[0].mxu0
      %v4978 = vadd.f32 0.0, %v4977
      %v4979 = vpop.f32.mrb[0].mxu0
      %4980 = vmatprep.mubr.bf16.mxu0 0
      %4981 = vmatmul.mubr.bf16.gmra.mrb[0].mxu0 %v4854
      %v4982 = vpop.f32.mrb[0].mxu0
      %v4983 = vadd.f32 0.0, %v4982
      %v4984 = vpop.f32.mrb[0].mxu0
      %v4985 = vpop.f32.mrb[0].mxu0
      %v4986 = vadd.f32 0.0, %v4985
      %v4987 = vpop.f32.mrb[0].mxu0
      %4988 = vmatprep.mubr.bf16.mxu0 0
      %4989 = vmatmul.mubr.bf16.gmra.mrb[0].mxu0 %v4855
      %v4990 = vpop.f32.mrb[0].mxu0
      %v4991 = vadd.f32 0.0, %v4990
      %v4992 = vpop.f32.mrb[0].mxu0
      %v4993 = vpop.f32.mrb[0].mxu0
      %v4994 = vadd.f32 0.0, %v4993
      %v4995 = vpop.f32.mrb[0].mxu0
      %4996 = vmatprep.mubr.bf16.mxu0 0
      %4997 = vmatmul.mubr.bf16.gmra.mrb[0].mxu0 %v4856
      %v4998 = vpop.f32.mrb[0].mxu0
      %v4999 = vadd.f32 0.0, %v4998
      %v5000 = vpop.f32.mrb[0].mxu0
      %v5001 = vpop.f32.mrb[0].mxu0
      %v5002 = vadd.f32 0.0, %v5001
      %v5003 = vpop.f32.mrb[0].mxu0
      %5004 = vmatprep.mubr.bf16.mxu0 0
      %5005 = vmatmul.mubr.bf16.gmra.mrb[0].mxu0 %v4857
      %v5006 = vpop.f32.mrb[0].mxu0
      %v5007 = vadd.f32 0.0, %v5006
      %v5008 = vpop.f32.mrb[0].mxu0
      %v5009 = vpop.f32.mrb[0].mxu0
      %v5010 = vadd.f32 0.0, %v5009
      %v5011 = vpop.f32.mrb[0].mxu0
      %5012 = vmatprep.mubr.bf16.mxu0 0
      %5013 = vmatmul.mubr.bf16.gmra.mrb[0].mxu0 %v4858
      %v5014 = vpop.f32.mrb[0].mxu0
      %v5015 = vadd.f32 0.0, %v5014
      %v5016 = vpop.f32.mrb[0].mxu0
      %v5017 = vpop.f32.mrb[0].mxu0
      %v5018 = vadd.f32 0.0, %v5017
      %v5019 = vpop.f32.mrb[0].mxu0
      %5020 = vmatprep.mubr.bf16.mxu0 0
      %5021 = vmatmul.mubr.bf16.gmra.mrb[0].mxu0 %v4859
      %v5022 = vpop.f32.mrb[0].mxu0
      %v5023 = vadd.f32 0.0, %v5022
      %v5024 = vpop.f32.mrb[0].mxu0
      %v5025 = vpop.f32.mrb[0].mxu0
      %v5026 = vadd.f32 0.0, %v5025
      %v5027 = vpop.f32.mrb[0].mxu0
      %5028 = vmatprep.mubr.bf16.mxu0 0
      %5029 = vmatmul.mubr.bf16.gmra.mrb[0].mxu0 %v4860
      %v5030 = vpop.f32.mrb[0].mxu0
      %v5031 = vadd.f32 0.0, %v5030
      %v5032 = vpop.f32.mrb[0].mxu0
      %v5033 = vpop.f32.mrb[0].mxu0
      %v5034 = vadd.f32 0.0, %v5033
      %v5035 = vpop.f32.mrb[0].mxu0
      %5036 = vmatprep.mubr.bf16.mxu0 0
      %5037 = vmatmul.mubr.bf16.gmra.mrb[0].mxu0 %v4861
      %v5038 = vpop.f32.mrb[0].mxu0
      %v5039 = vadd.f32 0.0, %v5038
      %v5040 = vpop.f32.mrb[0].mxu0
      %v5041 = vpop.f32.mrb[0].mxu0
      %v5042 = vadd.f32 0.0, %v5041
      %v5043 = vpop.f32.mrb[0].mxu0
      %5044 = vmatprep.mubr.bf16.mxu0 0
      %5045 = vmatmul.mubr.bf16.gmra.mrb[0].mxu0 %v4862
      %v5046 = vpop.f32.mrb[0].mxu0
      %v5047 = vadd.f32 0.0, %v5046
      %v5048 = vpop.f32.mrb[0].mxu0
      %v5049 = vpop.f32.mrb[0].mxu0
      %v5050 = vadd.f32 0.0, %v5049
      %v5051 = vpop.f32.mrb[0].mxu0
      %5052 = vmatprep.mubr.bf16.mxu0 0
      %5053 = vmatmul.mubr.bf16.gmra.mrb[0].mxu0 %v4863
      %v5054 = vpop.f32.mrb[0].mxu0
      %v5055 = vadd.f32 0.0, %v5054
      %v5056 = vpop.f32.mrb[0].mxu0
      %v5057 = vpop.f32.mrb[0].mxu0
      %v5058 = vadd.f32 0.0, %v5057
      %v5059 = vpop.f32.mrb[0].mxu0
      %5060 = vmatprep.mubr.bf16.mxu0 0
      %5061 = vmatmul.mubr.bf16.gmra.mrb[0].mxu0 %v4864
      %v5062 = vpop.f32.mrb[0].mxu0
      %v5063 = vadd.f32 0.0, %v5062
      %v5064 = vpop.f32.mrb[0].mxu0
      %v5065 = vpop.f32.mrb[0].mxu0
      %v5066 = vadd.f32 0.0, %v5065
      %v5067 = vpop.f32.mrb[0].mxu0
      %5068 = vmatprep.mubr.bf16.mxu0 0
      %5069 = vmatmul.mubr.bf16.gmra.mrb[0].mxu0 %v4865
      %v5070 = vpop.f32.mrb[0].mxu0
      %v5071 = vadd.f32 0.0, %v5070
      %v5072 = vpop.f32.mrb[0].mxu0
      %v5073 = vpop.f32.mrb[0].mxu0
      %v5074 = vadd.f32 0.0, %v5073
      %v5075 = vpop.f32.mrb[0].mxu0
      %5076 = vmatprep.mubr.bf16.mxu0 0
      %5077 = vmatmul.mubr.bf16.gmra.mrb[0].mxu0 %v4866
      %v5078 = vpop.f32.mrb[0].mxu0
      %v5079 = vadd.f32 0.0, %v5078
      %v5080 = vpop.f32.mrb[0].mxu0
      %v5081 = vpop.f32.mrb[0].mxu0
      %v5082 = vadd.f32 0.0, %v5081
      %v5083 = vpop.f32.mrb[0].mxu0
      %5084 = vmatprep.mubr.bf16.mxu0 0
      %5085 = vmatmul.mubr.bf16.gmra.mrb[0].mxu0 %v4867
      %v5086 = vpop.f32.mrb[0].mxu0
      %v5087 = vadd.f32 0.0, %v5086
      %v5088 = vpop.f32.mrb[0].mxu0
      %v5089 = vpop.f32.mrb[0].mxu0
      %v5090 = vadd.f32 0.0, %v5089
      %v5091 = vpop.f32.mrb[0].mxu0
      %5092 = vdwg.mxu0
      %v5093 = vadd.f32 %v4419, %v4967
      %v5094 = vadd.f32 %v4420, %v4970
      %v5095 = vadd.f32 %v4421, %v4975
      %v5096 = vadd.f32 %v4422, %v4978
      %v5097 = vadd.f32 %v4423, %v4983
      %v5098 = vadd.f32 %v4424, %v4986
      %v5099 = vadd.f32 %v4425, %v4991
      %v5100 = vadd.f32 %v4426, %v4994
      %v5101 = vadd.f32 %v4427, %v4999
      %v5102 = vadd.f32 %v4428, %v5002
      %v5103 = vadd.f32 %v4429, %v5007
      %v5104 = vadd.f32 %v4430, %v5010
      %v5105 = vadd.f32 %v4431, %v5015
      %v5106 = vadd.f32 %v4432, %v5018
      %v5107 = vadd.f32 %v4433, %v5023
      %v5108 = vadd.f32 %v4434, %v5026
      %v5109 = vadd.f32 %v4435, %v5031
      %v5110 = vadd.f32 %v4436, %v5034
      %v5111 = vadd.f32 %v4437, %v5039
      %v5112 = vadd.f32 %v4438, %v5042
      %v5113 = vadd.f32 %v4439, %v5047
      %v5114 = vadd.f32 %v4440, %v5050
      %v5115 = vadd.f32 %v4441, %v5055
      %v5116 = vadd.f32 %v4442, %v5058
      %v5117 = vadd.f32 %v4443, %v5063
      %v5118 = vadd.f32 %v4444, %v5066
      %v5119 = vadd.f32 %v4445, %v5071
      %v5120 = vadd.f32 %v4446, %v5074
      %v5121 = vadd.f32 %v4447, %v5079
      %v5122 = vadd.f32 %v4448, %v5082
      %v5123 = vadd.f32 %v4449, %v5087
      %v5124 = vadd.f32 %v4450, %v5090
      %5125 = vst [vmem:[#allocation2] sm:$0xff] %v5093
      %5126 = vst [vmem:[#allocation2 + $0x8] sm:$0xff] %v5094
      %5127 = vst [vmem:[#allocation2 + $0x10] sm:$0xff] %v5095
      %5128 = vst [vmem:[#allocation2 + $0x18] sm:$0xff] %v5096
      %5129 = vst [vmem:[#allocation2 + $0x20] sm:$0xff] %v5097
      %5130 = vst [vmem:[#allocation2 + $0x28] sm:$0xff] %v5098
      %5131 = vst [vmem:[#allocation2 + $0x30] sm:$0xff] %v5099
      %5132 = vst [vmem:[#allocation2 + $0x38] sm:$0xff] %v5100
      %5133 = vst [vmem:[#allocation2 + $0x40] sm:$0xff] %v5101
      %5134 = vst [vmem:[#allocation2 + $0x48] sm:$0xff] %v5102
      %5135 = vst [vmem:[#allocation2 + $0x50] sm:$0xff] %v5103
      %5136 = vst [vmem:[#allocation2 + $0x58] sm:$0xff] %v5104
      %5137 = vst [vmem:[#allocation2 + $0x60] sm:$0xff] %v5105
      %5138 = vst [vmem:[#allocation2 + $0x68] sm:$0xff] %v5106
      %5139 = vst [vmem:[#allocation2 + $0x70] sm:$0xff] %v5107
      %5140 = vst [vmem:[#allocation2 + $0x78] sm:$0xff] %v5108
      %5141 = vst [vmem:[#allocation2 + $0x80] sm:$0xff] %v5109
      %5142 = vst [vmem:[#allocation2 + $0x88] sm:$0xff] %v5110
      %5143 = vst [vmem:[#allocation2 + $0x90] sm:$0xff] %v5111
      %5144 = vst [vmem:[#allocation2 + $0x98] sm:$0xff] %v5112
      %5145 = vst [vmem:[#allocation2 + $0xa0] sm:$0xff] %v5113
      %5146 = vst [vmem:[#allocation2 + $0xa8] sm:$0xff] %v5114
      %5147 = vst [vmem:[#allocation2 + $0xb0] sm:$0xff] %v5115
      %5148 = vst [vmem:[#allocation2 + $0xb8] sm:$0xff] %v5116
      %5149 = vst [vmem:[#allocation2 + $0xc0] sm:$0xff] %v5117
      %5150 = vst [vmem:[#allocation2 + $0xc8] sm:$0xff] %v5118
      %5151 = vst [vmem:[#allocation2 + $0xd0] sm:$0xff] %v5119
      %5152 = vst [vmem:[#allocation2 + $0xd8] sm:$0xff] %v5120
      %5153 = vst [vmem:[#allocation2 + $0xe0] sm:$0xff] %v5121
      %5154 = vst [vmem:[#allocation2 + $0xe8] sm:$0xff] %v5122
      %5155 = vst [vmem:[#allocation2 + $0xf0] sm:$0xff] %v5123
      %5156 = vst [vmem:[#allocation2 + $0xf8] sm:$0xff] %v5124
      %v5157 = vld [vmem:[%s3928] sm:$0xe]
      %v5158 = vld [vmem:[%s3928 + $0x4] sm:$0xf]
      %v5159 = vld [vmem:[%s3928 + $0x8] sm:$0xf]
      %v5160 = vld [vmem:[%s3928 + $0xc] sm:$0xf]
      %v5161 = vld [vmem:[%s3928 + $0x10] sm:$0x1]
      %v5162 = vld [vmem:[%s3928 + $0x14] sm:$0xe]
      %v5163 = vld [vmem:[%s3928 + $0x18] sm:$0xf]
      %v5164 = vld [vmem:[%s3928 + $0x1c] sm:$0xf]
      %v5165 = vld [vmem:[%s3928 + $0x20] sm:$0xf]
      %v5166 = vld [vmem:[%s3928 + $0x24] sm:$0x1]
      %v5167 = vld [vmem:[%s3928 + $0x28] sm:$0xe]
      %v5168 = vld [vmem:[%s3928 + $0x2c] sm:$0xf]
      %v5169 = vld [vmem:[%s3928 + $0x30] sm:$0xf]
      %v5170 = vld [vmem:[%s3928 + $0x34] sm:$0xf]
      %v5171 = vld [vmem:[%s3928 + $0x38] sm:$0x1]
      %v5172 = vld [vmem:[%s3928 + $0x3c] sm:$0xe]
      %v5173 = vld [vmem:[%s3928 + $0x40] sm:$0xf]
      %v5174 = vld [vmem:[%s3928 + $0x44] sm:$0xf]
      %v5175 = vld [vmem:[%s3928 + $0x48] sm:$0xf]
      %v5176 = vld [vmem:[%s3928 + $0x4c] sm:$0x1]
      %v5177 = vld [vmem:[%s3928 + $0x50] sm:$0xe]
      %v5178 = vld [vmem:[%s3928 + $0x54] sm:$0xf]
      %v5179 = vld [vmem:[%s3928 + $0x58] sm:$0xf]
      %v5180 = vld [vmem:[%s3928 + $0x5c] sm:$0xf]
      %v5181 = vld [vmem:[%s3928 + $0x60] sm:$0x1]
      %v5182 = vld [vmem:[%s3928 + $0x64] sm:$0xe]
      %v5183 = vld [vmem:[%s3928 + $0x68] sm:$0xf]
      %v5184 = vld [vmem:[%s3928 + $0x6c] sm:$0xf]
      %v5185 = vld [vmem:[%s3928 + $0x70] sm:$0xf]
      %v5186 = vld [vmem:[%s3928 + $0x74] sm:$0x1]
      %v5187 = vld [vmem:[%s3928 + $0x78] sm:$0xe]
      %v5188 = vld [vmem:[%s3928 + $0x7c] sm:$0xf]
      %v5189 = vld [vmem:[%s3928 + $0x80] sm:$0xf]
      %v5190 = vld [vmem:[%s3928 + $0x84] sm:$0xf]
      %v5191 = vld [vmem:[%s3928 + $0x88] sm:$0x1]
      %v5192 = vld [vmem:[%s3928 + $0x8c] sm:$0xe]
      %v5193 = vld [vmem:[%s3928 + $0x90] sm:$0xf]
      %v5194 = vld [vmem:[%s3928 + $0x94] sm:$0xf]
      %v5195 = vld [vmem:[%s3928 + $0x98] sm:$0xf]
      %v5196 = vld [vmem:[%s3928 + $0x9c] sm:$0x1]
      %v5197 = vld [vmem:[#allocation2] sm:$0xff]
      %v5198 = vld [vmem:[#allocation2 + $0x8] sm:$0xff]
      %v5199 = vld [vmem:[#allocation2 + $0x10] sm:$0xff]
      %v5200 = vld [vmem:[#allocation2 + $0x18] sm:$0xff]
      %v5201 = vld [vmem:[#allocation2 + $0x20] sm:$0xff]
      %v5202 = vld [vmem:[#allocation2 + $0x28] sm:$0xff]
      %v5203 = vld [vmem:[#allocation2 + $0x30] sm:$0xff]
      %v5204 = vld [vmem:[#allocation2 + $0x38] sm:$0xff]
      %v5205 = vld [vmem:[#allocation2 + $0x40] sm:$0xff]
      %v5206 = vld [vmem:[#allocation2 + $0x48] sm:$0xff]
      %v5207 = vld [vmem:[#allocation2 + $0x50] sm:$0xff]
      %v5208 = vld [vmem:[#allocation2 + $0x58] sm:$0xff]
      %v5209 = vld [vmem:[#allocation2 + $0x60] sm:$0xff]
      %v5210 = vld [vmem:[#allocation2 + $0x68] sm:$0xff]
      %v5211 = vld [vmem:[#allocation2 + $0x70] sm:$0xff]
      %v5212 = vld [vmem:[#allocation2 + $0x78] sm:$0xff]
      %v5213 = vld [vmem:[#allocation2 + $0x80] sm:$0xff]
      %v5214 = vld [vmem:[#allocation2 + $0x88] sm:$0xff]
      %v5215 = vld [vmem:[#allocation2 + $0x90] sm:$0xff]
      %v5216 = vld [vmem:[#allocation2 + $0x98] sm:$0xff]
      %v5217 = vld [vmem:[#allocation2 + $0xa0] sm:$0xff]
      %v5218 = vld [vmem:[#allocation2 + $0xa8] sm:$0xff]
      %v5219 = vld [vmem:[#allocation2 + $0xb0] sm:$0xff]
      %v5220 = vld [vmem:[#allocation2 + $0xb8] sm:$0xff]
      %v5221 = vld [vmem:[#allocation2 + $0xc0] sm:$0xff]
      %v5222 = vld [vmem:[#allocation2 + $0xc8] sm:$0xff]
      %v5223 = vld [vmem:[#allocation2 + $0xd0] sm:$0xff]
      %v5224 = vld [vmem:[#allocation2 + $0xd8] sm:$0xff]
      %v5225 = vld [vmem:[#allocation2 + $0xe0] sm:$0xff]
      %v5226 = vld [vmem:[#allocation2 + $0xe8] sm:$0xff]
      %v5227 = vld [vmem:[#allocation2 + $0xf0] sm:$0xff]
      %v5228 = vld [vmem:[#allocation2 + $0xf8] sm:$0xff]
      %v5269 = vrot.slane %v5157, 5
      %v5270 = vrot.slane %v5269, 4
      %v5271 = vrot.slane %v5158, 5
      %v5272 = vsel %vm1664, %v5270, %v5271
      %v5273 = vrot.slane %v5271, 4
      %v5274 = vrot.slane %v5159, 5
      %v5275 = vsel %vm1664, %v5273, %v5274
      %v5276 = vrot.slane %v5274, 4
      %v5277 = vrot.slane %v5160, 5
      %v5278 = vsel %vm1664, %v5276, %v5277
      %v5279 = vrot.slane %v5277, 4
      %v5280 = vrot.slane %v5161, 5
      %v5281 = vsel %vm1664, %v5279, %v5280
      %v5282 = vrot.slane %v5162, 5
      %v5283 = vrot.slane %v5282, 4
      %v5284 = vrot.slane %v5163, 5
      %v5285 = vsel %vm1664, %v5283, %v5284
      %v5286 = vrot.slane %v5284, 4
      %v5287 = vrot.slane %v5164, 5
      %v5288 = vsel %vm1664, %v5286, %v5287
      %v5289 = vrot.slane %v5287, 4
      %v5290 = vrot.slane %v5165, 5
      %v5291 = vsel %vm1664, %v5289, %v5290
      %v5292 = vrot.slane %v5290, 4
      %v5293 = vrot.slane %v5166, 5
      %v5294 = vsel %vm1664, %v5292, %v5293
      %v5295 = vrot.slane %v5167, 5
      %v5296 = vrot.slane %v5295, 4
      %v5297 = vrot.slane %v5168, 5
      %v5298 = vsel %vm1664, %v5296, %v5297
      %v5299 = vrot.slane %v5297, 4
      %v5300 = vrot.slane %v5169, 5
      %v5301 = vsel %vm1664, %v5299, %v5300
      %v5302 = vrot.slane %v5300, 4
      %v5303 = vrot.slane %v5170, 5
      %v5304 = vsel %vm1664, %v5302, %v5303
      %v5305 = vrot.slane %v5303, 4
      %v5306 = vrot.slane %v5171, 5
      %v5307 = vsel %vm1664, %v5305, %v5306
      %v5308 = vrot.slane %v5172, 5
      %v5309 = vrot.slane %v5308, 4
      %v5310 = vrot.slane %v5173, 5
      %v5311 = vsel %vm1664, %v5309, %v5310
      %v5312 = vrot.slane %v5310, 4
      %v5313 = vrot.slane %v5174, 5
      %v5314 = vsel %vm1664, %v5312, %v5313
      %v5315 = vrot.slane %v5313, 4
      %v5316 = vrot.slane %v5175, 5
      %v5317 = vsel %vm1664, %v5315, %v5316
      %v5318 = vrot.slane %v5316, 4
      %v5319 = vrot.slane %v5176, 5
      %v5320 = vsel %vm1664, %v5318, %v5319
      %v5321 = vrot.slane %v5177, 5
      %v5322 = vrot.slane %v5321, 4
      %v5323 = vrot.slane %v5178, 5
      %v5324 = vsel %vm1664, %v5322, %v5323
      %v5325 = vrot.slane %v5323, 4
      %v5326 = vrot.slane %v5179, 5
      %v5327 = vsel %vm1664, %v5325, %v5326
      %v5328 = vrot.slane %v5326, 4
      %v5329 = vrot.slane %v5180, 5
      %v5330 = vsel %vm1664, %v5328, %v5329
      %v5331 = vrot.slane %v5329, 4
      %v5332 = vrot.slane %v5181, 5
      %v5333 = vsel %vm1664, %v5331, %v5332
      %v5334 = vrot.slane %v5182, 5
      %v5335 = vrot.slane %v5334, 4
      %v5336 = vrot.slane %v5183, 5
      %v5337 = vsel %vm1664, %v5335, %v5336
      %v5338 = vrot.slane %v5336, 4
      %v5339 = vrot.slane %v5184, 5
      %v5340 = vsel %vm1664, %v5338, %v5339
      %v5341 = vrot.slane %v5339, 4
      %v5342 = vrot.slane %v5185, 5
      %v5343 = vsel %vm1664, %v5341, %v5342
      %v5344 = vrot.slane %v5342, 4
      %v5345 = vrot.slane %v5186, 5
      %v5346 = vsel %vm1664, %v5344, %v5345
      %v5347 = vrot.slane %v5187, 5
      %v5348 = vrot.slane %v5347, 4
      %v5349 = vrot.slane %v5188, 5
      %v5350 = vsel %vm1664, %v5348, %v5349
      %v5351 = vrot.slane %v5349, 4
      %v5352 = vrot.slane %v5189, 5
      %v5353 = vsel %vm1664, %v5351, %v5352
      %v5354 = vrot.slane %v5352, 4
      %v5355 = vrot.slane %v5190, 5
      %v5356 = vsel %vm1664, %v5354, %v5355
      %v5357 = vrot.slane %v5355, 4
      %v5358 = vrot.slane %v5191, 5
      %v5359 = vsel %vm1664, %v5357, %v5358
      %v5360 = vrot.slane %v5192, 5
      %v5361 = vrot.slane %v5360, 4
      %v5362 = vrot.slane %v5193, 5
      %v5363 = vsel %vm1664, %v5361, %v5362
      %v5364 = vrot.slane %v5362, 4
      %v5365 = vrot.slane %v5194, 5
      %v5366 = vsel %vm1664, %v5364, %v5365
      %v5367 = vrot.slane %v5365, 4
      %v5368 = vrot.slane %v5195, 5
      %v5369 = vsel %vm1664, %v5367, %v5368
      %v5370 = vrot.slane %v5368, 4
      %v5371 = vrot.slane %v5196, 5
      %v5372 = vsel %vm1664, %v5370, %v5371
      %s5373 = scalar_lea.vmem %s262, 512
      %v5374 = vld [vmem:[%s5373] sm:$0xf]
      %v5375 = vld [vmem:[%s5373 + $0x4] sm:$0xf]
      %v5376 = vld [vmem:[%s5373 + $0x8] sm:$0xf]
      %v5377 = vld [vmem:[%s5373 + $0xc] sm:$0xf]
      %v5378 = vld [vmem:[%s5373 + $0x10] sm:$0xf]
      %v5379 = vld [vmem:[%s5373 + $0x14] sm:$0xf]
      %v5380 = vld [vmem:[%s5373 + $0x18] sm:$0xf]
      %v5381 = vld [vmem:[%s5373 + $0x1c] sm:$0xf]
      %v5382 = vld [vmem:[%s5373 + $0x20] sm:$0xf]
      %v5383 = vld [vmem:[%s5373 + $0x24] sm:$0xf]
      %v5384 = vld [vmem:[%s5373 + $0x28] sm:$0xf]
      %v5385 = vld [vmem:[%s5373 + $0x2c] sm:$0xf]
      %v5386 = vld [vmem:[%s5373 + $0x30] sm:$0xf]
      %v5387 = vld [vmem:[%s5373 + $0x34] sm:$0xf]
      %v5388 = vld [vmem:[%s5373 + $0x38] sm:$0xf]
      %v5389 = vld [vmem:[%s5373 + $0x3c] sm:$0xf]
      %v5390 = vunpack.c.l.b16 %v5272
      %v5391 = vunpack.c.l.b16 %v5275
      %v5392 = vunpack.c.l.b16 %v5278
      %v5393 = vunpack.c.l.b16 %v5281
      %v5394 = vunpack.c.l.b16 %v5285
      %v5395 = vunpack.c.l.b16 %v5288
      %v5396 = vunpack.c.l.b16 %v5291
      %v5397 = vunpack.c.l.b16 %v5294
      %v5398 = vunpack.c.l.b16 %v5298
      %v5399 = vunpack.c.l.b16 %v5301
      %v5400 = vunpack.c.l.b16 %v5304
      %v5401 = vunpack.c.l.b16 %v5307
      %v5402 = vunpack.c.l.b16 %v5311
      %v5403 = vunpack.c.l.b16 %v5314
      %v5404 = vunpack.c.l.b16 %v5317
      %v5405 = vunpack.c.l.b16 %v5320
      %v5406 = vunpack.c.l.b16 %v5324
      %v5407 = vunpack.c.l.b16 %v5327
      %v5408 = vunpack.c.l.b16 %v5330
      %v5409 = vunpack.c.l.b16 %v5333
      %v5410 = vunpack.c.l.b16 %v5337
      %v5411 = vunpack.c.l.b16 %v5340
      %v5412 = vunpack.c.l.b16 %v5343
      %v5413 = vunpack.c.l.b16 %v5346
      %v5414 = vunpack.c.l.b16 %v5350
      %v5415 = vunpack.c.l.b16 %v5353
      %v5416 = vunpack.c.l.b16 %v5356
      %v5417 = vunpack.c.l.b16 %v5359
      %v5418 = vunpack.c.l.b16 %v5363
      %v5419 = vunpack.c.l.b16 %v5366
      %v5420 = vunpack.c.l.b16 %v5369
      %v5421 = vunpack.c.l.b16 %v5372
      %v5422 = vpack.c.b16 %v5391, %v5390
      %v5423 = vpack.c.b16 %v5393, %v5392
      %v5424 = vpack.c.b16 %v5395, %v5394
      %v5425 = vpack.c.b16 %v5397, %v5396
      %v5426 = vpack.c.b16 %v5399, %v5398
      %v5427 = vpack.c.b16 %v5401, %v5400
      %v5428 = vpack.c.b16 %v5403, %v5402
      %v5429 = vpack.c.b16 %v5405, %v5404
      %v5430 = vpack.c.b16 %v5407, %v5406
      %v5431 = vpack.c.b16 %v5409, %v5408
      %v5432 = vpack.c.b16 %v5411, %v5410
      %v5433 = vpack.c.b16 %v5413, %v5412
      %v5434 = vpack.c.b16 %v5415, %v5414
      %v5435 = vpack.c.b16 %v5417, %v5416
      %v5436 = vpack.c.b16 %v5419, %v5418
      %v5437 = vpack.c.b16 %v5421, %v5420
      %v5470 = vunpack.c.l.b16 %v5374
      %v5471 = vunpack.c.l.b16 %v5375
      %v5472 = vunpack.c.l.b16 %v5376
      %v5473 = vunpack.c.l.b16 %v5377
      %v5474 = vunpack.c.l.b16 %v5378
      %v5475 = vunpack.c.l.b16 %v5379
      %v5476 = vunpack.c.l.b16 %v5380
      %v5477 = vunpack.c.l.b16 %v5381
      %v5478 = vunpack.c.l.b16 %v5382
      %v5479 = vunpack.c.l.b16 %v5383
      %v5480 = vunpack.c.l.b16 %v5384
      %v5481 = vunpack.c.l.b16 %v5385
      %v5482 = vunpack.c.l.b16 %v5386
      %v5483 = vunpack.c.l.b16 %v5387
      %v5484 = vunpack.c.l.b16 %v5388
      %v5485 = vunpack.c.l.b16 %v5389
      %v5486 = vpack.c.b16 %v5471, %v5470
      %v5487 = vpack.c.b16 %v5473, %v5472
      %v5488 = vpack.c.b16 %v5475, %v5474
      %v5489 = vpack.c.b16 %v5477, %v5476
      %v5490 = vpack.c.b16 %v5479, %v5478
      %v5491 = vpack.c.b16 %v5481, %v5480
      %v5492 = vpack.c.b16 %v5483, %v5482
      %v5493 = vpack.c.b16 %v5485, %v5484
      %5502 = vmatprep.subr.bf16.mxu0 0
      %5503 = vmatpush1.bf16.msra.mxu0 %v5486
      %5504 = vmatprep.subr.bf16.mxu0 0
      %5505 = vmatpush1.bf16.msra.mxu0 %v5487
      %5506 = vmatprep.subr.bf16.mxu0 0
      %5507 = vmatpush1.bf16.msra.mxu0 %v5488
      %5508 = vmatprep.subr.bf16.mxu0 0
      %5509 = vmatpush1.bf16.msra.mxu0 %v5489
      %5510 = vmatprep.subr.bf16.mxu0 0
      %5511 = vmatpush1.bf16.msra.mxu0 %v5490
      %5512 = vmatprep.subr.bf16.mxu0 0
      %5513 = vmatpush1.bf16.msra.mxu0 %v5491
      %5514 = vmatprep.subr.bf16.mxu0 0
      %5515 = vmatpush1.bf16.msra.mxu0 %v5492
      %5516 = vmatprep.subr.bf16.mxu0 0
      %5517 = vmatpush1.bf16.msra.mxu0 %v5493
      %5518 = vmatprep.subr.bf16.mxu0 0
      %5519 = vmatpush1.bf16.msra.mxu0 0
      %5520 = vmatprep.subr.bf16.mxu0 0
      %5521 = vmatpush1.bf16.msra.mxu0 0
      %5522 = vmatprep.subr.bf16.mxu0 0
      %5523 = vmatpush1.bf16.msra.mxu0 0
      %5524 = vmatprep.subr.bf16.mxu0 0
      %5525 = vmatpush1.bf16.msra.mxu0 0
      %5526 = vmatprep.subr.bf16.mxu0 0
      %5527 = vmatpush1.bf16.msra.mxu0 0
      %5528 = vmatprep.subr.bf16.mxu0 0
      %5529 = vmatpush1.bf16.msra.mxu0 0
      %5530 = vmatprep.subr.bf16.mxu0 0
      %5531 = vmatpush1.bf16.msra.mxu0 0
      %5532 = vmatprep.subr.bf16.mxu0 0
      %5533 = vmatpush1.bf16.msra.mxu0 0
      %5534 = vmatprep.mubr.bf16.mxu0 0
      %5535 = vmatmul.mubr.bf16.gmra.mrb[0].mxu0 %v5422
      %v5536 = vpop.f32.mrb[0].mxu0
      %v5537 = vadd.f32 0.0, %v5536
      %v5538 = vpop.f32.mrb[0].mxu0
      %v5539 = vpop.f32.mrb[0].mxu0
      %v5540 = vadd.f32 0.0, %v5539
      %v5541 = vpop.f32.mrb[0].mxu0
      %5542 = vmatprep.mubr.bf16.mxu0 0
      %5543 = vmatmul.mubr.bf16.gmra.mrb[0].mxu0 %v5423
      %v5544 = vpop.f32.mrb[0].mxu0
      %v5545 = vadd.f32 0.0, %v5544
      %v5546 = vpop.f32.mrb[0].mxu0
      %v5547 = vpop.f32.mrb[0].mxu0
      %v5548 = vadd.f32 0.0, %v5547
      %v5549 = vpop.f32.mrb[0].mxu0
      %5550 = vmatprep.mubr.bf16.mxu0 0
      %5551 = vmatmul.mubr.bf16.gmra.mrb[0].mxu0 %v5424
      %v5552 = vpop.f32.mrb[0].mxu0
      %v5553 = vadd.f32 0.0, %v5552
      %v5554 = vpop.f32.mrb[0].mxu0
      %v5555 = vpop.f32.mrb[0].mxu0
      %v5556 = vadd.f32 0.0, %v5555
      %v5557 = vpop.f32.mrb[0].mxu0
      %5558 = vmatprep.mubr.bf16.mxu0 0
      %5559 = vmatmul.mubr.bf16.gmra.mrb[0].mxu0 %v5425
      %v5560 = vpop.f32.mrb[0].mxu0
      %v5561 = vadd.f32 0.0, %v5560
      %v5562 = vpop.f32.mrb[0].mxu0
      %v5563 = vpop.f32.mrb[0].mxu0
      %v5564 = vadd.f32 0.0, %v5563
      %v5565 = vpop.f32.mrb[0].mxu0
      %5566 = vmatprep.mubr.bf16.mxu0 0
      %5567 = vmatmul.mubr.bf16.gmra.mrb[0].mxu0 %v5426
      %v5568 = vpop.f32.mrb[0].mxu0
      %v5569 = vadd.f32 0.0, %v5568
      %v5570 = vpop.f32.mrb[0].mxu0
      %v5571 = vpop.f32.mrb[0].mxu0
      %v5572 = vadd.f32 0.0, %v5571
      %v5573 = vpop.f32.mrb[0].mxu0
      %5574 = vmatprep.mubr.bf16.mxu0 0
      %5575 = vmatmul.mubr.bf16.gmra.mrb[0].mxu0 %v5427
      %v5576 = vpop.f32.mrb[0].mxu0
      %v5577 = vadd.f32 0.0, %v5576
      %v5578 = vpop.f32.mrb[0].mxu0
      %v5579 = vpop.f32.mrb[0].mxu0
      %v5580 = vadd.f32 0.0, %v5579
      %v5581 = vpop.f32.mrb[0].mxu0
      %5582 = vmatprep.mubr.bf16.mxu0 0
      %5583 = vmatmul.mubr.bf16.gmra.mrb[0].mxu0 %v5428
      %v5584 = vpop.f32.mrb[0].mxu0
      %v5585 = vadd.f32 0.0, %v5584
      %v5586 = vpop.f32.mrb[0].mxu0
      %v5587 = vpop.f32.mrb[0].mxu0
      %v5588 = vadd.f32 0.0, %v5587
      %v5589 = vpop.f32.mrb[0].mxu0
      %5590 = vmatprep.mubr.bf16.mxu0 0
      %5591 = vmatmul.mubr.bf16.gmra.mrb[0].mxu0 %v5429
      %v5592 = vpop.f32.mrb[0].mxu0
      %v5593 = vadd.f32 0.0, %v5592
      %v5594 = vpop.f32.mrb[0].mxu0
      %v5595 = vpop.f32.mrb[0].mxu0
      %v5596 = vadd.f32 0.0, %v5595
      %v5597 = vpop.f32.mrb[0].mxu0
      %5598 = vmatprep.mubr.bf16.mxu0 0
      %5599 = vmatmul.mubr.bf16.gmra.mrb[0].mxu0 %v5430
      %v5600 = vpop.f32.mrb[0].mxu0
      %v5601 = vadd.f32 0.0, %v5600
      %v5602 = vpop.f32.mrb[0].mxu0
      %v5603 = vpop.f32.mrb[0].mxu0
      %v5604 = vadd.f32 0.0, %v5603
      %v5605 = vpop.f32.mrb[0].mxu0
      %5606 = vmatprep.mubr.bf16.mxu0 0
      %5607 = vmatmul.mubr.bf16.gmra.mrb[0].mxu0 %v5431
      %v5608 = vpop.f32.mrb[0].mxu0
      %v5609 = vadd.f32 0.0, %v5608
      %v5610 = vpop.f32.mrb[0].mxu0
      %v5611 = vpop.f32.mrb[0].mxu0
      %v5612 = vadd.f32 0.0, %v5611
      %v5613 = vpop.f32.mrb[0].mxu0
      %5614 = vmatprep.mubr.bf16.mxu0 0
      %5615 = vmatmul.mubr.bf16.gmra.mrb[0].mxu0 %v5432
      %v5616 = vpop.f32.mrb[0].mxu0
      %v5617 = vadd.f32 0.0, %v5616
      %v5618 = vpop.f32.mrb[0].mxu0
      %v5619 = vpop.f32.mrb[0].mxu0
      %v5620 = vadd.f32 0.0, %v5619
      %v5621 = vpop.f32.mrb[0].mxu0
      %5622 = vmatprep.mubr.bf16.mxu0 0
      %5623 = vmatmul.mubr.bf16.gmra.mrb[0].mxu0 %v5433
      %v5624 = vpop.f32.mrb[0].mxu0
      %v5625 = vadd.f32 0.0, %v5624
      %v5626 = vpop.f32.mrb[0].mxu0
      %v5627 = vpop.f32.mrb[0].mxu0
      %v5628 = vadd.f32 0.0, %v5627
      %v5629 = vpop.f32.mrb[0].mxu0
      %5630 = vmatprep.mubr.bf16.mxu0 0
      %5631 = vmatmul.mubr.bf16.gmra.mrb[0].mxu0 %v5434
      %v5632 = vpop.f32.mrb[0].mxu0
      %v5633 = vadd.f32 0.0, %v5632
      %v5634 = vpop.f32.mrb[0].mxu0
      %v5635 = vpop.f32.mrb[0].mxu0
      %v5636 = vadd.f32 0.0, %v5635
      %v5637 = vpop.f32.mrb[0].mxu0
      %5638 = vmatprep.mubr.bf16.mxu0 0
      %5639 = vmatmul.mubr.bf16.gmra.mrb[0].mxu0 %v5435
      %v5640 = vpop.f32.mrb[0].mxu0
      %v5641 = vadd.f32 0.0, %v5640
      %v5642 = vpop.f32.mrb[0].mxu0
      %v5643 = vpop.f32.mrb[0].mxu0
      %v5644 = vadd.f32 0.0, %v5643
      %v5645 = vpop.f32.mrb[0].mxu0
      %5646 = vmatprep.mubr.bf16.mxu0 0
      %5647 = vmatmul.mubr.bf16.gmra.mrb[0].mxu0 %v5436
      %v5648 = vpop.f32.mrb[0].mxu0
      %v5649 = vadd.f32 0.0, %v5648
      %v5650 = vpop.f32.mrb[0].mxu0
      %v5651 = vpop.f32.mrb[0].mxu0
      %v5652 = vadd.f32 0.0, %v5651
      %v5653 = vpop.f32.mrb[0].mxu0
      %5654 = vmatprep.mubr.bf16.mxu0 0
      %5655 = vmatmul.mubr.bf16.gmra.mrb[0].mxu0 %v5437
      %v5656 = vpop.f32.mrb[0].mxu0
      %v5657 = vadd.f32 0.0, %v5656
      %v5658 = vpop.f32.mrb[0].mxu0
      %v5659 = vpop.f32.mrb[0].mxu0
      %v5660 = vadd.f32 0.0, %v5659
      %v5661 = vpop.f32.mrb[0].mxu0
      %5662 = vdwg.mxu0
      %v5663 = vadd.f32 %v5197, %v5537
      %v5664 = vadd.f32 %v5198, %v5540
      %v5665 = vadd.f32 %v5199, %v5545
      %v5666 = vadd.f32 %v5200, %v5548
      %v5667 = vadd.f32 %v5201, %v5553
      %v5668 = vadd.f32 %v5202, %v5556
      %v5669 = vadd.f32 %v5203, %v5561
      %v5670 = vadd.f32 %v5204, %v5564
      %v5671 = vadd.f32 %v5205, %v5569
      %v5672 = vadd.f32 %v5206, %v5572
      %v5673 = vadd.f32 %v5207, %v5577
      %v5674 = vadd.f32 %v5208, %v5580
      %v5675 = vadd.f32 %v5209, %v5585
      %v5676 = vadd.f32 %v5210, %v5588
      %v5677 = vadd.f32 %v5211, %v5593
      %v5678 = vadd.f32 %v5212, %v5596
      %v5679 = vadd.f32 %v5213, %v5601
      %v5680 = vadd.f32 %v5214, %v5604
      %v5681 = vadd.f32 %v5215, %v5609
      %v5682 = vadd.f32 %v5216, %v5612
      %v5683 = vadd.f32 %v5217, %v5617
      %v5684 = vadd.f32 %v5218, %v5620
      %v5685 = vadd.f32 %v5219, %v5625
      %v5686 = vadd.f32 %v5220, %v5628
      %v5687 = vadd.f32 %v5221, %v5633
      %v5688 = vadd.f32 %v5222, %v5636
      %v5689 = vadd.f32 %v5223, %v5641
      %v5690 = vadd.f32 %v5224, %v5644
      %v5691 = vadd.f32 %v5225, %v5649
      %v5692 = vadd.f32 %v5226, %v5652
      %v5693 = vadd.f32 %v5227, %v5657
      %v5694 = vadd.f32 %v5228, %v5660
      %5695 = vst [vmem:[#allocation2] sm:$0xff] %v5663
      %5696 = vst [vmem:[#allocation2 + $0x8] sm:$0xff] %v5664
      %5697 = vst [vmem:[#allocation2 + $0x10] sm:$0xff] %v5665
      %5698 = vst [vmem:[#allocation2 + $0x18] sm:$0xff] %v5666
      %5699 = vst [vmem:[#allocation2 + $0x20] sm:$0xff] %v5667
      %5700 = vst [vmem:[#allocation2 + $0x28] sm:$0xff] %v5668
      %5701 = vst [vmem:[#allocation2 + $0x30] sm:$0xff] %v5669
      %5702 = vst [vmem:[#allocation2 + $0x38] sm:$0xff] %v5670
      %5703 = vst [vmem:[#allocation2 + $0x40] sm:$0xff] %v5671
      %5704 = vst [vmem:[#allocation2 + $0x48] sm:$0xff] %v5672
      %5705 = vst [vmem:[#allocation2 + $0x50] sm:$0xff] %v5673
      %5706 = vst [vmem:[#allocation2 + $0x58] sm:$0xff] %v5674
      %5707 = vst [vmem:[#allocation2 + $0x60] sm:$0xff] %v5675
      %5708 = vst [vmem:[#allocation2 + $0x68] sm:$0xff] %v5676
      %5709 = vst [vmem:[#allocation2 + $0x70] sm:$0xff] %v5677
      %5710 = vst [vmem:[#allocation2 + $0x78] sm:$0xff] %v5678
      %5711 = vst [vmem:[#allocation2 + $0x80] sm:$0xff] %v5679
      %5712 = vst [vmem:[#allocation2 + $0x88] sm:$0xff] %v5680
      %5713 = vst [vmem:[#allocation2 + $0x90] sm:$0xff] %v5681
      %5714 = vst [vmem:[#allocation2 + $0x98] sm:$0xff] %v5682
      %5715 = vst [vmem:[#allocation2 + $0xa0] sm:$0xff] %v5683
      %5716 = vst [vmem:[#allocation2 + $0xa8] sm:$0xff] %v5684
      %5717 = vst [vmem:[#allocation2 + $0xb0] sm:$0xff] %v5685
      %5718 = vst [vmem:[#allocation2 + $0xb8] sm:$0xff] %v5686
      %5719 = vst [vmem:[#allocation2 + $0xc0] sm:$0xff] %v5687
      %5720 = vst [vmem:[#allocation2 + $0xc8] sm:$0xff] %v5688
      %5721 = vst [vmem:[#allocation2 + $0xd0] sm:$0xff] %v5689
      %5722 = vst [vmem:[#allocation2 + $0xd8] sm:$0xff] %v5690
      %5723 = vst [vmem:[#allocation2 + $0xe0] sm:$0xff] %v5691
      %5724 = vst [vmem:[#allocation2 + $0xe8] sm:$0xff] %v5692
      %5725 = vst [vmem:[#allocation2 + $0xf0] sm:$0xff] %v5693
      %5726 = vst [vmem:[#allocation2 + $0xf8] sm:$0xff] %v5694
      %v5727 = vld [vmem:[#allocation2] sm:$0xff]
      %v5728 = vld [vmem:[#allocation2 + $0x8] sm:$0xff]
      %v5729 = vld [vmem:[#allocation2 + $0x10] sm:$0xff]
      %v5730 = vld [vmem:[#allocation2 + $0x18] sm:$0xff]
      %v5731 = vld [vmem:[#allocation2 + $0x20] sm:$0xff]
      %v5732 = vld [vmem:[#allocation2 + $0x28] sm:$0xff]
      %v5733 = vld [vmem:[#allocation2 + $0x30] sm:$0xff]
      %v5734 = vld [vmem:[#allocation2 + $0x38] sm:$0xff]
      %v5735 = vld [vmem:[#allocation2 + $0x40] sm:$0xff]
      %v5736 = vld [vmem:[#allocation2 + $0x48] sm:$0xff]
      %v5737 = vld [vmem:[#allocation2 + $0x50] sm:$0xff]
      %v5738 = vld [vmem:[#allocation2 + $0x58] sm:$0xff]
      %v5739 = vld [vmem:[#allocation2 + $0x60] sm:$0xff]
      %v5740 = vld [vmem:[#allocation2 + $0x68] sm:$0xff]
      %v5741 = vld [vmem:[#allocation2 + $0x70] sm:$0xff]
      %v5742 = vld [vmem:[#allocation2 + $0x78] sm:$0xff]
      %v5743 = vld [vmem:[#allocation2 + $0x80] sm:$0xff]
      %v5744 = vld [vmem:[#allocation2 + $0x88] sm:$0xff]
      %v5745 = vld [vmem:[#allocation2 + $0x90] sm:$0xff]
      %v5746 = vld [vmem:[#allocation2 + $0x98] sm:$0xff]
      %v5747 = vld [vmem:[#allocation2 + $0xa0] sm:$0xff]
      %v5748 = vld [vmem:[#allocation2 + $0xa8] sm:$0xff]
      %v5749 = vld [vmem:[#allocation2 + $0xb0] sm:$0xff]
      %v5750 = vld [vmem:[#allocation2 + $0xb8] sm:$0xff]
      %v5751 = vld [vmem:[#allocation2 + $0xc0] sm:$0xff]
      %v5752 = vld [vmem:[#allocation2 + $0xc8] sm:$0xff]
      %v5753 = vld [vmem:[#allocation2 + $0xd0] sm:$0xff]
      %v5754 = vld [vmem:[#allocation2 + $0xd8] sm:$0xff]
      %v5755 = vld [vmem:[#allocation2 + $0xe0] sm:$0xff]
      %v5756 = vld [vmem:[#allocation2 + $0xe8] sm:$0xff]
      %v5757 = vld [vmem:[#allocation2 + $0xf0] sm:$0xff]
      %v5758 = vld [vmem:[#allocation2 + $0xf8] sm:$0xff]
      %v5759 = vld [vmem:[%s265] sm:$0x1]
      %v5761 = vlaneseq
      %v5762 = vshrl.u32 %v5761, 7
      %v5763 = vsub.s32 0, %v5762
      %v5764 = vrot.slane %v5759, %v5763
      %v5766 = vmul.f32 %v5727, %v5764
      %v5767 = vmul.f32 %v5728, %v5764
      %v5768 = vmul.f32 %v5729, %v5764
      %v5769 = vmul.f32 %v5730, %v5764
      %v5770 = vmul.f32 %v5731, %v5764
      %v5771 = vmul.f32 %v5732, %v5764
      %v5772 = vmul.f32 %v5733, %v5764
      %v5773 = vmul.f32 %v5734, %v5764
      %v5774 = vmul.f32 %v5735, %v5764
      %v5775 = vmul.f32 %v5736, %v5764
      %v5776 = vmul.f32 %v5737, %v5764
      %v5777 = vmul.f32 %v5738, %v5764
      %v5778 = vmul.f32 %v5739, %v5764
      %v5779 = vmul.f32 %v5740, %v5764
      %v5780 = vmul.f32 %v5741, %v5764
      %v5781 = vmul.f32 %v5742, %v5764
      %v5782 = vmul.f32 %v5743, %v5764
      %v5783 = vmul.f32 %v5744, %v5764
      %v5784 = vmul.f32 %v5745, %v5764
      %v5785 = vmul.f32 %v5746, %v5764
      %v5786 = vmul.f32 %v5747, %v5764
      %v5787 = vmul.f32 %v5748, %v5764
      %v5788 = vmul.f32 %v5749, %v5764
      %v5789 = vmul.f32 %v5750, %v5764
      %v5790 = vmul.f32 %v5751, %v5764
      %v5791 = vmul.f32 %v5752, %v5764
      %v5792 = vmul.f32 %v5753, %v5764
      %v5793 = vmul.f32 %v5754, %v5764
      %v5794 = vmul.f32 %v5755, %v5764
      %v5795 = vmul.f32 %v5756, %v5764
      %v5796 = vmul.f32 %v5757, %v5764
      %v5797 = vmul.f32 %v5758, %v5764
      %v5798 = vld [vmem:[%s268] sm:$0x1]
      %v5800 = vlaneseq
      %v5801 = vshrl.u32 %v5800, 7
      %v5802 = vsub.s32 0, %v5801
      %v5803 = vrot.slane %v5798, %v5802
      %v5805 = vadd.f32 %v5766, %v5803
      %v5806 = vadd.f32 %v5767, %v5803
      %v5807 = vadd.f32 %v5768, %v5803
      %v5808 = vadd.f32 %v5769, %v5803
      %v5809 = vadd.f32 %v5770, %v5803
      %v5810 = vadd.f32 %v5771, %v5803
      %v5811 = vadd.f32 %v5772, %v5803
      %v5812 = vadd.f32 %v5773, %v5803
      %v5813 = vadd.f32 %v5774, %v5803
      %v5814 = vadd.f32 %v5775, %v5803
      %v5815 = vadd.f32 %v5776, %v5803
      %v5816 = vadd.f32 %v5777, %v5803
      %v5817 = vadd.f32 %v5778, %v5803
      %v5818 = vadd.f32 %v5779, %v5803
      %v5819 = vadd.f32 %v5780, %v5803
      %v5820 = vadd.f32 %v5781, %v5803
      %v5821 = vadd.f32 %v5782, %v5803
      %v5822 = vadd.f32 %v5783, %v5803
      %v5823 = vadd.f32 %v5784, %v5803
      %v5824 = vadd.f32 %v5785, %v5803
      %v5825 = vadd.f32 %v5786, %v5803
      %v5826 = vadd.f32 %v5787, %v5803
      %v5827 = vadd.f32 %v5788, %v5803
      %v5828 = vadd.f32 %v5789, %v5803
      %v5829 = vadd.f32 %v5790, %v5803
      %v5830 = vadd.f32 %v5791, %v5803
      %v5831 = vadd.f32 %v5792, %v5803
      %v5832 = vadd.f32 %v5793, %v5803
      %v5833 = vadd.f32 %v5794, %v5803
      %v5834 = vadd.f32 %v5795, %v5803
      %v5835 = vadd.f32 %v5796, %v5803
      %v5836 = vadd.f32 %v5797, %v5803
      %v5837 = vmax.f32 %v5805, 0.0
      %v5838 = vmax.f32 %v5806, 0.0
      %v5839 = vmax.f32 %v5807, 0.0
      %v5840 = vmax.f32 %v5808, 0.0
      %v5841 = vmax.f32 %v5809, 0.0
      %v5842 = vmax.f32 %v5810, 0.0
      %v5843 = vmax.f32 %v5811, 0.0
      %v5844 = vmax.f32 %v5812, 0.0
      %v5845 = vmax.f32 %v5813, 0.0
      %v5846 = vmax.f32 %v5814, 0.0
      %v5847 = vmax.f32 %v5815, 0.0
      %v5848 = vmax.f32 %v5816, 0.0
      %v5849 = vmax.f32 %v5817, 0.0
      %v5850 = vmax.f32 %v5818, 0.0
      %v5851 = vmax.f32 %v5819, 0.0
      %v5852 = vmax.f32 %v5820, 0.0
      %v5853 = vmax.f32 %v5821, 0.0
      %v5854 = vmax.f32 %v5822, 0.0
      %v5855 = vmax.f32 %v5823, 0.0
      %v5856 = vmax.f32 %v5824, 0.0
      %v5857 = vmax.f32 %v5825, 0.0
      %v5858 = vmax.f32 %v5826, 0.0
      %v5859 = vmax.f32 %v5827, 0.0
      %v5860 = vmax.f32 %v5828, 0.0
      %v5861 = vmax.f32 %v5829, 0.0
      %v5862 = vmax.f32 %v5830, 0.0
      %v5863 = vmax.f32 %v5831, 0.0
      %v5864 = vmax.f32 %v5832, 0.0
      %v5865 = vmax.f32 %v5833, 0.0
      %v5866 = vmax.f32 %v5834, 0.0
      %v5867 = vmax.f32 %v5835, 0.0
      %v5868 = vmax.f32 %v5836, 0.0
      %v5869 = vpack.c.bf16 %v5838, %v5837
      %v5870 = vpack.c.bf16 %v5840, %v5839
      %v5871 = vpack.c.bf16 %v5842, %v5841
      %v5872 = vpack.c.bf16 %v5844, %v5843
      %v5873 = vpack.c.bf16 %v5846, %v5845
      %v5874 = vpack.c.bf16 %v5848, %v5847
      %v5875 = vpack.c.bf16 %v5850, %v5849
      %v5876 = vpack.c.bf16 %v5852, %v5851
      %v5877 = vpack.c.bf16 %v5854, %v5853
      %v5878 = vpack.c.bf16 %v5856, %v5855
      %v5879 = vpack.c.bf16 %v5858, %v5857
      %v5880 = vpack.c.bf16 %v5860, %v5859
      %v5881 = vpack.c.bf16 %v5862, %v5861
      %v5882 = vpack.c.bf16 %v5864, %v5863
      %v5883 = vpack.c.bf16 %v5866, %v5865
      %v5884 = vpack.c.bf16 %v5868, %v5867
      %v5901 = vunpack.c.l.b16 %v5869
      %v5902 = vunpack.c.h.b16 %v5869
      %v5903 = vunpack.c.l.b16 %v5870
      %v5904 = vunpack.c.h.b16 %v5870
      %v5905 = vunpack.c.l.b16 %v5871
      %v5906 = vunpack.c.h.b16 %v5871
      %v5907 = vunpack.c.l.b16 %v5872
      %v5908 = vunpack.c.h.b16 %v5872
      %v5909 = vunpack.c.l.b16 %v5873
      %v5910 = vunpack.c.h.b16 %v5873
      %v5911 = vunpack.c.l.b16 %v5874
      %v5912 = vunpack.c.h.b16 %v5874
      %v5913 = vunpack.c.l.b16 %v5875
      %v5914 = vunpack.c.h.b16 %v5875
      %v5915 = vunpack.c.l.b16 %v5876
      %v5916 = vunpack.c.h.b16 %v5876
      %v5917 = vunpack.c.l.b16 %v5877
      %v5918 = vunpack.c.h.b16 %v5877
      %v5919 = vunpack.c.l.b16 %v5878
      %v5920 = vunpack.c.h.b16 %v5878
      %v5921 = vunpack.c.l.b16 %v5879
      %v5922 = vunpack.c.h.b16 %v5879
      %v5923 = vunpack.c.l.b16 %v5880
      %v5924 = vunpack.c.h.b16 %v5880
      %v5925 = vunpack.c.l.b16 %v5881
      %v5926 = vunpack.c.h.b16 %v5881
      %v5927 = vunpack.c.l.b16 %v5882
      %v5928 = vunpack.c.h.b16 %v5882
      %v5929 = vunpack.c.l.b16 %v5883
      %v5930 = vunpack.c.h.b16 %v5883
      %v5931 = vunpack.c.l.b16 %v5884
      %v5932 = vunpack.c.h.b16 %v5884
      %v5933 = vpack.c.b16 %v5901, %v5901
      %v5934 = vpack.c.b16 %v5902, %v5902
      %v5935 = vpack.c.b16 %v5903, %v5903
      %v5936 = vpack.c.b16 %v5904, %v5904
      %v5937 = vpack.c.b16 %v5905, %v5905
      %v5938 = vpack.c.b16 %v5906, %v5906
      %v5939 = vpack.c.b16 %v5907, %v5907
      %v5940 = vpack.c.b16 %v5908, %v5908
      %v5941 = vpack.c.b16 %v5909, %v5909
      %v5942 = vpack.c.b16 %v5910, %v5910
      %v5943 = vpack.c.b16 %v5911, %v5911
      %v5944 = vpack.c.b16 %v5912, %v5912
      %v5945 = vpack.c.b16 %v5913, %v5913
      %v5946 = vpack.c.b16 %v5914, %v5914
      %v5947 = vpack.c.b16 %v5915, %v5915
      %v5948 = vpack.c.b16 %v5916, %v5916
      %v5949 = vpack.c.b16 %v5917, %v5917
      %v5950 = vpack.c.b16 %v5918, %v5918
      %v5951 = vpack.c.b16 %v5919, %v5919
      %v5952 = vpack.c.b16 %v5920, %v5920
      %v5953 = vpack.c.b16 %v5921, %v5921
      %v5954 = vpack.c.b16 %v5922, %v5922
      %v5955 = vpack.c.b16 %v5923, %v5923
      %v5956 = vpack.c.b16 %v5924, %v5924
      %v5957 = vpack.c.b16 %v5925, %v5925
      %v5958 = vpack.c.b16 %v5926, %v5926
      %v5959 = vpack.c.b16 %v5927, %v5927
      %v5960 = vpack.c.b16 %v5928, %v5928
      %v5961 = vpack.c.b16 %v5929, %v5929
      %v5962 = vpack.c.b16 %v5930, %v5930
      %v5963 = vpack.c.b16 %v5931, %v5931
      %v5964 = vpack.c.b16 %v5932, %v5932
      %5997 = vst [vmem:[%s281] sm:$0xf] %v5933
      %5998 = vst [vmem:[%s281 + $0x4] sm:$0xf] %v5934
      %5999 = vst [vmem:[%s281 + $0x8] sm:$0xf] %v5935
      %6000 = vst [vmem:[%s281 + $0xc] sm:$0xf] %v5936
      %6001 = vst [vmem:[%s281 + $0x10] sm:$0xf] %v5937
      %6002 = vst [vmem:[%s281 + $0x14] sm:$0xf] %v5938
      %6003 = vst [vmem:[%s281 + $0x18] sm:$0xf] %v5939
      %6004 = vst [vmem:[%s281 + $0x1c] sm:$0xf] %v5940
      %6005 = vst [vmem:[%s281 + $0x20] sm:$0xf] %v5941
      %6006 = vst [vmem:[%s281 + $0x24] sm:$0xf] %v5942
      %6007 = vst [vmem:[%s281 + $0x28] sm:$0xf] %v5943
      %6008 = vst [vmem:[%s281 + $0x2c] sm:$0xf] %v5944
      %6009 = vst [vmem:[%s281 + $0x30] sm:$0xf] %v5945
      %6010 = vst [vmem:[%s281 + $0x34] sm:$0xf] %v5946
      %6011 = vst [vmem:[%s281 + $0x38] sm:$0xf] %v5947
      %6012 = vst [vmem:[%s281 + $0x3c] sm:$0xf] %v5948
      %6013 = vst [vmem:[%s281 + $0x40] sm:$0xf] %v5949
      %6014 = vst [vmem:[%s281 + $0x44] sm:$0xf] %v5950
      %6015 = vst [vmem:[%s281 + $0x48] sm:$0xf] %v5951
      %6016 = vst [vmem:[%s281 + $0x4c] sm:$0xf] %v5952
      %6017 = vst [vmem:[%s281 + $0x50] sm:$0xf] %v5953
      %6018 = vst [vmem:[%s281 + $0x54] sm:$0xf] %v5954
      %6019 = vst [vmem:[%s281 + $0x58] sm:$0xf] %v5955
      %6020 = vst [vmem:[%s281 + $0x5c] sm:$0xf] %v5956
      %6021 = vst [vmem:[%s281 + $0x60] sm:$0xf] %v5957
      %6022 = vst [vmem:[%s281 + $0x64] sm:$0xf] %v5958
      %6023 = vst [vmem:[%s281 + $0x68] sm:$0xf] %v5959
      %6024 = vst [vmem:[%s281 + $0x6c] sm:$0xf] %v5960
      %6025 = vst [vmem:[%s281 + $0x70] sm:$0xf] %v5961
      %6026 = vst [vmem:[%s281 + $0x74] sm:$0xf] %v5962
      %6027 = vst [vmem:[%s281 + $0x78] sm:$0xf] %v5963
      %6028 = vst [vmem:[%s281 + $0x7c] sm:$0xf] %v5964
      %s6029 = smul.u32 8, %s22
      %p6030 = scmp.lt.s32.totalorder %s21, 1
      %s6031 = scalar_select %p6030, %s21, 1
      %p6032 = scmp.lt.s32.totalorder %s6029, 31
      %s6033 = scalar_select %p6032, %s6029, 31
      %p6034 = scmp.lt.s32.totalorder %s20, 0
      %s6035 = scalar_select %p6034, %s20, 0
      %s6036 = smul.addr %s6033, 4
      %s6037 = sadd.s32 %s6035, %s6036
      %s6038 = smul.addr %s6031, 128
      %s6039 = sadd.s32 %s6037, %s6038
      %s6040 = smul.addr %s6039, 4
      %s6041 = scalar_lea.vmem %s4, %s6040
      // Predicated region
      $region37: #{up_no_skip_forward.2} parent=35 // pred_check
        %p6042 = pneg %p160
      $region38: #{up_no_skip_forward.2} parent=35 // pred_check_branch
        %6044 = sbr.rel (%p6042) target = $region40
      $region39: #{up_no_skip_forward.2} parent=35 // pred_region
        %s6045 = smul.u32 8, %s22
      $region40: #{up_no_skip_forward.2} parent=35 // pred_fallthru
        _
    $region36: #{up_no_skip_forward.2} parent=5 // pred_fallthru
      _
    %p6046 = scmp.le.s32.totalorder 2, %s10
    // Predicated region
    $region41: #{up_no_skip_forward.2} parent=5 // pred_check
      %p6047 = pneg %p6046
    $region42: #{up_no_skip_forward.2} parent=5 // pred_check_branch
      %6049 = sbr.rel (%p6047) target = $region44
    $region43: #{up_no_skip_forward.2} parent=5 // pred_region
      %s6050 = ssub.s32 %s10, 2
      // Predicated region
      $region45: #{up_no_skip_forward.2} parent=43 // pred_check
        %p6051 = pneg %p166
      $region46: #{up_no_skip_forward.2} parent=43 // pred_check_branch
        %6053 = sbr.rel (%p6051) target = $region48
      $region47: #{up_no_skip_forward.2} parent=43 // pred_region
        %s6054 = smul.u32 8, %s25
        %p6055 = scmp.lt.s32.totalorder %s24, 1
        %s6056 = scalar_select %p6055, %s24, 1
        %p6057 = scmp.lt.s32.totalorder %s6054, 31
        %s6058 = scalar_select %p6057, %s6054, 31
        %p6059 = scmp.lt.s32.totalorder %s23, 0
        %s6060 = scalar_select %p6059, %s23, 0
        %s6061 = smul.addr %s6058, 4
        %s6062 = sadd.s32 %s6060, %s6061
        %s6063 = smul.addr %s6056, 128
        %s6064 = sadd.s32 %s6062, %s6063
        %s6065 = smul.addr %s6064, 4
        %s6066 = scalar_lea.vmem %s4, %s6065
      $region48: #{up_no_skip_forward.2} parent=43 // pred_fallthru
        _
    $region44: #{up_no_skip_forward.2} parent=5 // pred_fallthru
      _
  $region6: #{up_no_skip_forward.2} parent=0 // loop_footer
    %s14 = sadd.s32 1, %s10
  $region7: #{up_no_skip_forward.2} parent=0 // loop_footer_branch
    %9 = sbr.rel target = $region3
  $region8: #{up_no_skip_forward.2} parent=0 // loop_exit
    _

</llo_original>
